<compile_context>
chip_gen: v7x
topology: tpu7x:2x2x1
jax: 0.10.0
libtpu: 0.0.40
codegen_flags: <defaults>
</compile_context>

<pallas_src>
import functools

import numpy as np
import jax
import jax.numpy as jnp
from jax.experimental import pallas as pl
from jax.experimental.pallas import tpu as pltpu

EPS = 1e-5


# --------------------------------- kernel ---------------------------------

def temporal_sl_kernel(x_ref, wdc1_ref, bdc1_ref, wpc1_ref, bpc1_ref,
                       wpc2_ref, bpc2_ref, wdc2_ref, bdc2_ref, out_ref, *, vg):
    NB, R, L = out_ref.shape          # R = T * (V // P) rows/sample, L = P*C lanes
    K = wdc1_ref.shape[0]
    pad_rows = ((K - 1) // 2) * vg
    M = NB * R

    def pad_time(xb):
        # zero-pad the temporal axis; pad_rows is a multiple of vg and (with
        # P=4, pad=4) of the bf16 sublane tile, so this concat is tile-aligned.
        z = jnp.zeros((NB, pad_rows, L), jnp.bfloat16)
        return jnp.concatenate([z, xb, z], axis=1)

    def tap_dots(padded, w_ref):
        # K temporally shifted MXU dots, tree-summed (independent accumulators
        # instead of a serial pop+vadd chain).  The per-tap slices are static
        # sublane-offset slices of one lane-dense value (XLU rotate, overlaps
        # the MXU work).
        dots = [jnp.dot(padded[:, k * vg:k * vg + R, :].reshape(M, L), w_ref[k],
                        preferred_element_type=jnp.float32)
                for k in range(K)]
        while len(dots) > 1:
            nxt = [dots[i] + dots[i + 1] for i in range(0, len(dots) - 1, 2)]
            if len(dots) % 2:
                nxt.append(dots[-1])
            dots = nxt
        return dots[0]

    xb = x_ref[...].astype(jnp.bfloat16)                       # (NB, R, L)

    # depth_conv1 + folded BN, then 6*hardswish (the 1/6 is folded into wpc1).
    a = tap_dots(pad_time(xb), wdc1_ref) + bdc1_ref[...]
    a = a * jnp.clip(a + 3.0, 0.0, 6.0)

    # point_conv1 + BN, point_conv2 + BN, then 6*hardswish (1/6 folded into wdc2).
    h = jnp.dot(a.astype(jnp.bfloat16), wpc1_ref[...],
                preferred_element_type=jnp.float32) + bpc1_ref[...]
    h = jnp.dot(h.astype(jnp.bfloat16), wpc2_ref[...],
                preferred_element_type=jnp.float32) + bpc2_ref[...]
    h = h * jnp.clip(h + 3.0, 0.0, 6.0)

    # depth_conv2 + folded BN on the zero-padded intermediate.
    y = tap_dots(pad_time(h.astype(jnp.bfloat16).reshape(NB, R, L)), wdc2_ref)
    y = y + bdc2_ref[...]

    # Identity residual, read late (short live range) and in full f32 precision.
    out_ref[...] = (y.reshape(NB, R, L) + x_ref[...]).astype(out_ref.dtype)


# ------------------------- blocking / resource policy -------------------------

def _tpu_resources():
    """(num_tensorcores, vmem_bytes) — best effort, never raises."""
    num_cores, vmem_bytes = 1, 128 << 20
    try:
        kind = jax.devices()[0].device_kind.lower()
        if "v7" in kind:
            num_cores, vmem_bytes = 2, 64 << 20
    except Exception:
        pass
    try:
        info = pltpu.get_tpu_info()
        for name in ("num_cores", "core_count", "num_tensor_cores",
                     "tensorcore_count"):
            v = getattr(info, name, None)
            if v:
                num_cores = int(v)
                break
        v = getattr(info, "vmem_capacity_bytes", None)
        if v:
            vmem_bytes = int(v)
    except Exception:
        pass
    return max(num_cores, 1), max(vmem_bytes, 8 << 20)


def _samples_per_block(N, rows_per_sample, lane_width):
    num_cores, vmem_bytes = _tpu_resources()
    # double-buffered f32 input + f32 output blocks per sample per step
    bytes_per_sample = 2 * 2 * rows_per_sample * lane_width * 4
    # stay well inside every generation's default scoped-VMEM budget, leaving
    # room for the resident weights (~1.2 MiB) and compute temporaries.
    budget = min(vmem_bytes // 4, 12 << 20)
    nb_vmem = max(1, budget // bytes_per_sample)
    # >=512 lane-dense rows per step to amortize the ~0.35us/step overhead ...
    nb_rows = max(1, -(-512 // rows_per_sample))
    nb = int(min(N, nb_rows, nb_vmem))
    # ... but keep at least one grid step per TensorCore (v7x megacore) and let
    # large batches split into several steps so DMA overlaps compute.
    while nb > 1 and (N // nb) < num_cores:
        nb -= 1
    while N % nb:
        nb -= 1
    return nb


def _pick_lane_pack(C, V, target=128):
    """Largest P dividing V with P*C <= target (lane width)."""
    best = 1
    for p in range(1, V + 1):
        if V % p == 0 and p * C <= max(target, C):
            best = p
    return best


# --------------------------------- wrapper ---------------------------------

def temporal_sl_forward(x_nchw, packed, *, temporal_window_size=9):
    N, C, T, V = x_nchw.shape
    K = temporal_window_size
    wdc1, bdc1, wpc1, bpc1, wpc2, bpc2, wdc2, bdc2 = packed
    L = wdc1.shape[1]                  # P * C lanes
    P = L // C
    Vg = V // P
    Li = wpc1.shape[1]                 # P * inner_channel
    R = T * Vg

    # Lane-pack: (N,C,T,V) -> (N,T,V,C) -> (N, T*V/P, P*C); the reshape is free,
    # the transpose is the PyTorch I/O boundary (see TODO at top of file).
    x = jnp.transpose(x_nchw, (0, 2, 3, 1)).reshape(N, R, L)   # f32

    nb = _samples_per_block(N, R, L)
    grid = (N // nb,)
    kernel = functools.partial(temporal_sl_kernel, vg=Vg)

    out = pl.pallas_call(
        kernel,
        out_shape=jax.ShapeDtypeStruct((N, R, L), jnp.float32),
        grid=grid,
        in_specs=[
            pl.BlockSpec((nb, R, L), lambda n: (n, 0, 0)),     # f32 input (residual)
            pl.BlockSpec((K, L, L), lambda n: (0, 0, 0)),      # depth_conv1 w (bf16)
            pl.BlockSpec((1, L), lambda n: (0, 0)),            # depth_conv1 b
            pl.BlockSpec((L, Li), lambda n: (0, 0)),           # point_conv1 w (bf16)
            pl.BlockSpec((1, Li), lambda n: (0, 0)),           # point_conv1 b
            pl.BlockSpec((Li, L), lambda n: (0, 0)),           # point_conv2 w (bf16)
            pl.BlockSpec((1, L), lambda n: (0, 0)),            # point_conv2 b
            pl.BlockSpec((K, L, L), lambda n: (0, 0, 0)),      # depth_conv2 w (bf16)
            pl.BlockSpec((1, L), lambda n: (0, 0)),            # depth_conv2 b
        ],
        out_specs=pl.BlockSpec((nb, R, L), lambda n: (n, 0, 0)),
        compiler_params=pltpu.CompilerParams(dimension_semantics=("parallel",)),
    )(x, wdc1, bdc1, wpc1, bpc1, wpc2, bpc2, wdc2, bdc2)

    return jnp.transpose(out.reshape(N, T, V, C), (0, 3, 1, 2))  # back to NCHW


# ----------------------- parameter construction / folding -----------------------

def init_raw_params(key, channel, temporal_window_size, groups, reduct_ratio):
    C, K = channel, temporal_window_size
    gs = C // groups
    Ci = C // reduct_ratio
    ks = jax.random.split(key, 12)

    def bn(k, ch):
        k1, k2, k3, k4 = jax.random.split(k, 4)
        return dict(gamma=1.0 + 0.2 * jax.random.normal(k1, (ch,), jnp.float32),
                    beta=0.1 * jax.random.normal(k2, (ch,), jnp.float32),
                    mean=0.1 * jax.random.normal(k3, (ch,), jnp.float32),
                    var=jax.random.uniform(k4, (ch,), jnp.float32, 0.5, 1.5))

    return dict(
        dc1_w=0.2 * jax.random.normal(ks[0], (C, gs, K, 1), jnp.float32),
        dc1_b=0.1 * jax.random.normal(ks[1], (C,), jnp.float32),
        dc1_bn=bn(ks[2], C),
        pc1_w=0.2 * jax.random.normal(ks[3], (Ci, C, 1, 1), jnp.float32),
        pc1_b=0.1 * jax.random.normal(ks[4], (Ci,), jnp.float32),
        pc1_bn=bn(ks[5], Ci),
        pc2_w=0.2 * jax.random.normal(ks[6], (C, Ci, 1, 1), jnp.float32),
        pc2_b=0.1 * jax.random.normal(ks[7], (C,), jnp.float32),
        pc2_bn=bn(ks[8], C),
        dc2_w=0.2 * jax.random.normal(ks[9], (C, gs, K, 1), jnp.float32),
        dc2_b=0.1 * jax.random.normal(ks[10], (C,), jnp.float32),
        dc2_bn=bn(ks[11], C),
    )


def fold_params(raw, channel, groups):
    """Fold BN (running stats) into each conv; per-channel dense f32 weights."""
    C = channel
    gs = C // groups

    def bn_scale_shift(p):
        s = np.asarray(p['gamma']) / np.sqrt(np.asarray(p['var']) + EPS)
        return s, np.asarray(p['beta']) - np.asarray(p['mean']) * s

    def grouped_to_dense(w4, bias, bnp):
        # torch grouped (C, gs, K, 1) -> dense per-tap (K, C_in, C_out)
        s, t = bn_scale_shift(bnp)
        w = np.asarray(w4)[..., 0]                  # (C, gs, K)
        K = w.shape[2]
        dense = np.zeros((K, C, C), np.float32)
        for co in range(C):
            g = co // gs
            for ic in range(gs):
                dense[:, g * gs + ic, co] = w[co, ic, :] * s[co]
        b = (np.asarray(bias) * s + t).reshape(1, C)
        return dense, b.astype(np.float32)

    def point_to_dense(w4, bias, bnp):
        s, t = bn_scale_shift(bnp)
        w = np.asarray(w4)[:, :, 0, 0]              # (C_out, C_in)
        W = (w * s[:, None]).T                      # (C_in, C_out)
        b = (np.asarray(bias) * s + t).reshape(1, -1)
        return W.astype(np.float32), b.astype(np.float32)

    wdc1, bdc1 = grouped_to_dense(raw['dc1_w'], raw['dc1_b'], raw['dc1_bn'])
    wpc1, bpc1 = point_to_dense(raw['pc1_w'], raw['pc1_b'], raw['pc1_bn'])
    wpc2, bpc2 = point_to_dense(raw['pc2_w'], raw['pc2_b'], raw['pc2_bn'])
    wdc2, bdc2 = grouped_to_dense(raw['dc2_w'], raw['dc2_b'], raw['dc2_bn'])
    return (wdc1, bdc1, wpc1, bpc1, wpc2, bpc2, wdc2, bdc2)


def pack_lane_params(folded, P):
    """Block-diagonal P-fold lane expansion + hardswish-1/6 folding + bf16 cast."""
    wdc1, bdc1, wpc1, bpc1, wpc2, bpc2, wdc2, bdc2 = [
        np.asarray(a, np.float32) for a in folded]

    def bd(w):                                      # (ci, co) -> (P*ci, P*co)
        ci, co = w.shape
        out = np.zeros((P * ci, P * co), np.float32)
        for p in range(P):
            out[p * ci:(p + 1) * ci, p * co:(p + 1) * co] = w
        return out

    def bd_taps(w):                                 # (K, C, C) -> (K, P*C, P*C)
        return np.stack([bd(w[k]) for k in range(w.shape[0])], axis=0)

    def tile(b):                                    # (1, C) -> (1, P*C)
        return np.tile(b.reshape(1, -1), (1, P)).astype(np.float32)

    # hardswish(x) = x*clip(x+3,0,6)/6 — the 1/6 is folded into the weight that
    # consumes each hardswish output (wpc1 for the first, each wdc2 tap for the
    # second), so the kernel only computes x*clip(x+3,0,6).
    Wdc1 = bd_taps(wdc1)
    Wpc1 = bd(wpc1) * (1.0 / 6.0)
    Wpc2 = bd(wpc2)
    Wdc2 = bd_taps(wdc2) * (1.0 / 6.0)

    b16 = lambda a: jnp.asarray(a).astype(jnp.bfloat16)
    f32 = lambda a: jnp.asarray(a, jnp.float32)
    return (b16(Wdc1), f32(tile(bdc1)),
            b16(Wpc1), f32(tile(bpc1)),
            b16(Wpc2), f32(tile(bpc2)),
            b16(Wdc2), f32(tile(bdc2)))


# -------------------------- plain-JAX PyTorch reference --------------------------

def torch_reference(x, raw, *, temporal_window_size=9, groups=16):
    K = temporal_window_size
    pad = (K - 1) // 2

    def conv(x, w, b, padding, fg=1):
        y = jax.lax.conv_general_dilated(
            x, w, window_strides=(1, 1), padding=padding,
            dimension_numbers=('NCHW', 'OIHW', 'NCHW'), feature_group_count=fg)
        return y + b[None, :, None, None]

    def bn(x, p):
        return ((x - p['mean'][None, :, None, None]) /
                jnp.sqrt(p['var'][None, :, None, None] + EPS) *
                p['gamma'][None, :, None, None] + p['beta'][None, :, None, None])

    def hsw(x):
        return x * jnp.clip(x + 3.0, 0.0, 6.0) / 6.0

    res = x
    y = hsw(bn(conv(x, raw['dc1_w'], raw['dc1_b'], [(pad, pad), (0, 0)], groups), raw['dc1_bn']))
    y = bn(conv(y, raw['pc1_w'], raw['pc1_b'], [(0, 0), (0, 0)]), raw['pc1_bn'])
    y = hsw(bn(conv(y, raw['pc2_w'], raw['pc2_b'], [(0, 0), (0, 0)]), raw['pc2_bn']))
    y = bn(conv(y, raw['dc2_w'], raw['dc2_b'], [(pad, pad), (0, 0)], groups), raw['dc2_bn'])
    return y + res


if __name__ == "__main__":
    channel, K, groups, reduct = 32, 9, 16, 2   # channel must be divisible by groups=16
    N, T, V = 2, 16, 16

    key = jax.random.PRNGKey(0)
    kx, kp = jax.random.split(key)
    x = jax.random.normal(kx, (N, channel, T, V), jnp.float32)  # NCHW, like PyTorch

    raw = init_raw_params(kp, channel, K, groups, reduct)
    folded = fold_params(raw, channel, groups)
    P = _pick_lane_pack(channel, V)            # 4 -> 128-lane packing for C=32
    packed = pack_lane_params(folded, P)

    out = jax.block_until_ready(temporal_sl_forward(x, packed, temporal_window_size=K))
    ref = jax.block_until_ready(torch_reference(x, raw, temporal_window_size=K, groups=groups))

    np.testing.assert_allclose(np.asarray(out), np.asarray(ref), rtol=5e-2, atol=5e-2)
    print("KERNEL_OK")
</pallas_src>

<mosaic_0001>
module attributes {stable_mosaic.version = 11 : i64} {
  func.func @temporal_sl_kernel(%arg0: i32, %arg1: memref<2x64x128xf32, #tpu.memory_space<vmem>>, %arg2: memref<9x128x128xbf16, #tpu.memory_space<vmem>>, %arg3: memref<1x128xf32, #tpu.memory_space<vmem>>, %arg4: memref<128x64xbf16, #tpu.memory_space<vmem>>, %arg5: memref<1x64xf32, #tpu.memory_space<vmem>>, %arg6: memref<64x128xbf16, #tpu.memory_space<vmem>>, %arg7: memref<1x128xf32, #tpu.memory_space<vmem>>, %arg8: memref<9x128x128xbf16, #tpu.memory_space<vmem>>, %arg9: memref<1x128xf32, #tpu.memory_space<vmem>>, %arg10: memref<2x64x128xf32, #tpu.memory_space<vmem>>) attributes {dimension_semantics = [#tpu.dimension_semantics<parallel>], iteration_bounds = array<i64: 1>, scalar_prefetch = 0 : i64, scratch_operands = 0 : i64, tpu.core_type = #tpu.core_type<tc>, window_params = [{transform_indices = @transform_0, window_bounds = array<i64: 2, 64, 128>}, {pipeline_mode = #tpu.pipeline_mode<synchronous>, transform_indices = @transform_1, window_bounds = array<i64: 9, 128, 128>}, {pipeline_mode = #tpu.pipeline_mode<synchronous>, transform_indices = @transform_2, window_bounds = array<i64: 1, 128>}, {pipeline_mode = #tpu.pipeline_mode<synchronous>, transform_indices = @transform_3, window_bounds = array<i64: 128, 64>}, {pipeline_mode = #tpu.pipeline_mode<synchronous>, transform_indices = @transform_4, window_bounds = array<i64: 1, 64>}, {pipeline_mode = #tpu.pipeline_mode<synchronous>, transform_indices = @transform_5, window_bounds = array<i64: 64, 128>}, {pipeline_mode = #tpu.pipeline_mode<synchronous>, transform_indices = @transform_6, window_bounds = array<i64: 1, 128>}, {pipeline_mode = #tpu.pipeline_mode<synchronous>, transform_indices = @transform_7, window_bounds = array<i64: 9, 128, 128>}, {pipeline_mode = #tpu.pipeline_mode<synchronous>, transform_indices = @transform_8, window_bounds = array<i64: 1, 128>}, {transform_indices = @transform_9, window_bounds = array<i64: 2, 64, 128>}]} {
    %c0 = arith.constant 0 : index
    %c0_0 = arith.constant 0 : index
    %c0_1 = arith.constant 0 : index
    %0 = vector.load %arg1[%c0, %c0_0, %c0_1] : memref<2x64x128xf32, #tpu.memory_space<vmem>>, vector<2x64x128xf32>
    %1 = arith.truncf %0 : vector<2x64x128xf32> to vector<2x64x128xbf16>
    %cst = arith.constant 0.000000e+00 : bf16
    %2 = vector.broadcast %cst : bf16 to vector<2x16x128xbf16>
    %3 = tpu.concatenate %2, %1, %2 in 1 : vector<2x16x128xbf16>, vector<2x64x128xbf16>, vector<2x16x128xbf16> -> vector<2x96x128xbf16>
    %4 = vector.extract_strided_slice %3 {offsets = [0, 0, 0], sizes = [2, 64, 128], strides = [1, 1, 1]} : vector<2x96x128xbf16> to vector<2x64x128xbf16>
    %5 = vector.shape_cast %4 : vector<2x64x128xbf16> to vector<128x128xbf16>
    %c0_2 = arith.constant 0 : index
    %c0_3 = arith.constant 0 : index
    %c0_4 = arith.constant 0 : index
    %6 = vector.load %arg2[%c0_2, %c0_3, %c0_4] : memref<9x128x128xbf16, #tpu.memory_space<vmem>>, vector<1x128x128xbf16>
    %7 = vector.shape_cast %6 : vector<1x128x128xbf16> to vector<128x128xbf16>
    %cst_5 = arith.constant dense<0.000000e+00> : vector<128x128xf32>
    %8 = tpu.matmul %5, %7, %cst_5 {dimension_numbers = #tpu.dot_dimension_numbers<[1], [0], [0], [1], [0, 0, 1, 1], [], []>} : vector<128x128xbf16>, vector<128x128xbf16>, vector<128x128xf32> -> vector<128x128xf32>
    %9 = vector.extract_strided_slice %3 {offsets = [0, 4, 0], sizes = [2, 64, 128], strides = [1, 1, 1]} : vector<2x96x128xbf16> to vector<2x64x128xbf16>
    %10 = vector.shape_cast %9 : vector<2x64x128xbf16> to vector<128x128xbf16>
    %c1 = arith.constant 1 : index
    %c0_6 = arith.constant 0 : index
    %c0_7 = arith.constant 0 : index
    %11 = vector.load %arg2[%c1, %c0_6, %c0_7] : memref<9x128x128xbf16, #tpu.memory_space<vmem>>, vector<1x128x128xbf16>
    %12 = vector.shape_cast %11 : vector<1x128x128xbf16> to vector<128x128xbf16>
    %cst_8 = arith.constant dense<0.000000e+00> : vector<128x128xf32>
    %13 = tpu.matmul %10, %12, %cst_8 {dimension_numbers = #tpu.dot_dimension_numbers<[1], [0], [0], [1], [0, 0, 1, 1], [], []>} : vector<128x128xbf16>, vector<128x128xbf16>, vector<128x128xf32> -> vector<128x128xf32>
    %14 = vector.extract_strided_slice %3 {offsets = [0, 8, 0], sizes = [2, 64, 128], strides = [1, 1, 1]} : vector<2x96x128xbf16> to vector<2x64x128xbf16>
    %15 = vector.shape_cast %14 : vector<2x64x128xbf16> to vector<128x128xbf16>
    %c2 = arith.constant 2 : index
    %c0_9 = arith.constant 0 : index
    %c0_10 = arith.constant 0 : index
    %16 = vector.load %arg2[%c2, %c0_9, %c0_10] : memref<9x128x128xbf16, #tpu.memory_space<vmem>>, vector<1x128x128xbf16>
    %17 = vector.shape_cast %16 : vector<1x128x128xbf16> to vector<128x128xbf16>
    %cst_11 = arith.constant dense<0.000000e+00> : vector<128x128xf32>
    %18 = tpu.matmul %15, %17, %cst_11 {dimension_numbers = #tpu.dot_dimension_numbers<[1], [0], [0], [1], [0, 0, 1, 1], [], []>} : vector<128x128xbf16>, vector<128x128xbf16>, vector<128x128xf32> -> vector<128x128xf32>
    %19 = vector.extract_strided_slice %3 {offsets = [0, 12, 0], sizes = [2, 64, 128], strides = [1, 1, 1]} : vector<2x96x128xbf16> to vector<2x64x128xbf16>
    %20 = vector.shape_cast %19 : vector<2x64x128xbf16> to vector<128x128xbf16>
    %c3 = arith.constant 3 : index
    %c0_12 = arith.constant 0 : index
    %c0_13 = arith.constant 0 : index
    %21 = vector.load %arg2[%c3, %c0_12, %c0_13] : memref<9x128x128xbf16, #tpu.memory_space<vmem>>, vector<1x128x128xbf16>
    %22 = vector.shape_cast %21 : vector<1x128x128xbf16> to vector<128x128xbf16>
    %cst_14 = arith.constant dense<0.000000e+00> : vector<128x128xf32>
    %23 = tpu.matmul %20, %22, %cst_14 {dimension_numbers = #tpu.dot_dimension_numbers<[1], [0], [0], [1], [0, 0, 1, 1], [], []>} : vector<128x128xbf16>, vector<128x128xbf16>, vector<128x128xf32> -> vector<128x128xf32>
    %24 = vector.extract_strided_slice %3 {offsets = [0, 16, 0], sizes = [2, 64, 128], strides = [1, 1, 1]} : vector<2x96x128xbf16> to vector<2x64x128xbf16>
    %25 = vector.shape_cast %24 : vector<2x64x128xbf16> to vector<128x128xbf16>
    %c4 = arith.constant 4 : index
    %c0_15 = arith.constant 0 : index
    %c0_16 = arith.constant 0 : index
    %26 = vector.load %arg2[%c4, %c0_15, %c0_16] : memref<9x128x128xbf16, #tpu.memory_space<vmem>>, vector<1x128x128xbf16>
    %27 = vector.shape_cast %26 : vector<1x128x128xbf16> to vector<128x128xbf16>
    %cst_17 = arith.constant dense<0.000000e+00> : vector<128x128xf32>
    %28 = tpu.matmul %25, %27, %cst_17 {dimension_numbers = #tpu.dot_dimension_numbers<[1], [0], [0], [1], [0, 0, 1, 1], [], []>} : vector<128x128xbf16>, vector<128x128xbf16>, vector<128x128xf32> -> vector<128x128xf32>
    %29 = vector.extract_strided_slice %3 {offsets = [0, 20, 0], sizes = [2, 64, 128], strides = [1, 1, 1]} : vector<2x96x128xbf16> to vector<2x64x128xbf16>
    %30 = vector.shape_cast %29 : vector<2x64x128xbf16> to vector<128x128xbf16>
    %c5 = arith.constant 5 : index
    %c0_18 = arith.constant 0 : index
    %c0_19 = arith.constant 0 : index
    %31 = vector.load %arg2[%c5, %c0_18, %c0_19] : memref<9x128x128xbf16, #tpu.memory_space<vmem>>, vector<1x128x128xbf16>
    %32 = vector.shape_cast %31 : vector<1x128x128xbf16> to vector<128x128xbf16>
    %cst_20 = arith.constant dense<0.000000e+00> : vector<128x128xf32>
    %33 = tpu.matmul %30, %32, %cst_20 {dimension_numbers = #tpu.dot_dimension_numbers<[1], [0], [0], [1], [0, 0, 1, 1], [], []>} : vector<128x128xbf16>, vector<128x128xbf16>, vector<128x128xf32> -> vector<128x128xf32>
    %34 = vector.extract_strided_slice %3 {offsets = [0, 24, 0], sizes = [2, 64, 128], strides = [1, 1, 1]} : vector<2x96x128xbf16> to vector<2x64x128xbf16>
    %35 = vector.shape_cast %34 : vector<2x64x128xbf16> to vector<128x128xbf16>
    %c6 = arith.constant 6 : index
    %c0_21 = arith.constant 0 : index
    %c0_22 = arith.constant 0 : index
    %36 = vector.load %arg2[%c6, %c0_21, %c0_22] : memref<9x128x128xbf16, #tpu.memory_space<vmem>>, vector<1x128x128xbf16>
    %37 = vector.shape_cast %36 : vector<1x128x128xbf16> to vector<128x128xbf16>
    %cst_23 = arith.constant dense<0.000000e+00> : vector<128x128xf32>
    %38 = tpu.matmul %35, %37, %cst_23 {dimension_numbers = #tpu.dot_dimension_numbers<[1], [0], [0], [1], [0, 0, 1, 1], [], []>} : vector<128x128xbf16>, vector<128x128xbf16>, vector<128x128xf32> -> vector<128x128xf32>
    %39 = vector.extract_strided_slice %3 {offsets = [0, 28, 0], sizes = [2, 64, 128], strides = [1, 1, 1]} : vector<2x96x128xbf16> to vector<2x64x128xbf16>
    %40 = vector.shape_cast %39 : vector<2x64x128xbf16> to vector<128x128xbf16>
    %c7 = arith.constant 7 : index
    %c0_24 = arith.constant 0 : index
    %c0_25 = arith.constant 0 : index
    %41 = vector.load %arg2[%c7, %c0_24, %c0_25] : memref<9x128x128xbf16, #tpu.memory_space<vmem>>, vector<1x128x128xbf16>
    %42 = vector.shape_cast %41 : vector<1x128x128xbf16> to vector<128x128xbf16>
    %cst_26 = arith.constant dense<0.000000e+00> : vector<128x128xf32>
    %43 = tpu.matmul %40, %42, %cst_26 {dimension_numbers = #tpu.dot_dimension_numbers<[1], [0], [0], [1], [0, 0, 1, 1], [], []>} : vector<128x128xbf16>, vector<128x128xbf16>, vector<128x128xf32> -> vector<128x128xf32>
    %44 = vector.extract_strided_slice %3 {offsets = [0, 32, 0], sizes = [2, 64, 128], strides = [1, 1, 1]} : vector<2x96x128xbf16> to vector<2x64x128xbf16>
    %45 = vector.shape_cast %44 : vector<2x64x128xbf16> to vector<128x128xbf16>
    %c8 = arith.constant 8 : index
    %c0_27 = arith.constant 0 : index
    %c0_28 = arith.constant 0 : index
    %46 = vector.load %arg2[%c8, %c0_27, %c0_28] : memref<9x128x128xbf16, #tpu.memory_space<vmem>>, vector<1x128x128xbf16>
    %47 = vector.shape_cast %46 : vector<1x128x128xbf16> to vector<128x128xbf16>
    %cst_29 = arith.constant dense<0.000000e+00> : vector<128x128xf32>
    %48 = tpu.matmul %45, %47, %cst_29 {dimension_numbers = #tpu.dot_dimension_numbers<[1], [0], [0], [1], [0, 0, 1, 1], [], []>} : vector<128x128xbf16>, vector<128x128xbf16>, vector<128x128xf32> -> vector<128x128xf32>
    %49 = arith.addf %8, %13 : vector<128x128xf32>
    %50 = arith.addf %18, %23 : vector<128x128xf32>
    %51 = arith.addf %28, %33 : vector<128x128xf32>
    %52 = arith.addf %38, %43 : vector<128x128xf32>
    %53 = arith.addf %49, %50 : vector<128x128xf32>
    %54 = arith.addf %51, %52 : vector<128x128xf32>
    %55 = arith.addf %53, %54 : vector<128x128xf32>
    %56 = arith.addf %55, %48 : vector<128x128xf32>
    %c0_30 = arith.constant 0 : index
    %c0_31 = arith.constant 0 : index
    %57 = vector.load %arg3[%c0_30, %c0_31] : memref<1x128xf32, #tpu.memory_space<vmem>>, vector<1x128xf32>
    %58 = vector.broadcast %57 : vector<1x128xf32> to vector<128x128xf32>
    %59 = arith.addf %56, %58 : vector<128x128xf32>
    %cst_32 = arith.constant 3.000000e+00 : f32
    %60 = vector.broadcast %cst_32 : f32 to vector<128x128xf32>
    %61 = arith.addf %59, %60 : vector<128x128xf32>
    %cst_33 = arith.constant 0.000000e+00 : f32
    %cst_34 = arith.constant 6.000000e+00 : f32
    %62 = vector.broadcast %cst_33 : f32 to vector<128x128xf32>
    %63 = arith.maximumf %62, %61 : vector<128x128xf32>
    %64 = vector.broadcast %cst_34 : f32 to vector<128x128xf32>
    %65 = arith.minimumf %64, %63 : vector<128x128xf32>
    %66 = arith.mulf %59, %65 : vector<128x128xf32>
    %67 = arith.truncf %66 : vector<128x128xf32> to vector<128x128xbf16>
    %c0_35 = arith.constant 0 : index
    %c0_36 = arith.constant 0 : index
    %68 = vector.load %arg4[%c0_35, %c0_36] : memref<128x64xbf16, #tpu.memory_space<vmem>>, vector<128x64xbf16>
    %cst_37 = arith.constant dense<0.000000e+00> : vector<128x64xf32>
    %69 = tpu.matmul %67, %68, %cst_37 {dimension_numbers = #tpu.dot_dimension_numbers<[1], [0], [0], [1], [0, 0, 1, 1], [], []>} : vector<128x128xbf16>, vector<128x64xbf16>, vector<128x64xf32> -> vector<128x64xf32>
    %c0_38 = arith.constant 0 : index
    %c0_39 = arith.constant 0 : index
    %70 = vector.load %arg5[%c0_38, %c0_39] : memref<1x64xf32, #tpu.memory_space<vmem>>, vector<1x64xf32>
    %71 = vector.broadcast %70 : vector<1x64xf32> to vector<128x64xf32>
    %72 = arith.addf %69, %71 : vector<128x64xf32>
    %73 = arith.truncf %72 : vector<128x64xf32> to vector<128x64xbf16>
    %c0_40 = arith.constant 0 : index
    %c0_41 = arith.constant 0 : index
    %74 = vector.load %arg6[%c0_40, %c0_41] : memref<64x128xbf16, #tpu.memory_space<vmem>>, vector<64x128xbf16>
    %cst_42 = arith.constant dense<0.000000e+00> : vector<128x128xf32>
    %75 = tpu.matmul %73, %74, %cst_42 {dimension_numbers = #tpu.dot_dimension_numbers<[1], [0], [0], [1], [0, 0, 1, 1], [], []>} : vector<128x64xbf16>, vector<64x128xbf16>, vector<128x128xf32> -> vector<128x128xf32>
    %c0_43 = arith.constant 0 : index
    %c0_44 = arith.constant 0 : index
    %76 = vector.load %arg7[%c0_43, %c0_44] : memref<1x128xf32, #tpu.memory_space<vmem>>, vector<1x128xf32>
    %77 = vector.broadcast %76 : vector<1x128xf32> to vector<128x128xf32>
    %78 = arith.addf %75, %77 : vector<128x128xf32>
    %cst_45 = arith.constant 3.000000e+00 : f32
    %79 = vector.broadcast %cst_45 : f32 to vector<128x128xf32>
    %80 = arith.addf %78, %79 : vector<128x128xf32>
    %cst_46 = arith.constant 0.000000e+00 : f32
    %cst_47 = arith.constant 6.000000e+00 : f32
    %81 = vector.broadcast %cst_46 : f32 to vector<128x128xf32>
    %82 = arith.maximumf %81, %80 : vector<128x128xf32>
    %83 = vector.broadcast %cst_47 : f32 to vector<128x128xf32>
    %84 = arith.minimumf %83, %82 : vector<128x128xf32>
    %85 = arith.mulf %78, %84 : vector<128x128xf32>
    %86 = arith.truncf %85 : vector<128x128xf32> to vector<128x128xbf16>
    %87 = vector.shape_cast %86 : vector<128x128xbf16> to vector<2x64x128xbf16>
    %cst_48 = arith.constant 0.000000e+00 : bf16
    %88 = vector.broadcast %cst_48 : bf16 to vector<2x16x128xbf16>
    %89 = tpu.concatenate %88, %87, %88 in 1 : vector<2x16x128xbf16>, vector<2x64x128xbf16>, vector<2x16x128xbf16> -> vector<2x96x128xbf16>
    %90 = vector.extract_strided_slice %89 {offsets = [0, 0, 0], sizes = [2, 64, 128], strides = [1, 1, 1]} : vector<2x96x128xbf16> to vector<2x64x128xbf16>
    %91 = vector.shape_cast %90 : vector<2x64x128xbf16> to vector<128x128xbf16>
    %c0_49 = arith.constant 0 : index
    %c0_50 = arith.constant 0 : index
    %c0_51 = arith.constant 0 : index
    %92 = vector.load %arg8[%c0_49, %c0_50, %c0_51] : memref<9x128x128xbf16, #tpu.memory_space<vmem>>, vector<1x128x128xbf16>
    %93 = vector.shape_cast %92 : vector<1x128x128xbf16> to vector<128x128xbf16>
    %cst_52 = arith.constant dense<0.000000e+00> : vector<128x128xf32>
    %94 = tpu.matmul %91, %93, %cst_52 {dimension_numbers = #tpu.dot_dimension_numbers<[1], [0], [0], [1], [0, 0, 1, 1], [], []>} : vector<128x128xbf16>, vector<128x128xbf16>, vector<128x128xf32> -> vector<128x128xf32>
    %95 = vector.extract_strided_slice %89 {offsets = [0, 4, 0], sizes = [2, 64, 128], strides = [1, 1, 1]} : vector<2x96x128xbf16> to vector<2x64x128xbf16>
    %96 = vector.shape_cast %95 : vector<2x64x128xbf16> to vector<128x128xbf16>
    %c1_53 = arith.constant 1 : index
    %c0_54 = arith.constant 0 : index
    %c0_55 = arith.constant 0 : index
    %97 = vector.load %arg8[%c1_53, %c0_54, %c0_55] : memref<9x128x128xbf16, #tpu.memory_space<vmem>>, vector<1x128x128xbf16>
    %98 = vector.shape_cast %97 : vector<1x128x128xbf16> to vector<128x128xbf16>
    %cst_56 = arith.constant dense<0.000000e+00> : vector<128x128xf32>
    %99 = tpu.matmul %96, %98, %cst_56 {dimension_numbers = #tpu.dot_dimension_numbers<[1], [0], [0], [1], [0, 0, 1, 1], [], []>} : vector<128x128xbf16>, vector<128x128xbf16>, vector<128x128xf32> -> vector<128x128xf32>
    %100 = vector.extract_strided_slice %89 {offsets = [0, 8, 0], sizes = [2, 64, 128], strides = [1, 1, 1]} : vector<2x96x128xbf16> to vector<2x64x128xbf16>
    %101 = vector.shape_cast %100 : vector<2x64x128xbf16> to vector<128x128xbf16>
    %c2_57 = arith.constant 2 : index
    %c0_58 = arith.constant 0 : index
    %c0_59 = arith.constant 0 : index
    %102 = vector.load %arg8[%c2_57, %c0_58, %c0_59] : memref<9x128x128xbf16, #tpu.memory_space<vmem>>, vector<1x128x128xbf16>
    %103 = vector.shape_cast %102 : vector<1x128x128xbf16> to vector<128x128xbf16>
    %cst_60 = arith.constant dense<0.000000e+00> : vector<128x128xf32>
    %104 = tpu.matmul %101, %103, %cst_60 {dimension_numbers = #tpu.dot_dimension_numbers<[1], [0], [0], [1], [0, 0, 1, 1], [], []>} : vector<128x128xbf16>, vector<128x128xbf16>, vector<128x128xf32> -> vector<128x128xf32>
    %105 = vector.extract_strided_slice %89 {offsets = [0, 12, 0], sizes = [2, 64, 128], strides = [1, 1, 1]} : vector<2x96x128xbf16> to vector<2x64x128xbf16>
    %106 = vector.shape_cast %105 : vector<2x64x128xbf16> to vector<128x128xbf16>
    %c3_61 = arith.constant 3 : index
    %c0_62 = arith.constant 0 : index
    %c0_63 = arith.constant 0 : index
    %107 = vector.load %arg8[%c3_61, %c0_62, %c0_63] : memref<9x128x128xbf16, #tpu.memory_space<vmem>>, vector<1x128x128xbf16>
    %108 = vector.shape_cast %107 : vector<1x128x128xbf16> to vector<128x128xbf16>
    %cst_64 = arith.constant dense<0.000000e+00> : vector<128x128xf32>
    %109 = tpu.matmul %106, %108, %cst_64 {dimension_numbers = #tpu.dot_dimension_numbers<[1], [0], [0], [1], [0, 0, 1, 1], [], []>} : vector<128x128xbf16>, vector<128x128xbf16>, vector<128x128xf32> -> vector<128x128xf32>
    %110 = vector.extract_strided_slice %89 {offsets = [0, 16, 0], sizes = [2, 64, 128], strides = [1, 1, 1]} : vector<2x96x128xbf16> to vector<2x64x128xbf16>
    %111 = vector.shape_cast %110 : vector<2x64x128xbf16> to vector<128x128xbf16>
    %c4_65 = arith.constant 4 : index
    %c0_66 = arith.constant 0 : index
    %c0_67 = arith.constant 0 : index
    %112 = vector.load %arg8[%c4_65, %c0_66, %c0_67] : memref<9x128x128xbf16, #tpu.memory_space<vmem>>, vector<1x128x128xbf16>
    %113 = vector.shape_cast %112 : vector<1x128x128xbf16> to vector<128x128xbf16>
    %cst_68 = arith.constant dense<0.000000e+00> : vector<128x128xf32>
    %114 = tpu.matmul %111, %113, %cst_68 {dimension_numbers = #tpu.dot_dimension_numbers<[1], [0], [0], [1], [0, 0, 1, 1], [], []>} : vector<128x128xbf16>, vector<128x128xbf16>, vector<128x128xf32> -> vector<128x128xf32>
    %115 = vector.extract_strided_slice %89 {offsets = [0, 20, 0], sizes = [2, 64, 128], strides = [1, 1, 1]} : vector<2x96x128xbf16> to vector<2x64x128xbf16>
    %116 = vector.shape_cast %115 : vector<2x64x128xbf16> to vector<128x128xbf16>
    %c5_69 = arith.constant 5 : index
    %c0_70 = arith.constant 0 : index
    %c0_71 = arith.constant 0 : index
    %117 = vector.load %arg8[%c5_69, %c0_70, %c0_71] : memref<9x128x128xbf16, #tpu.memory_space<vmem>>, vector<1x128x128xbf16>
    %118 = vector.shape_cast %117 : vector<1x128x128xbf16> to vector<128x128xbf16>
    %cst_72 = arith.constant dense<0.000000e+00> : vector<128x128xf32>
    %119 = tpu.matmul %116, %118, %cst_72 {dimension_numbers = #tpu.dot_dimension_numbers<[1], [0], [0], [1], [0, 0, 1, 1], [], []>} : vector<128x128xbf16>, vector<128x128xbf16>, vector<128x128xf32> -> vector<128x128xf32>
    %120 = vector.extract_strided_slice %89 {offsets = [0, 24, 0], sizes = [2, 64, 128], strides = [1, 1, 1]} : vector<2x96x128xbf16> to vector<2x64x128xbf16>
    %121 = vector.shape_cast %120 : vector<2x64x128xbf16> to vector<128x128xbf16>
    %c6_73 = arith.constant 6 : index
    %c0_74 = arith.constant 0 : index
    %c0_75 = arith.constant 0 : index
    %122 = vector.load %arg8[%c6_73, %c0_74, %c0_75] : memref<9x128x128xbf16, #tpu.memory_space<vmem>>, vector<1x128x128xbf16>
    %123 = vector.shape_cast %122 : vector<1x128x128xbf16> to vector<128x128xbf16>
    %cst_76 = arith.constant dense<0.000000e+00> : vector<128x128xf32>
    %124 = tpu.matmul %121, %123, %cst_76 {dimension_numbers = #tpu.dot_dimension_numbers<[1], [0], [0], [1], [0, 0, 1, 1], [], []>} : vector<128x128xbf16>, vector<128x128xbf16>, vector<128x128xf32> -> vector<128x128xf32>
    %125 = vector.extract_strided_slice %89 {offsets = [0, 28, 0], sizes = [2, 64, 128], strides = [1, 1, 1]} : vector<2x96x128xbf16> to vector<2x64x128xbf16>
    %126 = vector.shape_cast %125 : vector<2x64x128xbf16> to vector<128x128xbf16>
    %c7_77 = arith.constant 7 : index
    %c0_78 = arith.constant 0 : index
    %c0_79 = arith.constant 0 : index
    %127 = vector.load %arg8[%c7_77, %c0_78, %c0_79] : memref<9x128x128xbf16, #tpu.memory_space<vmem>>, vector<1x128x128xbf16>
    %128 = vector.shape_cast %127 : vector<1x128x128xbf16> to vector<128x128xbf16>
    %cst_80 = arith.constant dense<0.000000e+00> : vector<128x128xf32>
    %129 = tpu.matmul %126, %128, %cst_80 {dimension_numbers = #tpu.dot_dimension_numbers<[1], [0], [0], [1], [0, 0, 1, 1], [], []>} : vector<128x128xbf16>, vector<128x128xbf16>, vector<128x128xf32> -> vector<128x128xf32>
    %130 = vector.extract_strided_slice %89 {offsets = [0, 32, 0], sizes = [2, 64, 128], strides = [1, 1, 1]} : vector<2x96x128xbf16> to vector<2x64x128xbf16>
    %131 = vector.shape_cast %130 : vector<2x64x128xbf16> to vector<128x128xbf16>
    %c8_81 = arith.constant 8 : index
    %c0_82 = arith.constant 0 : index
    %c0_83 = arith.constant 0 : index
    %132 = vector.load %arg8[%c8_81, %c0_82, %c0_83] : memref<9x128x128xbf16, #tpu.memory_space<vmem>>, vector<1x128x128xbf16>
    %133 = vector.shape_cast %132 : vector<1x128x128xbf16> to vector<128x128xbf16>
    %cst_84 = arith.constant dense<0.000000e+00> : vector<128x128xf32>
    %134 = tpu.matmul %131, %133, %cst_84 {dimension_numbers = #tpu.dot_dimension_numbers<[1], [0], [0], [1], [0, 0, 1, 1], [], []>} : vector<128x128xbf16>, vector<128x128xbf16>, vector<128x128xf32> -> vector<128x128xf32>
    %135 = arith.addf %94, %99 : vector<128x128xf32>
    %136 = arith.addf %104, %109 : vector<128x128xf32>
    %137 = arith.addf %114, %119 : vector<128x128xf32>
    %138 = arith.addf %124, %129 : vector<128x128xf32>
    %139 = arith.addf %135, %136 : vector<128x128xf32>
    %140 = arith.addf %137, %138 : vector<128x128xf32>
    %141 = arith.addf %139, %140 : vector<128x128xf32>
    %142 = arith.addf %141, %134 : vector<128x128xf32>
    %c0_85 = arith.constant 0 : index
    %c0_86 = arith.constant 0 : index
    %143 = vector.load %arg9[%c0_85, %c0_86] : memref<1x128xf32, #tpu.memory_space<vmem>>, vector<1x128xf32>
    %144 = vector.broadcast %143 : vector<1x128xf32> to vector<128x128xf32>
    %145 = arith.addf %142, %144 : vector<128x128xf32>
    %146 = vector.shape_cast %145 : vector<128x128xf32> to vector<2x64x128xf32>
    %c0_87 = arith.constant 0 : index
    %c0_88 = arith.constant 0 : index
    %c0_89 = arith.constant 0 : index
    %147 = vector.load %arg1[%c0_87, %c0_88, %c0_89] : memref<2x64x128xf32, #tpu.memory_space<vmem>>, vector<2x64x128xf32>
    %148 = arith.addf %146, %147 : vector<2x64x128xf32>
    %c0_90 = arith.constant 0 : index
    %c0_91 = arith.constant 0 : index
    %c0_92 = arith.constant 0 : index
    %149 = vector.load %arg10[%c0_90, %c0_91, %c0_92] : memref<2x64x128xf32, #tpu.memory_space<vmem>>, vector<2x64x128xf32>
    tpu.vector_store %arg10[%c0_90, %c0_91, %c0_92], %148 {strides = array<i32>} : memref<2x64x128xf32, #tpu.memory_space<vmem>>, vector<2x64x128xf32>,
    return
  }
  func.func @transform_0(%arg0: i32) -> (i32, i32, i32) {
    %c0_i32 = arith.constant 0 : i32
    %c0_i32_0 = arith.constant 0 : i32
    %c0_i32_1 = arith.constant 0 : i32
    return %arg0, %c0_i32, %c0_i32_0 : i32, i32, i32
  }
  func.func @transform_1(%arg0: i32) -> (i32, i32, i32) {
    %c0_i32 = arith.constant 0 : i32
    %c0_i32_0 = arith.constant 0 : i32
    %c0_i32_1 = arith.constant 0 : i32
    %c0_i32_2 = arith.constant 0 : i32
    return %c0_i32, %c0_i32_0, %c0_i32_1 : i32, i32, i32
  }
  func.func @transform_2(%arg0: i32) -> (i32, i32) {
    %c0_i32 = arith.constant 0 : i32
    %c0_i32_0 = arith.constant 0 : i32
    %c0_i32_1 = arith.constant 0 : i32
    return %c0_i32, %c0_i32_0 : i32, i32
  }
  func.func @transform_3(%arg0: i32) -> (i32, i32) {
    %c0_i32 = arith.constant 0 : i32
    %c0_i32_0 = arith.constant 0 : i32
    %c0_i32_1 = arith.constant 0 : i32
    return %c0_i32, %c0_i32_0 : i32, i32
  }
  func.func @transform_4(%arg0: i32) -> (i32, i32) {
    %c0_i32 = arith.constant 0 : i32
    %c0_i32_0 = arith.constant 0 : i32
    %c0_i32_1 = arith.constant 0 : i32
    return %c0_i32, %c0_i32_0 : i32, i32
  }
  func.func @transform_5(%arg0: i32) -> (i32, i32) {
    %c0_i32 = arith.constant 0 : i32
    %c0_i32_0 = arith.constant 0 : i32
    %c0_i32_1 = arith.constant 0 : i32
    return %c0_i32, %c0_i32_0 : i32, i32
  }
  func.func @transform_6(%arg0: i32) -> (i32, i32) {
    %c0_i32 = arith.constant 0 : i32
    %c0_i32_0 = arith.constant 0 : i32
    %c0_i32_1 = arith.constant 0 : i32
    return %c0_i32, %c0_i32_0 : i32, i32
  }
  func.func @transform_7(%arg0: i32) -> (i32, i32, i32) {
    %c0_i32 = arith.constant 0 : i32
    %c0_i32_0 = arith.constant 0 : i32
    %c0_i32_1 = arith.constant 0 : i32
    %c0_i32_2 = arith.constant 0 : i32
    return %c0_i32, %c0_i32_0, %c0_i32_1 : i32, i32, i32
  }
  func.func @transform_8(%arg0: i32) -> (i32, i32) {
    %c0_i32 = arith.constant 0 : i32
    %c0_i32_0 = arith.constant 0 : i32
    %c0_i32_1 = arith.constant 0 : i32
    return %c0_i32, %c0_i32_0 : i32, i32
  }
  func.func @transform_9(%arg0: i32) -> (i32, i32, i32) {
    %c0_i32 = arith.constant 0 : i32
    %c0_i32_0 = arith.constant 0 : i32
    %c0_i32_1 = arith.constant 0 : i32
    return %arg0, %c0_i32, %c0_i32_0 : i32, i32, i32
  }
}

</mosaic_0001>

<llo_original>
// kernel: tpu_custom_call.1
$region0: #{tpu_custom_call.1}
  #allocation0 [shape = 'u32[]', space=smem, size = 0x4, offset = 0x4, fixed_abs, tag = 'smem constant byte address 0x4 - core index']
  #allocation1 [shape = 'u32[144,128]{1,0:T(1,128)}', space=vmem, size = 0x12000, scoped, tag = 'internal scratch']
  %s0 = inlined_call_operand.hbm [shape: f32[2,64,128], index: 0, kind: input, shape index: {}]
  %s1 = inlined_call_operand.hbm [shape: bf16[9,128,128], index: 1, kind: input, shape index: {}]
  %s2 = inlined_call_operand.vmem [shape: f32[1,128], index: 2, kind: input, shape index: {}]
  %s3 = inlined_call_operand.vmem [shape: bf16[128,64], index: 3, kind: input, shape index: {}]
  %s4 = inlined_call_operand.vmem [shape: f32[1,64], index: 4, kind: input, shape index: {}]
  %s5 = inlined_call_operand.vmem [shape: bf16[64,128], index: 5, kind: input, shape index: {}]
  %s6 = inlined_call_operand.vmem [shape: f32[1,128], index: 6, kind: input, shape index: {}]
  %s7 = inlined_call_operand.hbm [shape: bf16[9,128,128], index: 7, kind: input, shape index: {}]
  %s8 = inlined_call_operand.vmem [shape: f32[1,128], index: 8, kind: input, shape index: {}]
  %s9 = inlined_call_operand.hbm [shape: f32[2,64,128], index: 9, kind: output, shape index: {}]
  %s10 = sld [smem:[#allocation0]]
  $region58: #{tpu_custom_call.1} parent=0
    _
  %s12 = ssub.s32 1, %s10
  %s13 = scalar_select 0, %s12, %s10
  $region1: #{tpu_custom_call.1} parent=0
    #allocation2 [shape = 'u8[65536]{0}', space=vmem, size = 0x10000, scoped, tag = 'input window, operand 0, single buffered']
    #allocation3 [shape = 's32[1]{0}', space=sflag, size = 0x4, scoped, tag = 'scoped memory for tpu_custom_call.1']
    #allocation4 [shape = 's32[1]{0}', space=sflag, size = 0x4, scoped, tag = 'scoped memory for tpu_custom_call.1']
    #allocation5 [shape = 'u8[294912]{0}', space=vmem, size = 0x48000, scoped, tag = 'input window, operand 1, single buffered']
    #allocation6 [shape = 's32[1]{0}', space=sflag, size = 0x4, scoped, tag = 'scoped memory for tpu_custom_call.1']
    #allocation7 [shape = 'u8[294912]{0}', space=vmem, size = 0x48000, scoped, tag = 'input window, operand 7, single buffered']
    #allocation8 [shape = 'u8[65536]{0}', space=vmem, size = 0x10000, scoped, tag = 'output window, operand 0, single buffered']
    %14 = vsyncpa [#allocation3], 0
    %15 = vsyncpa [#allocation6], 0
    %16 = vsyncpa [#allocation4], 0
    // Predicated region
    $region2: #{tpu_custom_call.1} parent=1 // pred_check
      _
    $region3: #{tpu_custom_call.1} parent=1 // pred_check_branch
      %18 = sbr.rel (0) target = $region5
    $region4: #{tpu_custom_call.1} parent=1 // pred_region
      %s20 = ssub.s32 2048, 2048
      %21 = vsyncadd [#allocation3], %s20
      %s22 = sshll.u32 [#allocation2], 4
      %s23 = int_to_ptr.vmem [resolvable:$true] %s22
      %28 = dma.hbm_to_vmem [thread:$0]  %s0, 2048, %s23, [#allocation3], 128, 128, 8
    $region5: #{tpu_custom_call.1} parent=1 // pred_fallthru
      _
    // Predicated region
    $region6: #{tpu_custom_call.1} parent=1 // pred_check
      _
    $region7: #{tpu_custom_call.1} parent=1 // pred_check_branch
      %30 = sbr.rel (0) target = $region9
    $region8: #{tpu_custom_call.1} parent=1 // pred_region
      %s32 = ssub.s32 9216, 9216
      %33 = vsyncadd [#allocation6], %s32
      %s34 = sshll.u32 [#allocation5], 4
      %s35 = int_to_ptr.vmem [resolvable:$true] %s34
      %40 = dma.hbm_to_vmem [thread:$0]  %s1, 9216, %s35, [#allocation6], 64, 64, 4
    $region9: #{tpu_custom_call.1} parent=1 // pred_fallthru
      _
    // Predicated region
    $region10: #{tpu_custom_call.1} parent=1 // pred_check
      _
    $region11: #{tpu_custom_call.1} parent=1 // pred_check_branch
      %42 = sbr.rel (0) target = $region13
    $region12: #{tpu_custom_call.1} parent=1 // pred_region
      _
    $region13: #{tpu_custom_call.1} parent=1 // pred_fallthru
      _
    // Predicated region
    $region14: #{tpu_custom_call.1} parent=1 // pred_check
      _
    $region15: #{tpu_custom_call.1} parent=1 // pred_check_branch
      %44 = sbr.rel (0) target = $region17
    $region16: #{tpu_custom_call.1} parent=1 // pred_region
      _
    $region17: #{tpu_custom_call.1} parent=1 // pred_fallthru
      _
    // Predicated region
    $region18: #{tpu_custom_call.1} parent=1 // pred_check
      _
    $region19: #{tpu_custom_call.1} parent=1 // pred_check_branch
      %46 = sbr.rel (0) target = $region21
    $region20: #{tpu_custom_call.1} parent=1 // pred_region
      _
    $region21: #{tpu_custom_call.1} parent=1 // pred_fallthru
      _
    // Predicated region
    $region22: #{tpu_custom_call.1} parent=1 // pred_check
      _
    $region23: #{tpu_custom_call.1} parent=1 // pred_check_branch
      %48 = sbr.rel (0) target = $region25
    $region24: #{tpu_custom_call.1} parent=1 // pred_region
      _
    $region25: #{tpu_custom_call.1} parent=1 // pred_fallthru
      _
    // Predicated region
    $region26: #{tpu_custom_call.1} parent=1 // pred_check
      _
    $region27: #{tpu_custom_call.1} parent=1 // pred_check_branch
      %50 = sbr.rel (0) target = $region29
    $region28: #{tpu_custom_call.1} parent=1 // pred_region
      _
    $region29: #{tpu_custom_call.1} parent=1 // pred_fallthru
      _
    // Predicated region
    $region30: #{tpu_custom_call.1} parent=1 // pred_check
      _
    $region31: #{tpu_custom_call.1} parent=1 // pred_check_branch
      %52 = sbr.rel (0) target = $region33
    $region32: #{tpu_custom_call.1} parent=1 // pred_region
      %s54 = ssub.s32 9216, 9216
      %55 = vsyncadd [#allocation6], %s54
      %s56 = sshll.u32 [#allocation7], 4
      %s57 = int_to_ptr.vmem [resolvable:$true] %s56
      %62 = dma.hbm_to_vmem [thread:$0]  %s7, 9216, %s57, [#allocation6], 64, 64, 4
    $region33: #{tpu_custom_call.1} parent=1 // pred_fallthru
      _
    // Predicated region
    $region34: #{tpu_custom_call.1} parent=1 // pred_check
      _
    $region35: #{tpu_custom_call.1} parent=1 // pred_check_branch
      %64 = sbr.rel (0) target = $region37
    $region36: #{tpu_custom_call.1} parent=1 // pred_region
      _
    $region37: #{tpu_custom_call.1} parent=1 // pred_fallthru
      _
    // Predicated region
    $region38: #{tpu_custom_call.1} parent=1 // pred_check
      _
    $region39: #{tpu_custom_call.1} parent=1 // pred_check_branch
      %66 = sbr.rel (0) target = $region41
    $region40: #{tpu_custom_call.1} parent=1 // pred_region
      %67 = dma.done [#allocation3], 2048
    $region41: #{tpu_custom_call.1} parent=1 // pred_fallthru
      _
    // Predicated region
    $region42: #{tpu_custom_call.1} parent=1 // pred_check
      _
    $region43: #{tpu_custom_call.1} parent=1 // pred_check_branch
      %69 = sbr.rel (0) target = $region45
    $region44: #{tpu_custom_call.1} parent=1 // pred_region
      %70 = dma.done [#allocation6], 9216
    $region45: #{tpu_custom_call.1} parent=1 // pred_fallthru
      _
    // Predicated region
    $region46: #{tpu_custom_call.1} parent=1 // pred_check
      _
    $region47: #{tpu_custom_call.1} parent=1 // pred_check_branch
      %72 = sbr.rel (0) target = $region49
    $region48: #{tpu_custom_call.1} parent=1 // pred_region
      %73 = dma.done [#allocation6], 9216
    $region49: #{tpu_custom_call.1} parent=1 // pred_fallthru
      _
    %v75 = vld [vmem:[#allocation2] sm:$0xff]
    %v76 = vld [vmem:[#allocation2 + $0x8] sm:$0xff]
    %v77 = vld [vmem:[#allocation2 + $0x10] sm:$0xff]
    %v78 = vld [vmem:[#allocation2 + $0x18] sm:$0xff]
    %v79 = vld [vmem:[#allocation2 + $0x20] sm:$0xff]
    %v80 = vld [vmem:[#allocation2 + $0x28] sm:$0xff]
    %v81 = vld [vmem:[#allocation2 + $0x30] sm:$0xff]
    %v82 = vld [vmem:[#allocation2 + $0x38] sm:$0xff]
    %v83 = vld [vmem:[#allocation2 + $0x40] sm:$0xff]
    %v84 = vld [vmem:[#allocation2 + $0x48] sm:$0xff]
    %v85 = vld [vmem:[#allocation2 + $0x50] sm:$0xff]
    %v86 = vld [vmem:[#allocation2 + $0x58] sm:$0xff]
    %v87 = vld [vmem:[#allocation2 + $0x60] sm:$0xff]
    %v88 = vld [vmem:[#allocation2 + $0x68] sm:$0xff]
    %v89 = vld [vmem:[#allocation2 + $0x70] sm:$0xff]
    %v90 = vld [vmem:[#allocation2 + $0x78] sm:$0xff]
    %v91 = vpack.c.bf16 %v76, %v75
    %v92 = vpack.c.bf16 %v78, %v77
    %v93 = vpack.c.bf16 %v80, %v79
    %v94 = vpack.c.bf16 %v82, %v81
    %v95 = vpack.c.bf16 %v84, %v83
    %v96 = vpack.c.bf16 %v86, %v85
    %v97 = vpack.c.bf16 %v88, %v87
    %v98 = vpack.c.bf16 %v90, %v89
    %v99 = vld [vmem:[#allocation5] sm:$0xf]
    %v100 = vld [vmem:[#allocation5 + $0x4] sm:$0xf]
    %v101 = vld [vmem:[#allocation5 + $0x8] sm:$0xf]
    %v102 = vld [vmem:[#allocation5 + $0xc] sm:$0xf]
    %v103 = vld [vmem:[#allocation5 + $0x10] sm:$0xf]
    %v104 = vld [vmem:[#allocation5 + $0x14] sm:$0xf]
    %v105 = vld [vmem:[#allocation5 + $0x18] sm:$0xf]
    %v106 = vld [vmem:[#allocation5 + $0x1c] sm:$0xf]
    %v107 = vld [vmem:[#allocation5 + $0x20] sm:$0xf]
    %v108 = vld [vmem:[#allocation5 + $0x24] sm:$0xf]
    %v109 = vld [vmem:[#allocation5 + $0x28] sm:$0xf]
    %v110 = vld [vmem:[#allocation5 + $0x2c] sm:$0xf]
    %v111 = vld [vmem:[#allocation5 + $0x30] sm:$0xf]
    %v112 = vld [vmem:[#allocation5 + $0x34] sm:$0xf]
    %v113 = vld [vmem:[#allocation5 + $0x38] sm:$0xf]
    %v114 = vld [vmem:[#allocation5 + $0x3c] sm:$0xf]
    %vm124 = vcmask 1045504
    %v125 = vrot.slane 0, 2
    %v126 = vrot.slane %v91, 2
    %v127 = vsel %vm124, %v125, %v126
    %v128 = vrot.slane %v92, 2
    %v129 = vsel %vm124, %v126, %v128
    %v130 = vrot.slane %v93, 2
    %v131 = vsel %vm124, %v128, %v130
    %v132 = vrot.slane %v94, 2
    %v133 = vsel %vm124, %v130, %v132
    %v134 = vrot.slane %v95, 2
    %v135 = vsel %vm124, %v125, %v134
    %v136 = vrot.slane %v96, 2
    %v137 = vsel %vm124, %v134, %v136
    %v138 = vrot.slane %v97, 2
    %v139 = vsel %vm124, %v136, %v138
    %v140 = vrot.slane %v98, 2
    %v141 = vsel %vm124, %v138, %v140
    %s150 = scalar_lea.vmem [#allocation5], 64
    %v151 = vld [vmem:[%s150] sm:$0xf]
    %v152 = vld [vmem:[%s150 + $0x4] sm:$0xf]
    %v153 = vld [vmem:[%s150 + $0x8] sm:$0xf]
    %v154 = vld [vmem:[%s150 + $0xc] sm:$0xf]
    %v155 = vld [vmem:[%s150 + $0x10] sm:$0xf]
    %v156 = vld [vmem:[%s150 + $0x14] sm:$0xf]
    %v157 = vld [vmem:[%s150 + $0x18] sm:$0xf]
    %v158 = vld [vmem:[%s150 + $0x1c] sm:$0xf]
    %v159 = vld [vmem:[%s150 + $0x20] sm:$0xf]
    %v160 = vld [vmem:[%s150 + $0x24] sm:$0xf]
    %v161 = vld [vmem:[%s150 + $0x28] sm:$0xf]
    %v162 = vld [vmem:[%s150 + $0x2c] sm:$0xf]
    %v163 = vld [vmem:[%s150 + $0x30] sm:$0xf]
    %v164 = vld [vmem:[%s150 + $0x34] sm:$0xf]
    %v165 = vld [vmem:[%s150 + $0x38] sm:$0xf]
    %v166 = vld [vmem:[%s150 + $0x3c] sm:$0xf]
    %v183 = vunpack.c.l.b16 %v151
    %v184 = vunpack.c.l.b16 %v152
    %v185 = vunpack.c.l.b16 %v153
    %v186 = vunpack.c.l.b16 %v154
    %v187 = vunpack.c.l.b16 %v155
    %v188 = vunpack.c.l.b16 %v156
    %v189 = vunpack.c.l.b16 %v157
    %v190 = vunpack.c.l.b16 %v158
    %v191 = vunpack.c.l.b16 %v159
    %v192 = vunpack.c.l.b16 %v160
    %v193 = vunpack.c.l.b16 %v161
    %v194 = vunpack.c.l.b16 %v162
    %v195 = vunpack.c.l.b16 %v163
    %v196 = vunpack.c.l.b16 %v164
    %v197 = vunpack.c.l.b16 %v165
    %v198 = vunpack.c.l.b16 %v166
    %v199 = vpack.c.b16 %v184, %v183
    %v200 = vpack.c.b16 %v186, %v185
    %v201 = vpack.c.b16 %v188, %v187
    %v202 = vpack.c.b16 %v190, %v189
    %v203 = vpack.c.b16 %v192, %v191
    %v204 = vpack.c.b16 %v194, %v193
    %v205 = vpack.c.b16 %v196, %v195
    %v206 = vpack.c.b16 %v198, %v197
    %215 = vmatprep.subr.bf16.mxu0 0
    %216 = vmatpush1.bf16.msra.mxu0 %v199
    %217 = vmatprep.subr.bf16.mxu0 0
    %218 = vmatpush1.bf16.msra.mxu0 %v200
    %219 = vmatprep.subr.bf16.mxu0 0
    %220 = vmatpush1.bf16.msra.mxu0 %v201
    %221 = vmatprep.subr.bf16.mxu0 0
    %222 = vmatpush1.bf16.msra.mxu0 %v202
    %223 = vmatprep.subr.bf16.mxu0 0
    %224 = vmatpush1.bf16.msra.mxu0 %v203
    %225 = vmatprep.subr.bf16.mxu0 0
    %226 = vmatpush1.bf16.msra.mxu0 %v204
    %227 = vmatprep.subr.bf16.mxu0 0
    %228 = vmatpush1.bf16.msra.mxu0 %v205
    %229 = vmatprep.subr.bf16.mxu0 0
    %230 = vmatpush1.bf16.msra.mxu0 %v206
    %231 = vmatprep.subr.bf16.mxu0 0
    %232 = vmatpush1.bf16.msra.mxu0 0
    %233 = vmatprep.subr.bf16.mxu0 0
    %234 = vmatpush1.bf16.msra.mxu0 0
    %235 = vmatprep.subr.bf16.mxu0 0
    %236 = vmatpush1.bf16.msra.mxu0 0
    %237 = vmatprep.subr.bf16.mxu0 0
    %238 = vmatpush1.bf16.msra.mxu0 0
    %239 = vmatprep.subr.bf16.mxu0 0
    %240 = vmatpush1.bf16.msra.mxu0 0
    %241 = vmatprep.subr.bf16.mxu0 0
    %242 = vmatpush1.bf16.msra.mxu0 0
    %243 = vmatprep.subr.bf16.mxu0 0
    %244 = vmatpush1.bf16.msra.mxu0 0
    %245 = vmatprep.subr.bf16.mxu0 0
    %246 = vmatpush1.bf16.msra.mxu0 0
    %247 = vmatprep.mubr.bf16.mxu0 0
    %248 = vmatmul.mubr.bf16.gmra.mrb[0].mxu0 %v127
    %v249 = vpop.f32.mrb[0].mxu0
    %v250 = vadd.f32 0.0, %v249
    %v251 = vpop.f32.mrb[0].mxu0
    %v252 = vpop.f32.mrb[0].mxu0
    %v253 = vadd.f32 0.0, %v252
    %v254 = vpop.f32.mrb[0].mxu0
    %255 = vmatprep.mubr.bf16.mxu0 0
    %256 = vmatmul.mubr.bf16.gmra.mrb[0].mxu0 %v129
    %v257 = vpop.f32.mrb[0].mxu0
    %v258 = vadd.f32 0.0, %v257
    %v259 = vpop.f32.mrb[0].mxu0
    %v260 = vpop.f32.mrb[0].mxu0
    %v261 = vadd.f32 0.0, %v260
    %v262 = vpop.f32.mrb[0].mxu0
    %263 = vmatprep.mubr.bf16.mxu0 0
    %264 = vmatmul.mubr.bf16.gmra.mrb[0].mxu0 %v131
    %v265 = vpop.f32.mrb[0].mxu0
    %v266 = vadd.f32 0.0, %v265
    %v267 = vpop.f32.mrb[0].mxu0
    %v268 = vpop.f32.mrb[0].mxu0
    %v269 = vadd.f32 0.0, %v268
    %v270 = vpop.f32.mrb[0].mxu0
    %271 = vmatprep.mubr.bf16.mxu0 0
    %272 = vmatmul.mubr.bf16.gmra.mrb[0].mxu0 %v133
    %v273 = vpop.f32.mrb[0].mxu0
    %v274 = vadd.f32 0.0, %v273
    %v275 = vpop.f32.mrb[0].mxu0
    %v276 = vpop.f32.mrb[0].mxu0
    %v277 = vadd.f32 0.0, %v276
    %v278 = vpop.f32.mrb[0].mxu0
    %279 = vmatprep.mubr.bf16.mxu0 0
    %280 = vmatmul.mubr.bf16.gmra.mrb[0].mxu0 %v135
    %v281 = vpop.f32.mrb[0].mxu0
    %v282 = vadd.f32 0.0, %v281
    %v283 = vpop.f32.mrb[0].mxu0
    %v284 = vpop.f32.mrb[0].mxu0
    %v285 = vadd.f32 0.0, %v284
    %v286 = vpop.f32.mrb[0].mxu0
    %287 = vmatprep.mubr.bf16.mxu0 0
    %288 = vmatmul.mubr.bf16.gmra.mrb[0].mxu0 %v137
    %v289 = vpop.f32.mrb[0].mxu0
    %v290 = vadd.f32 0.0, %v289
    %v291 = vpop.f32.mrb[0].mxu0
    %v292 = vpop.f32.mrb[0].mxu0
    %v293 = vadd.f32 0.0, %v292
    %v294 = vpop.f32.mrb[0].mxu0
    %295 = vmatprep.mubr.bf16.mxu0 0
    %296 = vmatmul.mubr.bf16.gmra.mrb[0].mxu0 %v139
    %v297 = vpop.f32.mrb[0].mxu0
    %v298 = vadd.f32 0.0, %v297
    %v299 = vpop.f32.mrb[0].mxu0
    %v300 = vpop.f32.mrb[0].mxu0
    %v301 = vadd.f32 0.0, %v300
    %v302 = vpop.f32.mrb[0].mxu0
    %303 = vmatprep.mubr.bf16.mxu0 0
    %304 = vmatmul.mubr.bf16.gmra.mrb[0].mxu0 %v141
    %v305 = vpop.f32.mrb[0].mxu0
    %v306 = vadd.f32 0.0, %v305
    %v307 = vpop.f32.mrb[0].mxu0
    %v308 = vpop.f32.mrb[0].mxu0
    %v309 = vadd.f32 0.0, %v308
    %v310 = vpop.f32.mrb[0].mxu0
    %311 = vdwg.mxu0
    %vm312 = vcmask 1043456
    %v313 = vrot.slane 0, 4
    %v314 = vrot.slane %v91, 4
    %v315 = vsel %vm312, %v313, %v314
    %v316 = vrot.slane %v92, 4
    %v317 = vsel %vm312, %v314, %v316
    %v318 = vrot.slane %v93, 4
    %v319 = vsel %vm312, %v316, %v318
    %v320 = vrot.slane %v94, 4
    %v321 = vsel %vm312, %v318, %v320
    %v322 = vrot.slane %v95, 4
    %v323 = vsel %vm312, %v313, %v322
    %v324 = vrot.slane %v96, 4
    %v325 = vsel %vm312, %v322, %v324
    %v326 = vrot.slane %v97, 4
    %v327 = vsel %vm312, %v324, %v326
    %v328 = vrot.slane %v98, 4
    %v329 = vsel %vm312, %v326, %v328
    %s338 = scalar_lea.vmem [#allocation5], 128
    %v339 = vld [vmem:[%s338] sm:$0xf]
    %v340 = vld [vmem:[%s338 + $0x4] sm:$0xf]
    %v341 = vld [vmem:[%s338 + $0x8] sm:$0xf]
    %v342 = vld [vmem:[%s338 + $0xc] sm:$0xf]
    %v343 = vld [vmem:[%s338 + $0x10] sm:$0xf]
    %v344 = vld [vmem:[%s338 + $0x14] sm:$0xf]
    %v345 = vld [vmem:[%s338 + $0x18] sm:$0xf]
    %v346 = vld [vmem:[%s338 + $0x1c] sm:$0xf]
    %v347 = vld [vmem:[%s338 + $0x20] sm:$0xf]
    %v348 = vld [vmem:[%s338 + $0x24] sm:$0xf]
    %v349 = vld [vmem:[%s338 + $0x28] sm:$0xf]
    %v350 = vld [vmem:[%s338 + $0x2c] sm:$0xf]
    %v351 = vld [vmem:[%s338 + $0x30] sm:$0xf]
    %v352 = vld [vmem:[%s338 + $0x34] sm:$0xf]
    %v353 = vld [vmem:[%s338 + $0x38] sm:$0xf]
    %v354 = vld [vmem:[%s338 + $0x3c] sm:$0xf]
    %vm355 = vcmask 1041408
    %v356 = vrot.slane 0, 6
    %v357 = vrot.slane %v91, 6
    %v358 = vsel %vm355, %v356, %v357
    %v359 = vrot.slane %v92, 6
    %v360 = vsel %vm355, %v357, %v359
    %v361 = vrot.slane %v93, 6
    %v362 = vsel %vm355, %v359, %v361
    %v363 = vrot.slane %v94, 6
    %v364 = vsel %vm355, %v361, %v363
    %v365 = vrot.slane %v95, 6
    %v366 = vsel %vm355, %v356, %v365
    %v367 = vrot.slane %v96, 6
    %v368 = vsel %vm355, %v365, %v367
    %v369 = vrot.slane %v97, 6
    %v370 = vsel %vm355, %v367, %v369
    %v371 = vrot.slane %v98, 6
    %v372 = vsel %vm355, %v369, %v371
    %s381 = scalar_lea.vmem [#allocation5], 192
    %v382 = vld [vmem:[%s381] sm:$0xf]
    %v383 = vld [vmem:[%s381 + $0x4] sm:$0xf]
    %v384 = vld [vmem:[%s381 + $0x8] sm:$0xf]
    %v385 = vld [vmem:[%s381 + $0xc] sm:$0xf]
    %v386 = vld [vmem:[%s381 + $0x10] sm:$0xf]
    %v387 = vld [vmem:[%s381 + $0x14] sm:$0xf]
    %v388 = vld [vmem:[%s381 + $0x18] sm:$0xf]
    %v389 = vld [vmem:[%s381 + $0x1c] sm:$0xf]
    %v390 = vld [vmem:[%s381 + $0x20] sm:$0xf]
    %v391 = vld [vmem:[%s381 + $0x24] sm:$0xf]
    %v392 = vld [vmem:[%s381 + $0x28] sm:$0xf]
    %v393 = vld [vmem:[%s381 + $0x2c] sm:$0xf]
    %v394 = vld [vmem:[%s381 + $0x30] sm:$0xf]
    %v395 = vld [vmem:[%s381 + $0x34] sm:$0xf]
    %v396 = vld [vmem:[%s381 + $0x38] sm:$0xf]
    %v397 = vld [vmem:[%s381 + $0x3c] sm:$0xf]
    %v414 = vunpack.c.l.b16 %v382
    %v415 = vunpack.c.l.b16 %v383
    %v416 = vunpack.c.l.b16 %v384
    %v417 = vunpack.c.l.b16 %v385
    %v418 = vunpack.c.l.b16 %v386
    %v419 = vunpack.c.l.b16 %v387
    %v420 = vunpack.c.l.b16 %v388
    %v421 = vunpack.c.l.b16 %v389
    %v422 = vunpack.c.l.b16 %v390
    %v423 = vunpack.c.l.b16 %v391
    %v424 = vunpack.c.l.b16 %v392
    %v425 = vunpack.c.l.b16 %v393
    %v426 = vunpack.c.l.b16 %v394
    %v427 = vunpack.c.l.b16 %v395
    %v428 = vunpack.c.l.b16 %v396
    %v429 = vunpack.c.l.b16 %v397
    %v430 = vpack.c.b16 %v415, %v414
    %v431 = vpack.c.b16 %v417, %v416
    %v432 = vpack.c.b16 %v419, %v418
    %v433 = vpack.c.b16 %v421, %v420
    %v434 = vpack.c.b16 %v423, %v422
    %v435 = vpack.c.b16 %v425, %v424
    %v436 = vpack.c.b16 %v427, %v426
    %v437 = vpack.c.b16 %v429, %v428
    %446 = vmatprep.subr.bf16.mxu0 0
    %447 = vmatpush1.bf16.msra.mxu0 %v430
    %448 = vmatprep.subr.bf16.mxu0 0
    %449 = vmatpush1.bf16.msra.mxu0 %v431
    %450 = vmatprep.subr.bf16.mxu0 0
    %451 = vmatpush1.bf16.msra.mxu0 %v432
    %452 = vmatprep.subr.bf16.mxu0 0
    %453 = vmatpush1.bf16.msra.mxu0 %v433
    %454 = vmatprep.subr.bf16.mxu0 0
    %455 = vmatpush1.bf16.msra.mxu0 %v434
    %456 = vmatprep.subr.bf16.mxu0 0
    %457 = vmatpush1.bf16.msra.mxu0 %v435
    %458 = vmatprep.subr.bf16.mxu0 0
    %459 = vmatpush1.bf16.msra.mxu0 %v436
    %460 = vmatprep.subr.bf16.mxu0 0
    %461 = vmatpush1.bf16.msra.mxu0 %v437
    %462 = vmatprep.subr.bf16.mxu0 0
    %463 = vmatpush1.bf16.msra.mxu0 0
    %464 = vmatprep.subr.bf16.mxu0 0
    %465 = vmatpush1.bf16.msra.mxu0 0
    %466 = vmatprep.subr.bf16.mxu0 0
    %467 = vmatpush1.bf16.msra.mxu0 0
    %468 = vmatprep.subr.bf16.mxu0 0
    %469 = vmatpush1.bf16.msra.mxu0 0
    %470 = vmatprep.subr.bf16.mxu0 0
    %471 = vmatpush1.bf16.msra.mxu0 0
    %472 = vmatprep.subr.bf16.mxu0 0
    %473 = vmatpush1.bf16.msra.mxu0 0
    %474 = vmatprep.subr.bf16.mxu0 0
    %475 = vmatpush1.bf16.msra.mxu0 0
    %476 = vmatprep.subr.bf16.mxu0 0
    %477 = vmatpush1.bf16.msra.mxu0 0
    %478 = vmatprep.mubr.bf16.mxu0 0
    %479 = vmatmul.mubr.bf16.gmra.mrb[0].mxu0 %v358
    %v480 = vpop.f32.mrb[0].mxu0
    %v481 = vadd.f32 0.0, %v480
    %v482 = vpop.f32.mrb[0].mxu0
    %v483 = vpop.f32.mrb[0].mxu0
    %v484 = vadd.f32 0.0, %v483
    %v485 = vpop.f32.mrb[0].mxu0
    %486 = vmatprep.mubr.bf16.mxu0 0
    %487 = vmatmul.mubr.bf16.gmra.mrb[0].mxu0 %v360
    %v488 = vpop.f32.mrb[0].mxu0
    %v489 = vadd.f32 0.0, %v488
    %v490 = vpop.f32.mrb[0].mxu0
    %v491 = vpop.f32.mrb[0].mxu0
    %v492 = vadd.f32 0.0, %v491
    %v493 = vpop.f32.mrb[0].mxu0
    %494 = vmatprep.mubr.bf16.mxu0 0
    %495 = vmatmul.mubr.bf16.gmra.mrb[0].mxu0 %v362
    %v496 = vpop.f32.mrb[0].mxu0
    %v497 = vadd.f32 0.0, %v496
    %v498 = vpop.f32.mrb[0].mxu0
    %v499 = vpop.f32.mrb[0].mxu0
    %v500 = vadd.f32 0.0, %v499
    %v501 = vpop.f32.mrb[0].mxu0
    %502 = vmatprep.mubr.bf16.mxu0 0
    %503 = vmatmul.mubr.bf16.gmra.mrb[0].mxu0 %v364
    %v504 = vpop.f32.mrb[0].mxu0
    %v505 = vadd.f32 0.0, %v504
    %v506 = vpop.f32.mrb[0].mxu0
    %v507 = vpop.f32.mrb[0].mxu0
    %v508 = vadd.f32 0.0, %v507
    %v509 = vpop.f32.mrb[0].mxu0
    %510 = vmatprep.mubr.bf16.mxu0 0
    %511 = vmatmul.mubr.bf16.gmra.mrb[0].mxu0 %v366
    %v512 = vpop.f32.mrb[0].mxu0
    %v513 = vadd.f32 0.0, %v512
    %v514 = vpop.f32.mrb[0].mxu0
    %v515 = vpop.f32.mrb[0].mxu0
    %v516 = vadd.f32 0.0, %v515
    %v517 = vpop.f32.mrb[0].mxu0
    %518 = vmatprep.mubr.bf16.mxu0 0
    %519 = vmatmul.mubr.bf16.gmra.mrb[0].mxu0 %v368
    %v520 = vpop.f32.mrb[0].mxu0
    %v521 = vadd.f32 0.0, %v520
    %v522 = vpop.f32.mrb[0].mxu0
    %v523 = vpop.f32.mrb[0].mxu0
    %v524 = vadd.f32 0.0, %v523
    %v525 = vpop.f32.mrb[0].mxu0
    %526 = vmatprep.mubr.bf16.mxu0 0
    %527 = vmatmul.mubr.bf16.gmra.mrb[0].mxu0 %v370
    %v528 = vpop.f32.mrb[0].mxu0
    %v529 = vadd.f32 0.0, %v528
    %v530 = vpop.f32.mrb[0].mxu0
    %v531 = vpop.f32.mrb[0].mxu0
    %v532 = vadd.f32 0.0, %v531
    %v533 = vpop.f32.mrb[0].mxu0
    %534 = vmatprep.mubr.bf16.mxu0 0
    %535 = vmatmul.mubr.bf16.gmra.mrb[0].mxu0 %v372
    %v536 = vpop.f32.mrb[0].mxu0
    %v537 = vadd.f32 0.0, %v536
    %v538 = vpop.f32.mrb[0].mxu0
    %v539 = vpop.f32.mrb[0].mxu0
    %v540 = vadd.f32 0.0, %v539
    %v541 = vpop.f32.mrb[0].mxu0
    %542 = vdwg.mxu0
    %s543 = scalar_lea.vmem [#allocation5], 256
    %v544 = vld [vmem:[%s543] sm:$0xf]
    %v545 = vld [vmem:[%s543 + $0x4] sm:$0xf]
    %v546 = vld [vmem:[%s543 + $0x8] sm:$0xf]
    %v547 = vld [vmem:[%s543 + $0xc] sm:$0xf]
    %v548 = vld [vmem:[%s543 + $0x10] sm:$0xf]
    %v549 = vld [vmem:[%s543 + $0x14] sm:$0xf]
    %v550 = vld [vmem:[%s543 + $0x18] sm:$0xf]
    %v551 = vld [vmem:[%s543 + $0x1c] sm:$0xf]
    %v552 = vld [vmem:[%s543 + $0x20] sm:$0xf]
    %v553 = vld [vmem:[%s543 + $0x24] sm:$0xf]
    %v554 = vld [vmem:[%s543 + $0x28] sm:$0xf]
    %v555 = vld [vmem:[%s543 + $0x2c] sm:$0xf]
    %v556 = vld [vmem:[%s543 + $0x30] sm:$0xf]
    %v557 = vld [vmem:[%s543 + $0x34] sm:$0xf]
    %v558 = vld [vmem:[%s543 + $0x38] sm:$0xf]
    %v559 = vld [vmem:[%s543 + $0x3c] sm:$0xf]
    %v560 = vsel %vm124, %v132, %v125
    %v561 = vsel %vm124, %v140, %v125
    %s564 = scalar_lea.vmem [#allocation5], 320
    %v565 = vld [vmem:[%s564] sm:$0xf]
    %v566 = vld [vmem:[%s564 + $0x4] sm:$0xf]
    %v567 = vld [vmem:[%s564 + $0x8] sm:$0xf]
    %v568 = vld [vmem:[%s564 + $0xc] sm:$0xf]
    %v569 = vld [vmem:[%s564 + $0x10] sm:$0xf]
    %v570 = vld [vmem:[%s564 + $0x14] sm:$0xf]
    %v571 = vld [vmem:[%s564 + $0x18] sm:$0xf]
    %v572 = vld [vmem:[%s564 + $0x1c] sm:$0xf]
    %v573 = vld [vmem:[%s564 + $0x20] sm:$0xf]
    %v574 = vld [vmem:[%s564 + $0x24] sm:$0xf]
    %v575 = vld [vmem:[%s564 + $0x28] sm:$0xf]
    %v576 = vld [vmem:[%s564 + $0x2c] sm:$0xf]
    %v577 = vld [vmem:[%s564 + $0x30] sm:$0xf]
    %v578 = vld [vmem:[%s564 + $0x34] sm:$0xf]
    %v579 = vld [vmem:[%s564 + $0x38] sm:$0xf]
    %v580 = vld [vmem:[%s564 + $0x3c] sm:$0xf]
    %v597 = vunpack.c.l.b16 %v565
    %v598 = vunpack.c.l.b16 %v566
    %v599 = vunpack.c.l.b16 %v567
    %v600 = vunpack.c.l.b16 %v568
    %v601 = vunpack.c.l.b16 %v569
    %v602 = vunpack.c.l.b16 %v570
    %v603 = vunpack.c.l.b16 %v571
    %v604 = vunpack.c.l.b16 %v572
    %v605 = vunpack.c.l.b16 %v573
    %v606 = vunpack.c.l.b16 %v574
    %v607 = vunpack.c.l.b16 %v575
    %v608 = vunpack.c.l.b16 %v576
    %v609 = vunpack.c.l.b16 %v577
    %v610 = vunpack.c.l.b16 %v578
    %v611 = vunpack.c.l.b16 %v579
    %v612 = vunpack.c.l.b16 %v580
    %v613 = vpack.c.b16 %v598, %v597
    %v614 = vpack.c.b16 %v600, %v599
    %v615 = vpack.c.b16 %v602, %v601
    %v616 = vpack.c.b16 %v604, %v603
    %v617 = vpack.c.b16 %v606, %v605
    %v618 = vpack.c.b16 %v608, %v607
    %v619 = vpack.c.b16 %v610, %v609
    %v620 = vpack.c.b16 %v612, %v611
    %629 = vmatprep.subr.bf16.mxu0 0
    %630 = vmatpush1.bf16.msra.mxu0 %v613
    %631 = vmatprep.subr.bf16.mxu0 0
    %632 = vmatpush1.bf16.msra.mxu0 %v614
    %633 = vmatprep.subr.bf16.mxu0 0
    %634 = vmatpush1.bf16.msra.mxu0 %v615
    %635 = vmatprep.subr.bf16.mxu0 0
    %636 = vmatpush1.bf16.msra.mxu0 %v616
    %637 = vmatprep.subr.bf16.mxu0 0
    %638 = vmatpush1.bf16.msra.mxu0 %v617
    %639 = vmatprep.subr.bf16.mxu0 0
    %640 = vmatpush1.bf16.msra.mxu0 %v618
    %641 = vmatprep.subr.bf16.mxu0 0
    %642 = vmatpush1.bf16.msra.mxu0 %v619
    %643 = vmatprep.subr.bf16.mxu0 0
    %644 = vmatpush1.bf16.msra.mxu0 %v620
    %645 = vmatprep.subr.bf16.mxu0 0
    %646 = vmatpush1.bf16.msra.mxu0 0
    %647 = vmatprep.subr.bf16.mxu0 0
    %648 = vmatpush1.bf16.msra.mxu0 0
    %649 = vmatprep.subr.bf16.mxu0 0
    %650 = vmatpush1.bf16.msra.mxu0 0
    %651 = vmatprep.subr.bf16.mxu0 0
    %652 = vmatpush1.bf16.msra.mxu0 0
    %653 = vmatprep.subr.bf16.mxu0 0
    %654 = vmatpush1.bf16.msra.mxu0 0
    %655 = vmatprep.subr.bf16.mxu0 0
    %656 = vmatpush1.bf16.msra.mxu0 0
    %657 = vmatprep.subr.bf16.mxu0 0
    %658 = vmatpush1.bf16.msra.mxu0 0
    %659 = vmatprep.subr.bf16.mxu0 0
    %660 = vmatpush1.bf16.msra.mxu0 0
    %661 = vmatprep.mubr.bf16.mxu0 0
    %662 = vmatmul.mubr.bf16.gmra.mrb[0].mxu0 %v129
    %v663 = vpop.f32.mrb[0].mxu0
    %v664 = vadd.f32 0.0, %v663
    %v665 = vpop.f32.mrb[0].mxu0
    %v666 = vpop.f32.mrb[0].mxu0
    %v667 = vadd.f32 0.0, %v666
    %v668 = vpop.f32.mrb[0].mxu0
    %669 = vmatprep.mubr.bf16.mxu0 0
    %670 = vmatmul.mubr.bf16.gmra.mrb[0].mxu0 %v131
    %v671 = vpop.f32.mrb[0].mxu0
    %v672 = vadd.f32 0.0, %v671
    %v673 = vpop.f32.mrb[0].mxu0
    %v674 = vpop.f32.mrb[0].mxu0
    %v675 = vadd.f32 0.0, %v674
    %v676 = vpop.f32.mrb[0].mxu0
    %677 = vmatprep.mubr.bf16.mxu0 0
    %678 = vmatmul.mubr.bf16.gmra.mrb[0].mxu0 %v133
    %v679 = vpop.f32.mrb[0].mxu0
    %v680 = vadd.f32 0.0, %v679
    %v681 = vpop.f32.mrb[0].mxu0
    %v682 = vpop.f32.mrb[0].mxu0
    %v683 = vadd.f32 0.0, %v682
    %v684 = vpop.f32.mrb[0].mxu0
    %685 = vmatprep.mubr.bf16.mxu0 0
    %686 = vmatmul.mubr.bf16.gmra.mrb[0].mxu0 %v560
    %v687 = vpop.f32.mrb[0].mxu0
    %v688 = vadd.f32 0.0, %v687
    %v689 = vpop.f32.mrb[0].mxu0
    %v690 = vpop.f32.mrb[0].mxu0
    %v691 = vadd.f32 0.0, %v690
    %v692 = vpop.f32.mrb[0].mxu0
    %693 = vmatprep.mubr.bf16.mxu0 0
    %694 = vmatmul.mubr.bf16.gmra.mrb[0].mxu0 %v137
    %v695 = vpop.f32.mrb[0].mxu0
    %v696 = vadd.f32 0.0, %v695
    %v697 = vpop.f32.mrb[0].mxu0
    %v698 = vpop.f32.mrb[0].mxu0
    %v699 = vadd.f32 0.0, %v698
    %v700 = vpop.f32.mrb[0].mxu0
    %701 = vmatprep.mubr.bf16.mxu0 0
    %702 = vmatmul.mubr.bf16.gmra.mrb[0].mxu0 %v139
    %v703 = vpop.f32.mrb[0].mxu0
    %v704 = vadd.f32 0.0, %v703
    %v705 = vpop.f32.mrb[0].mxu0
    %v706 = vpop.f32.mrb[0].mxu0
    %v707 = vadd.f32 0.0, %v706
    %v708 = vpop.f32.mrb[0].mxu0
    %709 = vmatprep.mubr.bf16.mxu0 0
    %710 = vmatmul.mubr.bf16.gmra.mrb[0].mxu0 %v141
    %v711 = vpop.f32.mrb[0].mxu0
    %v712 = vadd.f32 0.0, %v711
    %v713 = vpop.f32.mrb[0].mxu0
    %v714 = vpop.f32.mrb[0].mxu0
    %v715 = vadd.f32 0.0, %v714
    %v716 = vpop.f32.mrb[0].mxu0
    %717 = vmatprep.mubr.bf16.mxu0 0
    %718 = vmatmul.mubr.bf16.gmra.mrb[0].mxu0 %v561
    %v719 = vpop.f32.mrb[0].mxu0
    %v720 = vadd.f32 0.0, %v719
    %v721 = vpop.f32.mrb[0].mxu0
    %v722 = vpop.f32.mrb[0].mxu0
    %v723 = vadd.f32 0.0, %v722
    %v724 = vpop.f32.mrb[0].mxu0
    %725 = vdwg.mxu0
    %v726 = vsel %vm312, %v320, %v313
    %v727 = vsel %vm312, %v328, %v313
    %s730 = scalar_lea.vmem [#allocation5], 384
    %v731 = vld [vmem:[%s730] sm:$0xf]
    %v732 = vld [vmem:[%s730 + $0x4] sm:$0xf]
    %v733 = vld [vmem:[%s730 + $0x8] sm:$0xf]
    %v734 = vld [vmem:[%s730 + $0xc] sm:$0xf]
    %v735 = vld [vmem:[%s730 + $0x10] sm:$0xf]
    %v736 = vld [vmem:[%s730 + $0x14] sm:$0xf]
    %v737 = vld [vmem:[%s730 + $0x18] sm:$0xf]
    %v738 = vld [vmem:[%s730 + $0x1c] sm:$0xf]
    %v739 = vld [vmem:[%s730 + $0x20] sm:$0xf]
    %v740 = vld [vmem:[%s730 + $0x24] sm:$0xf]
    %v741 = vld [vmem:[%s730 + $0x28] sm:$0xf]
    %v742 = vld [vmem:[%s730 + $0x2c] sm:$0xf]
    %v743 = vld [vmem:[%s730 + $0x30] sm:$0xf]
    %v744 = vld [vmem:[%s730 + $0x34] sm:$0xf]
    %v745 = vld [vmem:[%s730 + $0x38] sm:$0xf]
    %v746 = vld [vmem:[%s730 + $0x3c] sm:$0xf]
    %v747 = vsel %vm355, %v363, %v356
    %v748 = vsel %vm355, %v371, %v356
    %s751 = scalar_lea.vmem [#allocation5], 448
    %v752 = vld [vmem:[%s751] sm:$0xf]
    %v753 = vld [vmem:[%s751 + $0x4] sm:$0xf]
    %v754 = vld [vmem:[%s751 + $0x8] sm:$0xf]
    %v755 = vld [vmem:[%s751 + $0xc] sm:$0xf]
    %v756 = vld [vmem:[%s751 + $0x10] sm:$0xf]
    %v757 = vld [vmem:[%s751 + $0x14] sm:$0xf]
    %v758 = vld [vmem:[%s751 + $0x18] sm:$0xf]
    %v759 = vld [vmem:[%s751 + $0x1c] sm:$0xf]
    %v760 = vld [vmem:[%s751 + $0x20] sm:$0xf]
    %v761 = vld [vmem:[%s751 + $0x24] sm:$0xf]
    %v762 = vld [vmem:[%s751 + $0x28] sm:$0xf]
    %v763 = vld [vmem:[%s751 + $0x2c] sm:$0xf]
    %v764 = vld [vmem:[%s751 + $0x30] sm:$0xf]
    %v765 = vld [vmem:[%s751 + $0x34] sm:$0xf]
    %v766 = vld [vmem:[%s751 + $0x38] sm:$0xf]
    %v767 = vld [vmem:[%s751 + $0x3c] sm:$0xf]
    %v784 = vunpack.c.l.b16 %v752
    %v785 = vunpack.c.l.b16 %v753
    %v786 = vunpack.c.l.b16 %v754
    %v787 = vunpack.c.l.b16 %v755
    %v788 = vunpack.c.l.b16 %v756
    %v789 = vunpack.c.l.b16 %v757
    %v790 = vunpack.c.l.b16 %v758
    %v791 = vunpack.c.l.b16 %v759
    %v792 = vunpack.c.l.b16 %v760
    %v793 = vunpack.c.l.b16 %v761
    %v794 = vunpack.c.l.b16 %v762
    %v795 = vunpack.c.l.b16 %v763
    %v796 = vunpack.c.l.b16 %v764
    %v797 = vunpack.c.l.b16 %v765
    %v798 = vunpack.c.l.b16 %v766
    %v799 = vunpack.c.l.b16 %v767
    %v800 = vpack.c.b16 %v785, %v784
    %v801 = vpack.c.b16 %v787, %v786
    %v802 = vpack.c.b16 %v789, %v788
    %v803 = vpack.c.b16 %v791, %v790
    %v804 = vpack.c.b16 %v793, %v792
    %v805 = vpack.c.b16 %v795, %v794
    %v806 = vpack.c.b16 %v797, %v796
    %v807 = vpack.c.b16 %v799, %v798
    %816 = vmatprep.subr.bf16.mxu0 0
    %817 = vmatpush1.bf16.msra.mxu0 %v800
    %818 = vmatprep.subr.bf16.mxu0 0
    %819 = vmatpush1.bf16.msra.mxu0 %v801
    %820 = vmatprep.subr.bf16.mxu0 0
    %821 = vmatpush1.bf16.msra.mxu0 %v802
    %822 = vmatprep.subr.bf16.mxu0 0
    %823 = vmatpush1.bf16.msra.mxu0 %v803
    %824 = vmatprep.subr.bf16.mxu0 0
    %825 = vmatpush1.bf16.msra.mxu0 %v804
    %826 = vmatprep.subr.bf16.mxu0 0
    %827 = vmatpush1.bf16.msra.mxu0 %v805
    %828 = vmatprep.subr.bf16.mxu0 0
    %829 = vmatpush1.bf16.msra.mxu0 %v806
    %830 = vmatprep.subr.bf16.mxu0 0
    %831 = vmatpush1.bf16.msra.mxu0 %v807
    %832 = vmatprep.subr.bf16.mxu0 0
    %833 = vmatpush1.bf16.msra.mxu0 0
    %834 = vmatprep.subr.bf16.mxu0 0
    %835 = vmatpush1.bf16.msra.mxu0 0
    %836 = vmatprep.subr.bf16.mxu0 0
    %837 = vmatpush1.bf16.msra.mxu0 0
    %838 = vmatprep.subr.bf16.mxu0 0
    %839 = vmatpush1.bf16.msra.mxu0 0
    %840 = vmatprep.subr.bf16.mxu0 0
    %841 = vmatpush1.bf16.msra.mxu0 0
    %842 = vmatprep.subr.bf16.mxu0 0
    %843 = vmatpush1.bf16.msra.mxu0 0
    %844 = vmatprep.subr.bf16.mxu0 0
    %845 = vmatpush1.bf16.msra.mxu0 0
    %846 = vmatprep.subr.bf16.mxu0 0
    %847 = vmatpush1.bf16.msra.mxu0 0
    %848 = vmatprep.mubr.bf16.mxu0 0
    %849 = vmatmul.mubr.bf16.gmra.mrb[0].mxu0 %v360
    %v850 = vpop.f32.mrb[0].mxu0
    %v851 = vadd.f32 0.0, %v850
    %v852 = vpop.f32.mrb[0].mxu0
    %v853 = vpop.f32.mrb[0].mxu0
    %v854 = vadd.f32 0.0, %v853
    %v855 = vpop.f32.mrb[0].mxu0
    %856 = vmatprep.mubr.bf16.mxu0 0
    %857 = vmatmul.mubr.bf16.gmra.mrb[0].mxu0 %v362
    %v858 = vpop.f32.mrb[0].mxu0
    %v859 = vadd.f32 0.0, %v858
    %v860 = vpop.f32.mrb[0].mxu0
    %v861 = vpop.f32.mrb[0].mxu0
    %v862 = vadd.f32 0.0, %v861
    %v863 = vpop.f32.mrb[0].mxu0
    %864 = vmatprep.mubr.bf16.mxu0 0
    %865 = vmatmul.mubr.bf16.gmra.mrb[0].mxu0 %v364
    %v866 = vpop.f32.mrb[0].mxu0
    %v867 = vadd.f32 0.0, %v866
    %v868 = vpop.f32.mrb[0].mxu0
    %v869 = vpop.f32.mrb[0].mxu0
    %v870 = vadd.f32 0.0, %v869
    %v871 = vpop.f32.mrb[0].mxu0
    %872 = vmatprep.mubr.bf16.mxu0 0
    %873 = vmatmul.mubr.bf16.gmra.mrb[0].mxu0 %v747
    %v874 = vpop.f32.mrb[0].mxu0
    %v875 = vadd.f32 0.0, %v874
    %v876 = vpop.f32.mrb[0].mxu0
    %v877 = vpop.f32.mrb[0].mxu0
    %v878 = vadd.f32 0.0, %v877
    %v879 = vpop.f32.mrb[0].mxu0
    %880 = vmatprep.mubr.bf16.mxu0 0
    %881 = vmatmul.mubr.bf16.gmra.mrb[0].mxu0 %v368
    %v882 = vpop.f32.mrb[0].mxu0
    %v883 = vadd.f32 0.0, %v882
    %v884 = vpop.f32.mrb[0].mxu0
    %v885 = vpop.f32.mrb[0].mxu0
    %v886 = vadd.f32 0.0, %v885
    %v887 = vpop.f32.mrb[0].mxu0
    %888 = vmatprep.mubr.bf16.mxu0 0
    %889 = vmatmul.mubr.bf16.gmra.mrb[0].mxu0 %v370
    %v890 = vpop.f32.mrb[0].mxu0
    %v891 = vadd.f32 0.0, %v890
    %v892 = vpop.f32.mrb[0].mxu0
    %v893 = vpop.f32.mrb[0].mxu0
    %v894 = vadd.f32 0.0, %v893
    %v895 = vpop.f32.mrb[0].mxu0
    %896 = vmatprep.mubr.bf16.mxu0 0
    %897 = vmatmul.mubr.bf16.gmra.mrb[0].mxu0 %v372
    %v898 = vpop.f32.mrb[0].mxu0
    %v899 = vadd.f32 0.0, %v898
    %v900 = vpop.f32.mrb[0].mxu0
    %v901 = vpop.f32.mrb[0].mxu0
    %v902 = vadd.f32 0.0, %v901
    %v903 = vpop.f32.mrb[0].mxu0
    %904 = vmatprep.mubr.bf16.mxu0 0
    %905 = vmatmul.mubr.bf16.gmra.mrb[0].mxu0 %v748
    %v906 = vpop.f32.mrb[0].mxu0
    %v907 = vadd.f32 0.0, %v906
    %v908 = vpop.f32.mrb[0].mxu0
    %v909 = vpop.f32.mrb[0].mxu0
    %v910 = vadd.f32 0.0, %v909
    %v911 = vpop.f32.mrb[0].mxu0
    %912 = vdwg.mxu0
    %s913 = scalar_lea.vmem [#allocation5], 512
    %v914 = vld [vmem:[%s913] sm:$0xf]
    %v915 = vld [vmem:[%s913 + $0x4] sm:$0xf]
    %v916 = vld [vmem:[%s913 + $0x8] sm:$0xf]
    %v917 = vld [vmem:[%s913 + $0xc] sm:$0xf]
    %v918 = vld [vmem:[%s913 + $0x10] sm:$0xf]
    %v919 = vld [vmem:[%s913 + $0x14] sm:$0xf]
    %v920 = vld [vmem:[%s913 + $0x18] sm:$0xf]
    %v921 = vld [vmem:[%s913 + $0x1c] sm:$0xf]
    %v922 = vld [vmem:[%s913 + $0x20] sm:$0xf]
    %v923 = vld [vmem:[%s913 + $0x24] sm:$0xf]
    %v924 = vld [vmem:[%s913 + $0x28] sm:$0xf]
    %v925 = vld [vmem:[%s913 + $0x2c] sm:$0xf]
    %v926 = vld [vmem:[%s913 + $0x30] sm:$0xf]
    %v927 = vld [vmem:[%s913 + $0x34] sm:$0xf]
    %v928 = vld [vmem:[%s913 + $0x38] sm:$0xf]
    %v929 = vld [vmem:[%s913 + $0x3c] sm:$0xf]
    %v946 = vunpack.c.l.b16 %v914
    %v947 = vunpack.c.l.b16 %v915
    %v948 = vunpack.c.l.b16 %v916
    %v949 = vunpack.c.l.b16 %v917
    %v950 = vunpack.c.l.b16 %v918
    %v951 = vunpack.c.l.b16 %v919
    %v952 = vunpack.c.l.b16 %v920
    %v953 = vunpack.c.l.b16 %v921
    %v954 = vunpack.c.l.b16 %v922
    %v955 = vunpack.c.l.b16 %v923
    %v956 = vunpack.c.l.b16 %v924
    %v957 = vunpack.c.l.b16 %v925
    %v958 = vunpack.c.l.b16 %v926
    %v959 = vunpack.c.l.b16 %v927
    %v960 = vunpack.c.l.b16 %v928
    %v961 = vunpack.c.l.b16 %v929
    %v962 = vpack.c.b16 %v947, %v946
    %v963 = vpack.c.b16 %v949, %v948
    %v964 = vpack.c.b16 %v951, %v950
    %v965 = vpack.c.b16 %v953, %v952
    %v966 = vpack.c.b16 %v955, %v954
    %v967 = vpack.c.b16 %v957, %v956
    %v968 = vpack.c.b16 %v959, %v958
    %v969 = vpack.c.b16 %v961, %v960
    %978 = vmatprep.subr.bf16.mxu0 0
    %979 = vmatpush1.bf16.msra.mxu0 %v962
    %980 = vmatprep.subr.bf16.mxu0 0
    %981 = vmatpush1.bf16.msra.mxu0 %v963
    %982 = vmatprep.subr.bf16.mxu0 0
    %983 = vmatpush1.bf16.msra.mxu0 %v964
    %984 = vmatprep.subr.bf16.mxu0 0
    %985 = vmatpush1.bf16.msra.mxu0 %v965
    %986 = vmatprep.subr.bf16.mxu0 0
    %987 = vmatpush1.bf16.msra.mxu0 %v966
    %988 = vmatprep.subr.bf16.mxu0 0
    %989 = vmatpush1.bf16.msra.mxu0 %v967
    %990 = vmatprep.subr.bf16.mxu0 0
    %991 = vmatpush1.bf16.msra.mxu0 %v968
    %992 = vmatprep.subr.bf16.mxu0 0
    %993 = vmatpush1.bf16.msra.mxu0 %v969
    %994 = vmatprep.subr.bf16.mxu0 0
    %995 = vmatpush1.bf16.msra.mxu0 0
    %996 = vmatprep.subr.bf16.mxu0 0
    %997 = vmatpush1.bf16.msra.mxu0 0
    %998 = vmatprep.subr.bf16.mxu0 0
    %999 = vmatpush1.bf16.msra.mxu0 0
    %1000 = vmatprep.subr.bf16.mxu0 0
    %1001 = vmatpush1.bf16.msra.mxu0 0
    %1002 = vmatprep.subr.bf16.mxu0 0
    %1003 = vmatpush1.bf16.msra.mxu0 0
    %1004 = vmatprep.subr.bf16.mxu0 0
    %1005 = vmatpush1.bf16.msra.mxu0 0
    %1006 = vmatprep.subr.bf16.mxu0 0
    %1007 = vmatpush1.bf16.msra.mxu0 0
    %1008 = vmatprep.subr.bf16.mxu0 0
    %1009 = vmatpush1.bf16.msra.mxu0 0
    %1010 = vmatprep.mubr.bf16.mxu0 0
    %1011 = vmatmul.mubr.bf16.gmra.mrb[0].mxu0 %v92
    %v1012 = vpop.f32.mrb[0].mxu0
    %v1013 = vadd.f32 0.0, %v1012
    %v1014 = vpop.f32.mrb[0].mxu0
    %v1015 = vpop.f32.mrb[0].mxu0
    %v1016 = vadd.f32 0.0, %v1015
    %v1017 = vpop.f32.mrb[0].mxu0
    %1018 = vmatprep.mubr.bf16.mxu0 0
    %1019 = vmatmul.mubr.bf16.gmra.mrb[0].mxu0 %v93
    %v1020 = vpop.f32.mrb[0].mxu0
    %v1021 = vadd.f32 0.0, %v1020
    %v1022 = vpop.f32.mrb[0].mxu0
    %v1023 = vpop.f32.mrb[0].mxu0
    %v1024 = vadd.f32 0.0, %v1023
    %v1025 = vpop.f32.mrb[0].mxu0
    %1026 = vmatprep.mubr.bf16.mxu0 0
    %1027 = vmatmul.mubr.bf16.gmra.mrb[0].mxu0 %v94
    %v1028 = vpop.f32.mrb[0].mxu0
    %v1029 = vadd.f32 0.0, %v1028
    %v1030 = vpop.f32.mrb[0].mxu0
    %v1031 = vpop.f32.mrb[0].mxu0
    %v1032 = vadd.f32 0.0, %v1031
    %v1033 = vpop.f32.mrb[0].mxu0
    %1034 = vmatprep.mubr.bf16.mxu0 0
    %1035 = vmatmul.mubr.bf16.gmra.mrb[0].mxu0 0
    %v1036 = vpop.f32.mrb[0].mxu0
    %v1037 = vadd.f32 0.0, %v1036
    %v1038 = vpop.f32.mrb[0].mxu0
    %v1039 = vpop.f32.mrb[0].mxu0
    %v1040 = vadd.f32 0.0, %v1039
    %v1041 = vpop.f32.mrb[0].mxu0
    %1042 = vmatprep.mubr.bf16.mxu0 0
    %1043 = vmatmul.mubr.bf16.gmra.mrb[0].mxu0 %v96
    %v1044 = vpop.f32.mrb[0].mxu0
    %v1045 = vadd.f32 0.0, %v1044
    %v1046 = vpop.f32.mrb[0].mxu0
    %v1047 = vpop.f32.mrb[0].mxu0
    %v1048 = vadd.f32 0.0, %v1047
    %v1049 = vpop.f32.mrb[0].mxu0
    %1050 = vmatprep.mubr.bf16.mxu0 0
    %1051 = vmatmul.mubr.bf16.gmra.mrb[0].mxu0 %v97
    %v1052 = vpop.f32.mrb[0].mxu0
    %v1053 = vadd.f32 0.0, %v1052
    %v1054 = vpop.f32.mrb[0].mxu0
    %v1055 = vpop.f32.mrb[0].mxu0
    %v1056 = vadd.f32 0.0, %v1055
    %v1057 = vpop.f32.mrb[0].mxu0
    %1058 = vmatprep.mubr.bf16.mxu0 0
    %1059 = vmatmul.mubr.bf16.gmra.mrb[0].mxu0 %v98
    %v1060 = vpop.f32.mrb[0].mxu0
    %v1061 = vadd.f32 0.0, %v1060
    %v1062 = vpop.f32.mrb[0].mxu0
    %v1063 = vpop.f32.mrb[0].mxu0
    %v1064 = vadd.f32 0.0, %v1063
    %v1065 = vpop.f32.mrb[0].mxu0
    %1066 = vmatprep.mubr.bf16.mxu0 0
    %1067 = vmatmul.mubr.bf16.gmra.mrb[0].mxu0 0
    %v1068 = vpop.f32.mrb[0].mxu0
    %v1069 = vadd.f32 0.0, %v1068
    %v1070 = vpop.f32.mrb[0].mxu0
    %v1071 = vpop.f32.mrb[0].mxu0
    %v1072 = vadd.f32 0.0, %v1071
    %v1073 = vpop.f32.mrb[0].mxu0
    %1074 = vdwg.mxu0
    %v1091 = vunpack.c.l.b16 %v99
    %v1092 = vunpack.c.l.b16 %v100
    %v1093 = vunpack.c.l.b16 %v101
    %v1094 = vunpack.c.l.b16 %v102
    %v1095 = vunpack.c.l.b16 %v103
    %v1096 = vunpack.c.l.b16 %v104
    %v1097 = vunpack.c.l.b16 %v105
    %v1098 = vunpack.c.l.b16 %v106
    %v1099 = vunpack.c.l.b16 %v107
    %v1100 = vunpack.c.l.b16 %v108
    %v1101 = vunpack.c.l.b16 %v109
    %v1102 = vunpack.c.l.b16 %v110
    %v1103 = vunpack.c.l.b16 %v111
    %v1104 = vunpack.c.l.b16 %v112
    %v1105 = vunpack.c.l.b16 %v113
    %v1106 = vunpack.c.l.b16 %v114
    %v1107 = vpack.c.b16 %v1092, %v1091
    %v1108 = vpack.c.b16 %v1094, %v1093
    %v1109 = vpack.c.b16 %v1096, %v1095
    %v1110 = vpack.c.b16 %v1098, %v1097
    %v1111 = vpack.c.b16 %v1100, %v1099
    %v1112 = vpack.c.b16 %v1102, %v1101
    %v1113 = vpack.c.b16 %v1104, %v1103
    %v1114 = vpack.c.b16 %v1106, %v1105
    %1123 = vmatprep.subr.bf16.mxu0 0
    %1124 = vmatpush1.bf16.msra.mxu0 %v1107
    %1125 = vmatprep.subr.bf16.mxu0 0
    %1126 = vmatpush1.bf16.msra.mxu0 %v1108
    %1127 = vmatprep.subr.bf16.mxu0 0
    %1128 = vmatpush1.bf16.msra.mxu0 %v1109
    %1129 = vmatprep.subr.bf16.mxu0 0
    %1130 = vmatpush1.bf16.msra.mxu0 %v1110
    %1131 = vmatprep.subr.bf16.mxu0 0
    %1132 = vmatpush1.bf16.msra.mxu0 %v1111
    %1133 = vmatprep.subr.bf16.mxu0 0
    %1134 = vmatpush1.bf16.msra.mxu0 %v1112
    %1135 = vmatprep.subr.bf16.mxu0 0
    %1136 = vmatpush1.bf16.msra.mxu0 %v1113
    %1137 = vmatprep.subr.bf16.mxu0 0
    %1138 = vmatpush1.bf16.msra.mxu0 %v1114
    %1139 = vmatprep.subr.bf16.mxu0 0
    %1140 = vmatpush1.bf16.msra.mxu0 0
    %1141 = vmatprep.subr.bf16.mxu0 0
    %1142 = vmatpush1.bf16.msra.mxu0 0
    %1143 = vmatprep.subr.bf16.mxu0 0
    %1144 = vmatpush1.bf16.msra.mxu0 0
    %1145 = vmatprep.subr.bf16.mxu0 0
    %1146 = vmatpush1.bf16.msra.mxu0 0
    %1147 = vmatprep.subr.bf16.mxu0 0
    %1148 = vmatpush1.bf16.msra.mxu0 0
    %1149 = vmatprep.subr.bf16.mxu0 0
    %1150 = vmatpush1.bf16.msra.mxu0 0
    %1151 = vmatprep.subr.bf16.mxu0 0
    %1152 = vmatpush1.bf16.msra.mxu0 0
    %1153 = vmatprep.subr.bf16.mxu0 0
    %1154 = vmatpush1.bf16.msra.mxu0 0
    %1155 = vmatprep.mubr.bf16.mxu0 0
    %1156 = vmatmul.mubr.bf16.gmra.mrb[0].mxu0 0
    %v1157 = vpop.f32.mrb[0].mxu0
    %v1158 = vadd.f32 %v250, %v1157
    %v1159 = vpop.f32.mrb[0].mxu0
    %v1160 = vpop.f32.mrb[0].mxu0
    %v1161 = vadd.f32 %v253, %v1160
    %v1162 = vpop.f32.mrb[0].mxu0
    %1163 = vmatprep.mubr.bf16.mxu0 0
    %1164 = vmatmul.mubr.bf16.gmra.mrb[0].mxu0 %v91
    %v1165 = vpop.f32.mrb[0].mxu0
    %v1166 = vadd.f32 %v258, %v1165
    %v1167 = vpop.f32.mrb[0].mxu0
    %v1168 = vpop.f32.mrb[0].mxu0
    %v1169 = vadd.f32 %v261, %v1168
    %v1170 = vpop.f32.mrb[0].mxu0
    %1171 = vmatprep.mubr.bf16.mxu0 0
    %1172 = vmatmul.mubr.bf16.gmra.mrb[0].mxu0 %v92
    %v1173 = vpop.f32.mrb[0].mxu0
    %v1174 = vadd.f32 %v266, %v1173
    %v1175 = vpop.f32.mrb[0].mxu0
    %v1176 = vpop.f32.mrb[0].mxu0
    %v1177 = vadd.f32 %v269, %v1176
    %v1178 = vpop.f32.mrb[0].mxu0
    %1179 = vmatprep.mubr.bf16.mxu0 0
    %1180 = vmatmul.mubr.bf16.gmra.mrb[0].mxu0 %v93
    %v1181 = vpop.f32.mrb[0].mxu0
    %v1182 = vadd.f32 %v274, %v1181
    %v1183 = vpop.f32.mrb[0].mxu0
    %v1184 = vpop.f32.mrb[0].mxu0
    %v1185 = vadd.f32 %v277, %v1184
    %v1186 = vpop.f32.mrb[0].mxu0
    %1187 = vmatprep.mubr.bf16.mxu0 0
    %1188 = vmatmul.mubr.bf16.gmra.mrb[0].mxu0 0
    %v1189 = vpop.f32.mrb[0].mxu0
    %v1190 = vadd.f32 %v282, %v1189
    %v1191 = vpop.f32.mrb[0].mxu0
    %v1192 = vpop.f32.mrb[0].mxu0
    %v1193 = vadd.f32 %v285, %v1192
    %v1194 = vpop.f32.mrb[0].mxu0
    %1195 = vmatprep.mubr.bf16.mxu0 0
    %1196 = vmatmul.mubr.bf16.gmra.mrb[0].mxu0 %v95
    %v1197 = vpop.f32.mrb[0].mxu0
    %v1198 = vadd.f32 %v290, %v1197
    %v1199 = vpop.f32.mrb[0].mxu0
    %v1200 = vpop.f32.mrb[0].mxu0
    %v1201 = vadd.f32 %v293, %v1200
    %v1202 = vpop.f32.mrb[0].mxu0
    %1203 = vmatprep.mubr.bf16.mxu0 0
    %1204 = vmatmul.mubr.bf16.gmra.mrb[0].mxu0 %v96
    %v1205 = vpop.f32.mrb[0].mxu0
    %v1206 = vadd.f32 %v298, %v1205
    %v1207 = vpop.f32.mrb[0].mxu0
    %v1208 = vpop.f32.mrb[0].mxu0
    %v1209 = vadd.f32 %v301, %v1208
    %v1210 = vpop.f32.mrb[0].mxu0
    %1211 = vmatprep.mubr.bf16.mxu0 0
    %1212 = vmatmul.mubr.bf16.gmra.mrb[0].mxu0 %v97
    %v1213 = vpop.f32.mrb[0].mxu0
    %v1214 = vadd.f32 %v306, %v1213
    %v1215 = vpop.f32.mrb[0].mxu0
    %v1216 = vpop.f32.mrb[0].mxu0
    %v1217 = vadd.f32 %v309, %v1216
    %v1218 = vpop.f32.mrb[0].mxu0
    %1219 = vdwg.mxu0
    %v1236 = vunpack.c.l.b16 %v339
    %v1237 = vunpack.c.l.b16 %v340
    %v1238 = vunpack.c.l.b16 %v341
    %v1239 = vunpack.c.l.b16 %v342
    %v1240 = vunpack.c.l.b16 %v343
    %v1241 = vunpack.c.l.b16 %v344
    %v1242 = vunpack.c.l.b16 %v345
    %v1243 = vunpack.c.l.b16 %v346
    %v1244 = vunpack.c.l.b16 %v347
    %v1245 = vunpack.c.l.b16 %v348
    %v1246 = vunpack.c.l.b16 %v349
    %v1247 = vunpack.c.l.b16 %v350
    %v1248 = vunpack.c.l.b16 %v351
    %v1249 = vunpack.c.l.b16 %v352
    %v1250 = vunpack.c.l.b16 %v353
    %v1251 = vunpack.c.l.b16 %v354
    %v1252 = vpack.c.b16 %v1237, %v1236
    %v1253 = vpack.c.b16 %v1239, %v1238
    %v1254 = vpack.c.b16 %v1241, %v1240
    %v1255 = vpack.c.b16 %v1243, %v1242
    %v1256 = vpack.c.b16 %v1245, %v1244
    %v1257 = vpack.c.b16 %v1247, %v1246
    %v1258 = vpack.c.b16 %v1249, %v1248
    %v1259 = vpack.c.b16 %v1251, %v1250
    %1268 = vmatprep.subr.bf16.mxu0 0
    %1269 = vmatpush1.bf16.msra.mxu0 %v1252
    %1270 = vmatprep.subr.bf16.mxu0 0
    %1271 = vmatpush1.bf16.msra.mxu0 %v1253
    %1272 = vmatprep.subr.bf16.mxu0 0
    %1273 = vmatpush1.bf16.msra.mxu0 %v1254
    %1274 = vmatprep.subr.bf16.mxu0 0
    %1275 = vmatpush1.bf16.msra.mxu0 %v1255
    %1276 = vmatprep.subr.bf16.mxu0 0
    %1277 = vmatpush1.bf16.msra.mxu0 %v1256
    %1278 = vmatprep.subr.bf16.mxu0 0
    %1279 = vmatpush1.bf16.msra.mxu0 %v1257
    %1280 = vmatprep.subr.bf16.mxu0 0
    %1281 = vmatpush1.bf16.msra.mxu0 %v1258
    %1282 = vmatprep.subr.bf16.mxu0 0
    %1283 = vmatpush1.bf16.msra.mxu0 %v1259
    %1284 = vmatprep.subr.bf16.mxu0 0
    %1285 = vmatpush1.bf16.msra.mxu0 0
    %1286 = vmatprep.subr.bf16.mxu0 0
    %1287 = vmatpush1.bf16.msra.mxu0 0
    %1288 = vmatprep.subr.bf16.mxu0 0
    %1289 = vmatpush1.bf16.msra.mxu0 0
    %1290 = vmatprep.subr.bf16.mxu0 0
    %1291 = vmatpush1.bf16.msra.mxu0 0
    %1292 = vmatprep.subr.bf16.mxu0 0
    %1293 = vmatpush1.bf16.msra.mxu0 0
    %1294 = vmatprep.subr.bf16.mxu0 0
    %1295 = vmatpush1.bf16.msra.mxu0 0
    %1296 = vmatprep.subr.bf16.mxu0 0
    %1297 = vmatpush1.bf16.msra.mxu0 0
    %1298 = vmatprep.subr.bf16.mxu0 0
    %1299 = vmatpush1.bf16.msra.mxu0 0
    %1300 = vmatprep.mubr.bf16.mxu0 0
    %1301 = vmatmul.mubr.bf16.gmra.mrb[0].mxu0 %v315
    %v1302 = vpop.f32.mrb[0].mxu0
    %v1303 = vadd.f32 %v481, %v1302
    %v1304 = vpop.f32.mrb[0].mxu0
    %v1305 = vpop.f32.mrb[0].mxu0
    %v1306 = vadd.f32 %v484, %v1305
    %v1307 = vpop.f32.mrb[0].mxu0
    %1308 = vmatprep.mubr.bf16.mxu0 0
    %1309 = vmatmul.mubr.bf16.gmra.mrb[0].mxu0 %v317
    %v1310 = vpop.f32.mrb[0].mxu0
    %v1311 = vadd.f32 %v489, %v1310
    %v1312 = vpop.f32.mrb[0].mxu0
    %v1313 = vpop.f32.mrb[0].mxu0
    %v1314 = vadd.f32 %v492, %v1313
    %v1315 = vpop.f32.mrb[0].mxu0
    %1316 = vmatprep.mubr.bf16.mxu0 0
    %1317 = vmatmul.mubr.bf16.gmra.mrb[0].mxu0 %v319
    %v1318 = vpop.f32.mrb[0].mxu0
    %v1319 = vadd.f32 %v497, %v1318
    %v1320 = vpop.f32.mrb[0].mxu0
    %v1321 = vpop.f32.mrb[0].mxu0
    %v1322 = vadd.f32 %v500, %v1321
    %v1323 = vpop.f32.mrb[0].mxu0
    %1324 = vmatprep.mubr.bf16.mxu0 0
    %1325 = vmatmul.mubr.bf16.gmra.mrb[0].mxu0 %v321
    %v1326 = vpop.f32.mrb[0].mxu0
    %v1327 = vadd.f32 %v505, %v1326
    %v1328 = vpop.f32.mrb[0].mxu0
    %v1329 = vpop.f32.mrb[0].mxu0
    %v1330 = vadd.f32 %v508, %v1329
    %v1331 = vpop.f32.mrb[0].mxu0
    %1332 = vmatprep.mubr.bf16.mxu0 0
    %1333 = vmatmul.mubr.bf16.gmra.mrb[0].mxu0 %v323
    %v1334 = vpop.f32.mrb[0].mxu0
    %v1335 = vadd.f32 %v513, %v1334
    %v1336 = vpop.f32.mrb[0].mxu0
    %v1337 = vpop.f32.mrb[0].mxu0
    %v1338 = vadd.f32 %v516, %v1337
    %v1339 = vpop.f32.mrb[0].mxu0
    %1340 = vmatprep.mubr.bf16.mxu0 0
    %1341 = vmatmul.mubr.bf16.gmra.mrb[0].mxu0 %v325
    %v1342 = vpop.f32.mrb[0].mxu0
    %v1343 = vadd.f32 %v521, %v1342
    %v1344 = vpop.f32.mrb[0].mxu0
    %v1345 = vpop.f32.mrb[0].mxu0
    %v1346 = vadd.f32 %v524, %v1345
    %v1347 = vpop.f32.mrb[0].mxu0
    %1348 = vmatprep.mubr.bf16.mxu0 0
    %1349 = vmatmul.mubr.bf16.gmra.mrb[0].mxu0 %v327
    %v1350 = vpop.f32.mrb[0].mxu0
    %v1351 = vadd.f32 %v529, %v1350
    %v1352 = vpop.f32.mrb[0].mxu0
    %v1353 = vpop.f32.mrb[0].mxu0
    %v1354 = vadd.f32 %v532, %v1353
    %v1355 = vpop.f32.mrb[0].mxu0
    %1356 = vmatprep.mubr.bf16.mxu0 0
    %1357 = vmatmul.mubr.bf16.gmra.mrb[0].mxu0 %v329
    %v1358 = vpop.f32.mrb[0].mxu0
    %v1359 = vadd.f32 %v537, %v1358
    %v1360 = vpop.f32.mrb[0].mxu0
    %v1361 = vpop.f32.mrb[0].mxu0
    %v1362 = vadd.f32 %v540, %v1361
    %v1363 = vpop.f32.mrb[0].mxu0
    %1364 = vdwg.mxu0
    %v1381 = vunpack.c.l.b16 %v544
    %v1382 = vunpack.c.l.b16 %v545
    %v1383 = vunpack.c.l.b16 %v546
    %v1384 = vunpack.c.l.b16 %v547
    %v1385 = vunpack.c.l.b16 %v548
    %v1386 = vunpack.c.l.b16 %v549
    %v1387 = vunpack.c.l.b16 %v550
    %v1388 = vunpack.c.l.b16 %v551
    %v1389 = vunpack.c.l.b16 %v552
    %v1390 = vunpack.c.l.b16 %v553
    %v1391 = vunpack.c.l.b16 %v554
    %v1392 = vunpack.c.l.b16 %v555
    %v1393 = vunpack.c.l.b16 %v556
    %v1394 = vunpack.c.l.b16 %v557
    %v1395 = vunpack.c.l.b16 %v558
    %v1396 = vunpack.c.l.b16 %v559
    %v1397 = vpack.c.b16 %v1382, %v1381
    %v1398 = vpack.c.b16 %v1384, %v1383
    %v1399 = vpack.c.b16 %v1386, %v1385
    %v1400 = vpack.c.b16 %v1388, %v1387
    %v1401 = vpack.c.b16 %v1390, %v1389
    %v1402 = vpack.c.b16 %v1392, %v1391
    %v1403 = vpack.c.b16 %v1394, %v1393
    %v1404 = vpack.c.b16 %v1396, %v1395
    %1413 = vmatprep.subr.bf16.mxu0 0
    %1414 = vmatpush1.bf16.msra.mxu0 %v1397
    %1415 = vmatprep.subr.bf16.mxu0 0
    %1416 = vmatpush1.bf16.msra.mxu0 %v1398
    %1417 = vmatprep.subr.bf16.mxu0 0
    %1418 = vmatpush1.bf16.msra.mxu0 %v1399
    %1419 = vmatprep.subr.bf16.mxu0 0
    %1420 = vmatpush1.bf16.msra.mxu0 %v1400
    %1421 = vmatprep.subr.bf16.mxu0 0
    %1422 = vmatpush1.bf16.msra.mxu0 %v1401
    %1423 = vmatprep.subr.bf16.mxu0 0
    %1424 = vmatpush1.bf16.msra.mxu0 %v1402
    %1425 = vmatprep.subr.bf16.mxu0 0
    %1426 = vmatpush1.bf16.msra.mxu0 %v1403
    %1427 = vmatprep.subr.bf16.mxu0 0
    %1428 = vmatpush1.bf16.msra.mxu0 %v1404
    %1429 = vmatprep.subr.bf16.mxu0 0
    %1430 = vmatpush1.bf16.msra.mxu0 0
    %1431 = vmatprep.subr.bf16.mxu0 0
    %1432 = vmatpush1.bf16.msra.mxu0 0
    %1433 = vmatprep.subr.bf16.mxu0 0
    %1434 = vmatpush1.bf16.msra.mxu0 0
    %1435 = vmatprep.subr.bf16.mxu0 0
    %1436 = vmatpush1.bf16.msra.mxu0 0
    %1437 = vmatprep.subr.bf16.mxu0 0
    %1438 = vmatpush1.bf16.msra.mxu0 0
    %1439 = vmatprep.subr.bf16.mxu0 0
    %1440 = vmatpush1.bf16.msra.mxu0 0
    %1441 = vmatprep.subr.bf16.mxu0 0
    %1442 = vmatpush1.bf16.msra.mxu0 0
    %1443 = vmatprep.subr.bf16.mxu0 0
    %1444 = vmatpush1.bf16.msra.mxu0 0
    %1445 = vmatprep.mubr.bf16.mxu0 0
    %1446 = vmatmul.mubr.bf16.gmra.mrb[0].mxu0 %v91
    %v1447 = vpop.f32.mrb[0].mxu0
    %v1448 = vadd.f32 %v664, %v1447
    %v1449 = vpop.f32.mrb[0].mxu0
    %v1450 = vpop.f32.mrb[0].mxu0
    %v1451 = vadd.f32 %v667, %v1450
    %v1452 = vpop.f32.mrb[0].mxu0
    %1453 = vmatprep.mubr.bf16.mxu0 0
    %1454 = vmatmul.mubr.bf16.gmra.mrb[0].mxu0 %v92
    %v1455 = vpop.f32.mrb[0].mxu0
    %v1456 = vadd.f32 %v672, %v1455
    %v1457 = vpop.f32.mrb[0].mxu0
    %v1458 = vpop.f32.mrb[0].mxu0
    %v1459 = vadd.f32 %v675, %v1458
    %v1460 = vpop.f32.mrb[0].mxu0
    %1461 = vmatprep.mubr.bf16.mxu0 0
    %1462 = vmatmul.mubr.bf16.gmra.mrb[0].mxu0 %v93
    %v1463 = vpop.f32.mrb[0].mxu0
    %v1464 = vadd.f32 %v680, %v1463
    %v1465 = vpop.f32.mrb[0].mxu0
    %v1466 = vpop.f32.mrb[0].mxu0
    %v1467 = vadd.f32 %v683, %v1466
    %v1468 = vpop.f32.mrb[0].mxu0
    %1469 = vmatprep.mubr.bf16.mxu0 0
    %1470 = vmatmul.mubr.bf16.gmra.mrb[0].mxu0 %v94
    %v1471 = vpop.f32.mrb[0].mxu0
    %v1472 = vadd.f32 %v688, %v1471
    %v1473 = vpop.f32.mrb[0].mxu0
    %v1474 = vpop.f32.mrb[0].mxu0
    %v1475 = vadd.f32 %v691, %v1474
    %v1476 = vpop.f32.mrb[0].mxu0
    %1477 = vmatprep.mubr.bf16.mxu0 0
    %1478 = vmatmul.mubr.bf16.gmra.mrb[0].mxu0 %v95
    %v1479 = vpop.f32.mrb[0].mxu0
    %v1480 = vadd.f32 %v696, %v1479
    %v1481 = vpop.f32.mrb[0].mxu0
    %v1482 = vpop.f32.mrb[0].mxu0
    %v1483 = vadd.f32 %v699, %v1482
    %v1484 = vpop.f32.mrb[0].mxu0
    %1485 = vmatprep.mubr.bf16.mxu0 0
    %1486 = vmatmul.mubr.bf16.gmra.mrb[0].mxu0 %v96
    %v1487 = vpop.f32.mrb[0].mxu0
    %v1488 = vadd.f32 %v704, %v1487
    %v1489 = vpop.f32.mrb[0].mxu0
    %v1490 = vpop.f32.mrb[0].mxu0
    %v1491 = vadd.f32 %v707, %v1490
    %v1492 = vpop.f32.mrb[0].mxu0
    %1493 = vmatprep.mubr.bf16.mxu0 0
    %1494 = vmatmul.mubr.bf16.gmra.mrb[0].mxu0 %v97
    %v1495 = vpop.f32.mrb[0].mxu0
    %v1496 = vadd.f32 %v712, %v1495
    %v1497 = vpop.f32.mrb[0].mxu0
    %v1498 = vpop.f32.mrb[0].mxu0
    %v1499 = vadd.f32 %v715, %v1498
    %v1500 = vpop.f32.mrb[0].mxu0
    %1501 = vmatprep.mubr.bf16.mxu0 0
    %1502 = vmatmul.mubr.bf16.gmra.mrb[0].mxu0 %v98
    %v1503 = vpop.f32.mrb[0].mxu0
    %v1504 = vadd.f32 %v720, %v1503
    %v1505 = vpop.f32.mrb[0].mxu0
    %v1506 = vpop.f32.mrb[0].mxu0
    %v1507 = vadd.f32 %v723, %v1506
    %v1508 = vpop.f32.mrb[0].mxu0
    %1509 = vdwg.mxu0
    %v1526 = vunpack.c.l.b16 %v731
    %v1527 = vunpack.c.l.b16 %v732
    %v1528 = vunpack.c.l.b16 %v733
    %v1529 = vunpack.c.l.b16 %v734
    %v1530 = vunpack.c.l.b16 %v735
    %v1531 = vunpack.c.l.b16 %v736
    %v1532 = vunpack.c.l.b16 %v737
    %v1533 = vunpack.c.l.b16 %v738
    %v1534 = vunpack.c.l.b16 %v739
    %v1535 = vunpack.c.l.b16 %v740
    %v1536 = vunpack.c.l.b16 %v741
    %v1537 = vunpack.c.l.b16 %v742
    %v1538 = vunpack.c.l.b16 %v743
    %v1539 = vunpack.c.l.b16 %v744
    %v1540 = vunpack.c.l.b16 %v745
    %v1541 = vunpack.c.l.b16 %v746
    %v1542 = vpack.c.b16 %v1527, %v1526
    %v1543 = vpack.c.b16 %v1529, %v1528
    %v1544 = vpack.c.b16 %v1531, %v1530
    %v1545 = vpack.c.b16 %v1533, %v1532
    %v1546 = vpack.c.b16 %v1535, %v1534
    %v1547 = vpack.c.b16 %v1537, %v1536
    %v1548 = vpack.c.b16 %v1539, %v1538
    %v1549 = vpack.c.b16 %v1541, %v1540
    %1558 = vmatprep.subr.bf16.mxu0 0
    %1559 = vmatpush1.bf16.msra.mxu0 %v1542
    %1560 = vmatprep.subr.bf16.mxu0 0
    %1561 = vmatpush1.bf16.msra.mxu0 %v1543
    %1562 = vmatprep.subr.bf16.mxu0 0
    %1563 = vmatpush1.bf16.msra.mxu0 %v1544
    %1564 = vmatprep.subr.bf16.mxu0 0
    %1565 = vmatpush1.bf16.msra.mxu0 %v1545
    %1566 = vmatprep.subr.bf16.mxu0 0
    %1567 = vmatpush1.bf16.msra.mxu0 %v1546
    %1568 = vmatprep.subr.bf16.mxu0 0
    %1569 = vmatpush1.bf16.msra.mxu0 %v1547
    %1570 = vmatprep.subr.bf16.mxu0 0
    %1571 = vmatpush1.bf16.msra.mxu0 %v1548
    %1572 = vmatprep.subr.bf16.mxu0 0
    %1573 = vmatpush1.bf16.msra.mxu0 %v1549
    %1574 = vmatprep.subr.bf16.mxu0 0
    %1575 = vmatpush1.bf16.msra.mxu0 0
    %1576 = vmatprep.subr.bf16.mxu0 0
    %1577 = vmatpush1.bf16.msra.mxu0 0
    %1578 = vmatprep.subr.bf16.mxu0 0
    %1579 = vmatpush1.bf16.msra.mxu0 0
    %1580 = vmatprep.subr.bf16.mxu0 0
    %1581 = vmatpush1.bf16.msra.mxu0 0
    %1582 = vmatprep.subr.bf16.mxu0 0
    %1583 = vmatpush1.bf16.msra.mxu0 0
    %1584 = vmatprep.subr.bf16.mxu0 0
    %1585 = vmatpush1.bf16.msra.mxu0 0
    %1586 = vmatprep.subr.bf16.mxu0 0
    %1587 = vmatpush1.bf16.msra.mxu0 0
    %1588 = vmatprep.subr.bf16.mxu0 0
    %1589 = vmatpush1.bf16.msra.mxu0 0
    %1590 = vmatprep.mubr.bf16.mxu0 0
    %1591 = vmatmul.mubr.bf16.gmra.mrb[0].mxu0 %v317
    %v1592 = vpop.f32.mrb[0].mxu0
    %v1593 = vadd.f32 %v851, %v1592
    %v1594 = vpop.f32.mrb[0].mxu0
    %v1595 = vpop.f32.mrb[0].mxu0
    %v1596 = vadd.f32 %v854, %v1595
    %v1597 = vpop.f32.mrb[0].mxu0
    %1598 = vmatprep.mubr.bf16.mxu0 0
    %1599 = vmatmul.mubr.bf16.gmra.mrb[0].mxu0 %v319
    %v1600 = vpop.f32.mrb[0].mxu0
    %v1601 = vadd.f32 %v859, %v1600
    %v1602 = vpop.f32.mrb[0].mxu0
    %v1603 = vpop.f32.mrb[0].mxu0
    %v1604 = vadd.f32 %v862, %v1603
    %v1605 = vpop.f32.mrb[0].mxu0
    %1606 = vmatprep.mubr.bf16.mxu0 0
    %1607 = vmatmul.mubr.bf16.gmra.mrb[0].mxu0 %v321
    %v1608 = vpop.f32.mrb[0].mxu0
    %v1609 = vadd.f32 %v867, %v1608
    %v1610 = vpop.f32.mrb[0].mxu0
    %v1611 = vpop.f32.mrb[0].mxu0
    %v1612 = vadd.f32 %v870, %v1611
    %v1613 = vpop.f32.mrb[0].mxu0
    %1614 = vmatprep.mubr.bf16.mxu0 0
    %1615 = vmatmul.mubr.bf16.gmra.mrb[0].mxu0 %v726
    %v1616 = vpop.f32.mrb[0].mxu0
    %v1617 = vadd.f32 %v875, %v1616
    %v1618 = vpop.f32.mrb[0].mxu0
    %v1619 = vpop.f32.mrb[0].mxu0
    %v1620 = vadd.f32 %v878, %v1619
    %v1621 = vpop.f32.mrb[0].mxu0
    %1622 = vmatprep.mubr.bf16.mxu0 0
    %1623 = vmatmul.mubr.bf16.gmra.mrb[0].mxu0 %v325
    %v1624 = vpop.f32.mrb[0].mxu0
    %v1625 = vadd.f32 %v883, %v1624
    %v1626 = vpop.f32.mrb[0].mxu0
    %v1627 = vpop.f32.mrb[0].mxu0
    %v1628 = vadd.f32 %v886, %v1627
    %v1629 = vpop.f32.mrb[0].mxu0
    %1630 = vmatprep.mubr.bf16.mxu0 0
    %1631 = vmatmul.mubr.bf16.gmra.mrb[0].mxu0 %v327
    %v1632 = vpop.f32.mrb[0].mxu0
    %v1633 = vadd.f32 %v891, %v1632
    %v1634 = vpop.f32.mrb[0].mxu0
    %v1635 = vpop.f32.mrb[0].mxu0
    %v1636 = vadd.f32 %v894, %v1635
    %v1637 = vpop.f32.mrb[0].mxu0
    %1638 = vmatprep.mubr.bf16.mxu0 0
    %1639 = vmatmul.mubr.bf16.gmra.mrb[0].mxu0 %v329
    %v1640 = vpop.f32.mrb[0].mxu0
    %v1641 = vadd.f32 %v899, %v1640
    %v1642 = vpop.f32.mrb[0].mxu0
    %v1643 = vpop.f32.mrb[0].mxu0
    %v1644 = vadd.f32 %v902, %v1643
    %v1645 = vpop.f32.mrb[0].mxu0
    %1646 = vmatprep.mubr.bf16.mxu0 0
    %1647 = vmatmul.mubr.bf16.gmra.mrb[0].mxu0 %v727
    %v1648 = vpop.f32.mrb[0].mxu0
    %v1649 = vadd.f32 %v907, %v1648
    %v1650 = vpop.f32.mrb[0].mxu0
    %v1651 = vpop.f32.mrb[0].mxu0
    %v1652 = vadd.f32 %v910, %v1651
    %v1653 = vpop.f32.mrb[0].mxu0
    %1654 = vdwg.mxu0
    %v1655 = vadd.f32 %v1158, %v1303
    %v1656 = vadd.f32 %v1161, %v1306
    %v1657 = vadd.f32 %v1166, %v1311
    %v1658 = vadd.f32 %v1169, %v1314
    %v1659 = vadd.f32 %v1174, %v1319
    %v1660 = vadd.f32 %v1177, %v1322
    %v1661 = vadd.f32 %v1182, %v1327
    %v1662 = vadd.f32 %v1185, %v1330
    %v1663 = vadd.f32 %v1190, %v1335
    %v1664 = vadd.f32 %v1193, %v1338
    %v1665 = vadd.f32 %v1198, %v1343
    %v1666 = vadd.f32 %v1201, %v1346
    %v1667 = vadd.f32 %v1206, %v1351
    %v1668 = vadd.f32 %v1209, %v1354
    %v1669 = vadd.f32 %v1214, %v1359
    %v1670 = vadd.f32 %v1217, %v1362
    %v1671 = vadd.f32 %v1448, %v1593
    %v1672 = vadd.f32 %v1451, %v1596
    %v1673 = vadd.f32 %v1456, %v1601
    %v1674 = vadd.f32 %v1459, %v1604
    %v1675 = vadd.f32 %v1464, %v1609
    %v1676 = vadd.f32 %v1467, %v1612
    %v1677 = vadd.f32 %v1472, %v1617
    %v1678 = vadd.f32 %v1475, %v1620
    %v1679 = vadd.f32 %v1480, %v1625
    %v1680 = vadd.f32 %v1483, %v1628
    %v1681 = vadd.f32 %v1488, %v1633
    %v1682 = vadd.f32 %v1491, %v1636
    %v1683 = vadd.f32 %v1496, %v1641
    %v1684 = vadd.f32 %v1499, %v1644
    %v1685 = vadd.f32 %v1504, %v1649
    %v1686 = vadd.f32 %v1507, %v1652
    %v1687 = vadd.f32 %v1655, %v1671
    %v1688 = vadd.f32 %v1656, %v1672
    %v1689 = vadd.f32 %v1657, %v1673
    %v1690 = vadd.f32 %v1658, %v1674
    %v1691 = vadd.f32 %v1659, %v1675
    %v1692 = vadd.f32 %v1660, %v1676
    %v1693 = vadd.f32 %v1661, %v1677
    %v1694 = vadd.f32 %v1662, %v1678
    %v1695 = vadd.f32 %v1663, %v1679
    %v1696 = vadd.f32 %v1664, %v1680
    %v1697 = vadd.f32 %v1665, %v1681
    %v1698 = vadd.f32 %v1666, %v1682
    %v1699 = vadd.f32 %v1667, %v1683
    %v1700 = vadd.f32 %v1668, %v1684
    %v1701 = vadd.f32 %v1669, %v1685
    %v1702 = vadd.f32 %v1670, %v1686
    %v1703 = vadd.f32 %v1687, %v1013
    %v1704 = vadd.f32 %v1688, %v1016
    %v1705 = vadd.f32 %v1689, %v1021
    %v1706 = vadd.f32 %v1690, %v1024
    %v1707 = vadd.f32 %v1691, %v1029
    %v1708 = vadd.f32 %v1692, %v1032
    %v1709 = vadd.f32 %v1693, %v1037
    %v1710 = vadd.f32 %v1694, %v1040
    %v1711 = vadd.f32 %v1695, %v1045
    %v1712 = vadd.f32 %v1696, %v1048
    %v1713 = vadd.f32 %v1697, %v1053
    %v1714 = vadd.f32 %v1698, %v1056
    %v1715 = vadd.f32 %v1699, %v1061
    %v1716 = vadd.f32 %v1700, %v1064
    %v1717 = vadd.f32 %v1701, %v1069
    %v1718 = vadd.f32 %v1702, %v1072
    %v1719 = vld [vmem:[%s2] sm:$0x1]
    %v1721 = vlaneseq
    %v1722 = vshrl.u32 %v1721, 7
    %v1723 = vsub.s32 0, %v1722
    %v1724 = vrot.slane %v1719, %v1723
    %v1726 = vadd.f32 %v1703, %v1724
    %v1727 = vadd.f32 %v1704, %v1724
    %v1728 = vadd.f32 %v1705, %v1724
    %v1729 = vadd.f32 %v1706, %v1724
    %v1730 = vadd.f32 %v1707, %v1724
    %v1731 = vadd.f32 %v1708, %v1724
    %v1732 = vadd.f32 %v1709, %v1724
    %v1733 = vadd.f32 %v1710, %v1724
    %v1734 = vadd.f32 %v1711, %v1724
    %v1735 = vadd.f32 %v1712, %v1724
    %v1736 = vadd.f32 %v1713, %v1724
    %v1737 = vadd.f32 %v1714, %v1724
    %v1738 = vadd.f32 %v1715, %v1724
    %v1739 = vadd.f32 %v1716, %v1724
    %v1740 = vadd.f32 %v1717, %v1724
    %v1741 = vadd.f32 %v1718, %v1724
    %v1742 = vadd.f32 %v1726, 3.0
    %v1743 = vadd.f32 %v1727, 3.0
    %v1744 = vadd.f32 %v1728, 3.0
    %v1745 = vadd.f32 %v1729, 3.0
    %v1746 = vadd.f32 %v1730, 3.0
    %v1747 = vadd.f32 %v1731, 3.0
    %v1748 = vadd.f32 %v1732, 3.0
    %v1749 = vadd.f32 %v1733, 3.0
    %v1750 = vadd.f32 %v1734, 3.0
    %v1751 = vadd.f32 %v1735, 3.0
    %v1752 = vadd.f32 %v1736, 3.0
    %v1753 = vadd.f32 %v1737, 3.0
    %v1754 = vadd.f32 %v1738, 3.0
    %v1755 = vadd.f32 %v1739, 3.0
    %v1756 = vadd.f32 %v1740, 3.0
    %v1757 = vadd.f32 %v1741, 3.0
    %v1758 = vmax.f32 %v1742, 0.0
    %v1759 = vmax.f32 %v1743, 0.0
    %v1760 = vmax.f32 %v1744, 0.0
    %v1761 = vmax.f32 %v1745, 0.0
    %v1762 = vmax.f32 %v1746, 0.0
    %v1763 = vmax.f32 %v1747, 0.0
    %v1764 = vmax.f32 %v1748, 0.0
    %v1765 = vmax.f32 %v1749, 0.0
    %v1766 = vmax.f32 %v1750, 0.0
    %v1767 = vmax.f32 %v1751, 0.0
    %v1768 = vmax.f32 %v1752, 0.0
    %v1769 = vmax.f32 %v1753, 0.0
    %v1770 = vmax.f32 %v1754, 0.0
    %v1771 = vmax.f32 %v1755, 0.0
    %v1772 = vmax.f32 %v1756, 0.0
    %v1773 = vmax.f32 %v1757, 0.0
    %v1774 = vmin.f32 %v1758, 6.0
    %v1775 = vmin.f32 %v1759, 6.0
    %v1776 = vmin.f32 %v1760, 6.0
    %v1777 = vmin.f32 %v1761, 6.0
    %v1778 = vmin.f32 %v1762, 6.0
    %v1779 = vmin.f32 %v1763, 6.0
    %v1780 = vmin.f32 %v1764, 6.0
    %v1781 = vmin.f32 %v1765, 6.0
    %v1782 = vmin.f32 %v1766, 6.0
    %v1783 = vmin.f32 %v1767, 6.0
    %v1784 = vmin.f32 %v1768, 6.0
    %v1785 = vmin.f32 %v1769, 6.0
    %v1786 = vmin.f32 %v1770, 6.0
    %v1787 = vmin.f32 %v1771, 6.0
    %v1788 = vmin.f32 %v1772, 6.0
    %v1789 = vmin.f32 %v1773, 6.0
    %v1790 = vmul.f32 %v1726, %v1774
    %v1791 = vmul.f32 %v1727, %v1775
    %v1792 = vmul.f32 %v1728, %v1776
    %v1793 = vmul.f32 %v1729, %v1777
    %v1794 = vmul.f32 %v1730, %v1778
    %v1795 = vmul.f32 %v1731, %v1779
    %v1796 = vmul.f32 %v1732, %v1780
    %v1797 = vmul.f32 %v1733, %v1781
    %v1798 = vmul.f32 %v1734, %v1782
    %v1799 = vmul.f32 %v1735, %v1783
    %v1800 = vmul.f32 %v1736, %v1784
    %v1801 = vmul.f32 %v1737, %v1785
    %v1802 = vmul.f32 %v1738, %v1786
    %v1803 = vmul.f32 %v1739, %v1787
    %v1804 = vmul.f32 %v1740, %v1788
    %v1805 = vmul.f32 %v1741, %v1789
    %v1806 = vpack.c.bf16 %v1791, %v1790
    %v1807 = vpack.c.bf16 %v1793, %v1792
    %v1808 = vpack.c.bf16 %v1795, %v1794
    %v1809 = vpack.c.bf16 %v1797, %v1796
    %v1810 = vpack.c.bf16 %v1799, %v1798
    %v1811 = vpack.c.bf16 %v1801, %v1800
    %v1812 = vpack.c.bf16 %v1803, %v1802
    %v1813 = vpack.c.bf16 %v1805, %v1804
    %v1814 = vld [vmem:[%s3] sm:$0xf]
    %v1815 = vld [vmem:[%s3 + $0x4] sm:$0xf]
    %v1816 = vld [vmem:[%s3 + $0x8] sm:$0xf]
    %v1817 = vld [vmem:[%s3 + $0xc] sm:$0xf]
    %v1818 = vld [vmem:[%s3 + $0x10] sm:$0xf]
    %v1819 = vld [vmem:[%s3 + $0x14] sm:$0xf]
    %v1820 = vld [vmem:[%s3 + $0x18] sm:$0xf]
    %v1821 = vld [vmem:[%s3 + $0x1c] sm:$0xf]
    %v1822 = vld [vmem:[%s3 + $0x20] sm:$0xf]
    %v1823 = vld [vmem:[%s3 + $0x24] sm:$0xf]
    %v1824 = vld [vmem:[%s3 + $0x28] sm:$0xf]
    %v1825 = vld [vmem:[%s3 + $0x2c] sm:$0xf]
    %v1826 = vld [vmem:[%s3 + $0x30] sm:$0xf]
    %v1827 = vld [vmem:[%s3 + $0x34] sm:$0xf]
    %v1828 = vld [vmem:[%s3 + $0x38] sm:$0xf]
    %v1829 = vld [vmem:[%s3 + $0x3c] sm:$0xf]
    %v1830 = vld [vmem:[%s4] sm:$0x1]
    %v1832 = vlaneseq
    %v1833 = vshrl.u32 %v1832, 7
    %v1834 = vsub.s32 0, %v1833
    %v1835 = vrot.slane %v1830, %v1834
    %v1853 = vunpack.c.l.b16 %v1814
    %v1854 = vunpack.c.l.b16 %v1815
    %v1855 = vunpack.c.l.b16 %v1816
    %v1856 = vunpack.c.l.b16 %v1817
    %v1857 = vunpack.c.l.b16 %v1818
    %v1858 = vunpack.c.l.b16 %v1819
    %v1859 = vunpack.c.l.b16 %v1820
    %v1860 = vunpack.c.l.b16 %v1821
    %v1861 = vunpack.c.l.b16 %v1822
    %v1862 = vunpack.c.l.b16 %v1823
    %v1863 = vunpack.c.l.b16 %v1824
    %v1864 = vunpack.c.l.b16 %v1825
    %v1865 = vunpack.c.l.b16 %v1826
    %v1866 = vunpack.c.l.b16 %v1827
    %v1867 = vunpack.c.l.b16 %v1828
    %v1868 = vunpack.c.l.b16 %v1829
    %v1869 = vpack.c.b16 %v1854, %v1853
    %v1870 = vpack.c.b16 %v1856, %v1855
    %v1871 = vpack.c.b16 %v1858, %v1857
    %v1872 = vpack.c.b16 %v1860, %v1859
    %v1873 = vpack.c.b16 %v1862, %v1861
    %v1874 = vpack.c.b16 %v1864, %v1863
    %v1875 = vpack.c.b16 %v1866, %v1865
    %v1876 = vpack.c.b16 %v1868, %v1867
    %1885 = vmatprep.subr.bf16.mxu0 0
    %1886 = vmatpush1.bf16.msra.mxu0 %v1869
    %1887 = vmatprep.subr.bf16.mxu0 0
    %1888 = vmatpush1.bf16.msra.mxu0 %v1870
    %1889 = vmatprep.subr.bf16.mxu0 0
    %1890 = vmatpush1.bf16.msra.mxu0 %v1871
    %1891 = vmatprep.subr.bf16.mxu0 0
    %1892 = vmatpush1.bf16.msra.mxu0 %v1872
    %1893 = vmatprep.subr.bf16.mxu0 0
    %1894 = vmatpush1.bf16.msra.mxu0 %v1873
    %1895 = vmatprep.subr.bf16.mxu0 0
    %1896 = vmatpush1.bf16.msra.mxu0 %v1874
    %1897 = vmatprep.subr.bf16.mxu0 0
    %1898 = vmatpush1.bf16.msra.mxu0 %v1875
    %1899 = vmatprep.subr.bf16.mxu0 0
    %1900 = vmatpush1.bf16.msra.mxu0 %v1876
    %1901 = vmatprep.subr.bf16.mxu0 0
    %1902 = vmatpush1.bf16.msra.mxu0 0
    %1903 = vmatprep.subr.bf16.mxu0 0
    %1904 = vmatpush1.bf16.msra.mxu0 0
    %1905 = vmatprep.subr.bf16.mxu0 0
    %1906 = vmatpush1.bf16.msra.mxu0 0
    %1907 = vmatprep.subr.bf16.mxu0 0
    %1908 = vmatpush1.bf16.msra.mxu0 0
    %1909 = vmatprep.subr.bf16.mxu0 0
    %1910 = vmatpush1.bf16.msra.mxu0 0
    %1911 = vmatprep.subr.bf16.mxu0 0
    %1912 = vmatpush1.bf16.msra.mxu0 0
    %1913 = vmatprep.subr.bf16.mxu0 0
    %1914 = vmatpush1.bf16.msra.mxu0 0
    %1915 = vmatprep.subr.bf16.mxu0 0
    %1916 = vmatpush1.bf16.msra.mxu0 0
    %1917 = vmatprep.mubr.bf16.mxu0 0
    %1918 = vmatmul.mubr.bf16.gmra.mrb[0].mxu0 %v1806
    %v1919 = vpop.f32.mrb[0].mxu0
    %v1920 = vadd.f32 %v1835, %v1919
    %v1921 = vpop.f32.mrb[0].mxu0
    %v1922 = vpop.f32.mrb[0].mxu0
    %v1923 = vadd.f32 %v1835, %v1922
    %v1924 = vpop.f32.mrb[0].mxu0
    %1925 = vmatprep.mubr.bf16.mxu0 0
    %1926 = vmatmul.mubr.bf16.gmra.mrb[0].mxu0 %v1807
    %v1927 = vpop.f32.mrb[0].mxu0
    %v1928 = vadd.f32 %v1835, %v1927
    %v1929 = vpop.f32.mrb[0].mxu0
    %v1930 = vpop.f32.mrb[0].mxu0
    %v1931 = vadd.f32 %v1835, %v1930
    %v1932 = vpop.f32.mrb[0].mxu0
    %1933 = vmatprep.mubr.bf16.mxu0 0
    %1934 = vmatmul.mubr.bf16.gmra.mrb[0].mxu0 %v1808
    %v1935 = vpop.f32.mrb[0].mxu0
    %v1936 = vadd.f32 %v1835, %v1935
    %v1937 = vpop.f32.mrb[0].mxu0
    %v1938 = vpop.f32.mrb[0].mxu0
    %v1939 = vadd.f32 %v1835, %v1938
    %v1940 = vpop.f32.mrb[0].mxu0
    %1941 = vmatprep.mubr.bf16.mxu0 0
    %1942 = vmatmul.mubr.bf16.gmra.mrb[0].mxu0 %v1809
    %v1943 = vpop.f32.mrb[0].mxu0
    %v1944 = vadd.f32 %v1835, %v1943
    %v1945 = vpop.f32.mrb[0].mxu0
    %v1946 = vpop.f32.mrb[0].mxu0
    %v1947 = vadd.f32 %v1835, %v1946
    %v1948 = vpop.f32.mrb[0].mxu0
    %1949 = vmatprep.mubr.bf16.mxu0 0
    %1950 = vmatmul.mubr.bf16.gmra.mrb[0].mxu0 %v1810
    %v1951 = vpop.f32.mrb[0].mxu0
    %v1952 = vadd.f32 %v1835, %v1951
    %v1953 = vpop.f32.mrb[0].mxu0
    %v1954 = vpop.f32.mrb[0].mxu0
    %v1955 = vadd.f32 %v1835, %v1954
    %v1956 = vpop.f32.mrb[0].mxu0
    %1957 = vmatprep.mubr.bf16.mxu0 0
    %1958 = vmatmul.mubr.bf16.gmra.mrb[0].mxu0 %v1811
    %v1959 = vpop.f32.mrb[0].mxu0
    %v1960 = vadd.f32 %v1835, %v1959
    %v1961 = vpop.f32.mrb[0].mxu0
    %v1962 = vpop.f32.mrb[0].mxu0
    %v1963 = vadd.f32 %v1835, %v1962
    %v1964 = vpop.f32.mrb[0].mxu0
    %1965 = vmatprep.mubr.bf16.mxu0 0
    %1966 = vmatmul.mubr.bf16.gmra.mrb[0].mxu0 %v1812
    %v1967 = vpop.f32.mrb[0].mxu0
    %v1968 = vadd.f32 %v1835, %v1967
    %v1969 = vpop.f32.mrb[0].mxu0
    %v1970 = vpop.f32.mrb[0].mxu0
    %v1971 = vadd.f32 %v1835, %v1970
    %v1972 = vpop.f32.mrb[0].mxu0
    %1973 = vmatprep.mubr.bf16.mxu0 0
    %1974 = vmatmul.mubr.bf16.gmra.mrb[0].mxu0 %v1813
    %v1975 = vpop.f32.mrb[0].mxu0
    %v1976 = vadd.f32 %v1835, %v1975
    %v1977 = vpop.f32.mrb[0].mxu0
    %v1978 = vpop.f32.mrb[0].mxu0
    %v1979 = vadd.f32 %v1835, %v1978
    %v1980 = vpop.f32.mrb[0].mxu0
    %1981 = vdwg.mxu0
    %v1982 = vpack.c.bf16 %v1923, %v1920
    %v1983 = vpack.c.bf16 %v1931, %v1928
    %v1984 = vpack.c.bf16 %v1939, %v1936
    %v1985 = vpack.c.bf16 %v1947, %v1944
    %v1986 = vpack.c.bf16 %v1955, %v1952
    %v1987 = vpack.c.bf16 %v1963, %v1960
    %v1988 = vpack.c.bf16 %v1971, %v1968
    %v1989 = vpack.c.bf16 %v1979, %v1976
    %v1990 = vld [vmem:[%s5] sm:$0xf]
    %v1991 = vld [vmem:[%s5 + $0x4] sm:$0xf]
    %v1992 = vld [vmem:[%s5 + $0x8] sm:$0xf]
    %v1993 = vld [vmem:[%s5 + $0xc] sm:$0xf]
    %v1994 = vld [vmem:[%s5 + $0x10] sm:$0xf]
    %v1995 = vld [vmem:[%s5 + $0x14] sm:$0xf]
    %v1996 = vld [vmem:[%s5 + $0x18] sm:$0xf]
    %v1997 = vld [vmem:[%s5 + $0x1c] sm:$0xf]
    %v1998 = vld [vmem:[%s6] sm:$0x1]
    %v2000 = vlaneseq
    %v2001 = vshrl.u32 %v2000, 7
    %v2002 = vsub.s32 0, %v2001
    %v2003 = vrot.slane %v1998, %v2002
    %v2013 = vunpack.c.l.b16 %v1990
    %v2014 = vunpack.c.l.b16 %v1991
    %v2015 = vunpack.c.l.b16 %v1992
    %v2016 = vunpack.c.l.b16 %v1993
    %v2017 = vunpack.c.l.b16 %v1994
    %v2018 = vunpack.c.l.b16 %v1995
    %v2019 = vunpack.c.l.b16 %v1996
    %v2020 = vunpack.c.l.b16 %v1997
    %v2021 = vpack.c.b16 %v2014, %v2013
    %v2022 = vpack.c.b16 %v2016, %v2015
    %v2023 = vpack.c.b16 %v2018, %v2017
    %v2024 = vpack.c.b16 %v2020, %v2019
    %vm2029 = vcmask 523264
    %v2031 = vsel %vm2029, %v1982, 0
    %v2034 = vsel %vm2029, %v1983, 0
    %v2037 = vsel %vm2029, %v1984, 0
    %v2040 = vsel %vm2029, %v1985, 0
    %v2043 = vsel %vm2029, %v1986, 0
    %v2046 = vsel %vm2029, %v1987, 0
    %v2049 = vsel %vm2029, %v1988, 0
    %v2052 = vsel %vm2029, %v1989, 0
    %2054 = vmatprep.subr.bf16.mxu0 0
    %2055 = vmatpush1.bf16.msra.mxu0 %v2021
    %2056 = vmatprep.subr.bf16.mxu0 0
    %2057 = vmatpush1.bf16.msra.mxu0 %v2022
    %2058 = vmatprep.subr.bf16.mxu0 0
    %2059 = vmatpush1.bf16.msra.mxu0 %v2023
    %2060 = vmatprep.subr.bf16.mxu0 0
    %2061 = vmatpush1.bf16.msra.mxu0 %v2024
    %2062 = vmatprep.subr.bf16.mxu0 0
    %2063 = vmatpush1.bf16.msra.mxu0 0
    %2064 = vmatprep.subr.bf16.mxu0 0
    %2065 = vmatpush1.bf16.msra.mxu0 0
    %2066 = vmatprep.subr.bf16.mxu0 0
    %2067 = vmatpush1.bf16.msra.mxu0 0
    %2068 = vmatprep.subr.bf16.mxu0 0
    %2069 = vmatpush1.bf16.msra.mxu0 0
    %2070 = vmatprep.subr.bf16.mxu0 0
    %2071 = vmatpush1.bf16.msra.mxu0 0
    %2072 = vmatprep.subr.bf16.mxu0 0
    %2073 = vmatpush1.bf16.msra.mxu0 0
    %2074 = vmatprep.subr.bf16.mxu0 0
    %2075 = vmatpush1.bf16.msra.mxu0 0
    %2076 = vmatprep.subr.bf16.mxu0 0
    %2077 = vmatpush1.bf16.msra.mxu0 0
    %2078 = vmatprep.subr.bf16.mxu0 0
    %2079 = vmatpush1.bf16.msra.mxu0 0
    %2080 = vmatprep.subr.bf16.mxu0 0
    %2081 = vmatpush1.bf16.msra.mxu0 0
    %2082 = vmatprep.subr.bf16.mxu0 0
    %2083 = vmatpush1.bf16.msra.mxu0 0
    %2084 = vmatprep.subr.bf16.mxu0 0
    %2085 = vmatpush1.bf16.msra.mxu0 0
    %2086 = vmatprep.mubr.bf16.mxu0 0
    %2087 = vmatmul.mubr.bf16.gmra.mrb[0].mxu0 %v2031
    %v2088 = vpop.f32.mrb[0].mxu0
    %v2089 = vadd.f32 %v2003, %v2088
    %v2090 = vpop.f32.mrb[0].mxu0
    %v2091 = vpop.f32.mrb[0].mxu0
    %v2092 = vadd.f32 %v2003, %v2091
    %v2093 = vpop.f32.mrb[0].mxu0
    %2094 = vmatprep.mubr.bf16.mxu0 0
    %2095 = vmatmul.mubr.bf16.gmra.mrb[0].mxu0 %v2034
    %v2096 = vpop.f32.mrb[0].mxu0
    %v2097 = vadd.f32 %v2003, %v2096
    %v2098 = vpop.f32.mrb[0].mxu0
    %v2099 = vpop.f32.mrb[0].mxu0
    %v2100 = vadd.f32 %v2003, %v2099
    %v2101 = vpop.f32.mrb[0].mxu0
    %2102 = vmatprep.mubr.bf16.mxu0 0
    %2103 = vmatmul.mubr.bf16.gmra.mrb[0].mxu0 %v2037
    %v2104 = vpop.f32.mrb[0].mxu0
    %v2105 = vadd.f32 %v2003, %v2104
    %v2106 = vpop.f32.mrb[0].mxu0
    %v2107 = vpop.f32.mrb[0].mxu0
    %v2108 = vadd.f32 %v2003, %v2107
    %v2109 = vpop.f32.mrb[0].mxu0
    %2110 = vmatprep.mubr.bf16.mxu0 0
    %2111 = vmatmul.mubr.bf16.gmra.mrb[0].mxu0 %v2040
    %v2112 = vpop.f32.mrb[0].mxu0
    %v2113 = vadd.f32 %v2003, %v2112
    %v2114 = vpop.f32.mrb[0].mxu0
    %v2115 = vpop.f32.mrb[0].mxu0
    %v2116 = vadd.f32 %v2003, %v2115
    %v2117 = vpop.f32.mrb[0].mxu0
    %2118 = vmatprep.mubr.bf16.mxu0 0
    %2119 = vmatmul.mubr.bf16.gmra.mrb[0].mxu0 %v2043
    %v2120 = vpop.f32.mrb[0].mxu0
    %v2121 = vadd.f32 %v2003, %v2120
    %v2122 = vpop.f32.mrb[0].mxu0
    %v2123 = vpop.f32.mrb[0].mxu0
    %v2124 = vadd.f32 %v2003, %v2123
    %v2125 = vpop.f32.mrb[0].mxu0
    %2126 = vmatprep.mubr.bf16.mxu0 0
    %2127 = vmatmul.mubr.bf16.gmra.mrb[0].mxu0 %v2046
    %v2128 = vpop.f32.mrb[0].mxu0
    %v2129 = vadd.f32 %v2003, %v2128
    %v2130 = vpop.f32.mrb[0].mxu0
    %v2131 = vpop.f32.mrb[0].mxu0
    %v2132 = vadd.f32 %v2003, %v2131
    %v2133 = vpop.f32.mrb[0].mxu0
    %2134 = vmatprep.mubr.bf16.mxu0 0
    %2135 = vmatmul.mubr.bf16.gmra.mrb[0].mxu0 %v2049
    %v2136 = vpop.f32.mrb[0].mxu0
    %v2137 = vadd.f32 %v2003, %v2136
    %v2138 = vpop.f32.mrb[0].mxu0
    %v2139 = vpop.f32.mrb[0].mxu0
    %v2140 = vadd.f32 %v2003, %v2139
    %v2141 = vpop.f32.mrb[0].mxu0
    %2142 = vmatprep.mubr.bf16.mxu0 0
    %2143 = vmatmul.mubr.bf16.gmra.mrb[0].mxu0 %v2052
    %v2144 = vpop.f32.mrb[0].mxu0
    %v2145 = vadd.f32 %v2003, %v2144
    %v2146 = vpop.f32.mrb[0].mxu0
    %v2147 = vpop.f32.mrb[0].mxu0
    %v2148 = vadd.f32 %v2003, %v2147
    %v2149 = vpop.f32.mrb[0].mxu0
    %2150 = vdwg.mxu0
    %v2151 = vadd.f32 %v2089, 3.0
    %v2152 = vadd.f32 %v2092, 3.0
    %v2153 = vadd.f32 %v2097, 3.0
    %v2154 = vadd.f32 %v2100, 3.0
    %v2155 = vadd.f32 %v2105, 3.0
    %v2156 = vadd.f32 %v2108, 3.0
    %v2157 = vadd.f32 %v2113, 3.0
    %v2158 = vadd.f32 %v2116, 3.0
    %v2159 = vadd.f32 %v2121, 3.0
    %v2160 = vadd.f32 %v2124, 3.0
    %v2161 = vadd.f32 %v2129, 3.0
    %v2162 = vadd.f32 %v2132, 3.0
    %v2163 = vadd.f32 %v2137, 3.0
    %v2164 = vadd.f32 %v2140, 3.0
    %v2165 = vadd.f32 %v2145, 3.0
    %v2166 = vadd.f32 %v2148, 3.0
    %v2167 = vmax.f32 %v2151, 0.0
    %v2168 = vmax.f32 %v2152, 0.0
    %v2169 = vmax.f32 %v2153, 0.0
    %v2170 = vmax.f32 %v2154, 0.0
    %v2171 = vmax.f32 %v2155, 0.0
    %v2172 = vmax.f32 %v2156, 0.0
    %v2173 = vmax.f32 %v2157, 0.0
    %v2174 = vmax.f32 %v2158, 0.0
    %v2175 = vmax.f32 %v2159, 0.0
    %v2176 = vmax.f32 %v2160, 0.0
    %v2177 = vmax.f32 %v2161, 0.0
    %v2178 = vmax.f32 %v2162, 0.0
    %v2179 = vmax.f32 %v2163, 0.0
    %v2180 = vmax.f32 %v2164, 0.0
    %v2181 = vmax.f32 %v2165, 0.0
    %v2182 = vmax.f32 %v2166, 0.0
    %v2183 = vmin.f32 %v2167, 6.0
    %v2184 = vmin.f32 %v2168, 6.0
    %v2185 = vmin.f32 %v2169, 6.0
    %v2186 = vmin.f32 %v2170, 6.0
    %v2187 = vmin.f32 %v2171, 6.0
    %v2188 = vmin.f32 %v2172, 6.0
    %v2189 = vmin.f32 %v2173, 6.0
    %v2190 = vmin.f32 %v2174, 6.0
    %v2191 = vmin.f32 %v2175, 6.0
    %v2192 = vmin.f32 %v2176, 6.0
    %v2193 = vmin.f32 %v2177, 6.0
    %v2194 = vmin.f32 %v2178, 6.0
    %v2195 = vmin.f32 %v2179, 6.0
    %v2196 = vmin.f32 %v2180, 6.0
    %v2197 = vmin.f32 %v2181, 6.0
    %v2198 = vmin.f32 %v2182, 6.0
    %v2199 = vmul.f32 %v2089, %v2183
    %v2200 = vmul.f32 %v2092, %v2184
    %v2201 = vmul.f32 %v2097, %v2185
    %v2202 = vmul.f32 %v2100, %v2186
    %v2203 = vmul.f32 %v2105, %v2187
    %v2204 = vmul.f32 %v2108, %v2188
    %v2205 = vmul.f32 %v2113, %v2189
    %v2206 = vmul.f32 %v2116, %v2190
    %v2207 = vmul.f32 %v2121, %v2191
    %v2208 = vmul.f32 %v2124, %v2192
    %v2209 = vmul.f32 %v2129, %v2193
    %v2210 = vmul.f32 %v2132, %v2194
    %v2211 = vmul.f32 %v2137, %v2195
    %v2212 = vmul.f32 %v2140, %v2196
    %v2213 = vmul.f32 %v2145, %v2197
    %v2214 = vmul.f32 %v2148, %v2198
    %v2215 = vpack.c.bf16 %v2200, %v2199
    %v2216 = vpack.c.bf16 %v2202, %v2201
    %v2217 = vpack.c.bf16 %v2204, %v2203
    %v2218 = vpack.c.bf16 %v2206, %v2205
    %v2219 = vpack.c.bf16 %v2208, %v2207
    %v2220 = vpack.c.bf16 %v2210, %v2209
    %v2221 = vpack.c.bf16 %v2212, %v2211
    %v2222 = vpack.c.bf16 %v2214, %v2213
    %v2223 = vld [vmem:[#allocation7] sm:$0xf]
    %v2224 = vld [vmem:[#allocation7 + $0x4] sm:$0xf]
    %v2225 = vld [vmem:[#allocation7 + $0x8] sm:$0xf]
    %v2226 = vld [vmem:[#allocation7 + $0xc] sm:$0xf]
    %v2227 = vld [vmem:[#allocation7 + $0x10] sm:$0xf]
    %v2228 = vld [vmem:[#allocation7 + $0x14] sm:$0xf]
    %v2229 = vld [vmem:[#allocation7 + $0x18] sm:$0xf]
    %v2230 = vld [vmem:[#allocation7 + $0x1c] sm:$0xf]
    %v2231 = vld [vmem:[#allocation7 + $0x20] sm:$0xf]
    %v2232 = vld [vmem:[#allocation7 + $0x24] sm:$0xf]
    %v2233 = vld [vmem:[#allocation7 + $0x28] sm:$0xf]
    %v2234 = vld [vmem:[#allocation7 + $0x2c] sm:$0xf]
    %v2235 = vld [vmem:[#allocation7 + $0x30] sm:$0xf]
    %v2236 = vld [vmem:[#allocation7 + $0x34] sm:$0xf]
    %v2237 = vld [vmem:[#allocation7 + $0x38] sm:$0xf]
    %v2238 = vld [vmem:[#allocation7 + $0x3c] sm:$0xf]
    %v2247 = vrot.slane %v2215, 2
    %v2248 = vsel %vm124, %v125, %v2247
    %v2249 = vrot.slane %v2216, 2
    %v2250 = vsel %vm124, %v2247, %v2249
    %v2251 = vrot.slane %v2217, 2
    %v2252 = vsel %vm124, %v2249, %v2251
    %v2253 = vrot.slane %v2218, 2
    %v2254 = vsel %vm124, %v2251, %v2253
    %v2255 = vrot.slane %v2219, 2
    %v2256 = vsel %vm124, %v125, %v2255
    %v2257 = vrot.slane %v2220, 2
    %v2258 = vsel %vm124, %v2255, %v2257
    %v2259 = vrot.slane %v2221, 2
    %v2260 = vsel %vm124, %v2257, %v2259
    %v2261 = vrot.slane %v2222, 2
    %v2262 = vsel %vm124, %v2259, %v2261
    %s2271 = scalar_lea.vmem [#allocation7], 64
    %v2272 = vld [vmem:[%s2271] sm:$0xf]
    %v2273 = vld [vmem:[%s2271 + $0x4] sm:$0xf]
    %v2274 = vld [vmem:[%s2271 + $0x8] sm:$0xf]
    %v2275 = vld [vmem:[%s2271 + $0xc] sm:$0xf]
    %v2276 = vld [vmem:[%s2271 + $0x10] sm:$0xf]
    %v2277 = vld [vmem:[%s2271 + $0x14] sm:$0xf]
    %v2278 = vld [vmem:[%s2271 + $0x18] sm:$0xf]
    %v2279 = vld [vmem:[%s2271 + $0x1c] sm:$0xf]
    %v2280 = vld [vmem:[%s2271 + $0x20] sm:$0xf]
    %v2281 = vld [vmem:[%s2271 + $0x24] sm:$0xf]
    %v2282 = vld [vmem:[%s2271 + $0x28] sm:$0xf]
    %v2283 = vld [vmem:[%s2271 + $0x2c] sm:$0xf]
    %v2284 = vld [vmem:[%s2271 + $0x30] sm:$0xf]
    %v2285 = vld [vmem:[%s2271 + $0x34] sm:$0xf]
    %v2286 = vld [vmem:[%s2271 + $0x38] sm:$0xf]
    %v2287 = vld [vmem:[%s2271 + $0x3c] sm:$0xf]
    %v2304 = vunpack.c.l.b16 %v2272
    %v2305 = vunpack.c.l.b16 %v2273
    %v2306 = vunpack.c.l.b16 %v2274
    %v2307 = vunpack.c.l.b16 %v2275
    %v2308 = vunpack.c.l.b16 %v2276
    %v2309 = vunpack.c.l.b16 %v2277
    %v2310 = vunpack.c.l.b16 %v2278
    %v2311 = vunpack.c.l.b16 %v2279
    %v2312 = vunpack.c.l.b16 %v2280
    %v2313 = vunpack.c.l.b16 %v2281
    %v2314 = vunpack.c.l.b16 %v2282
    %v2315 = vunpack.c.l.b16 %v2283
    %v2316 = vunpack.c.l.b16 %v2284
    %v2317 = vunpack.c.l.b16 %v2285
    %v2318 = vunpack.c.l.b16 %v2286
    %v2319 = vunpack.c.l.b16 %v2287
    %v2320 = vpack.c.b16 %v2305, %v2304
    %v2321 = vpack.c.b16 %v2307, %v2306
    %v2322 = vpack.c.b16 %v2309, %v2308
    %v2323 = vpack.c.b16 %v2311, %v2310
    %v2324 = vpack.c.b16 %v2313, %v2312
    %v2325 = vpack.c.b16 %v2315, %v2314
    %v2326 = vpack.c.b16 %v2317, %v2316
    %v2327 = vpack.c.b16 %v2319, %v2318
    %2336 = vmatprep.subr.bf16.mxu0 0
    %2337 = vmatpush1.bf16.msra.mxu0 %v2320
    %2338 = vmatprep.subr.bf16.mxu0 0
    %2339 = vmatpush1.bf16.msra.mxu0 %v2321
    %2340 = vmatprep.subr.bf16.mxu0 0
    %2341 = vmatpush1.bf16.msra.mxu0 %v2322
    %2342 = vmatprep.subr.bf16.mxu0 0
    %2343 = vmatpush1.bf16.msra.mxu0 %v2323
    %2344 = vmatprep.subr.bf16.mxu0 0
    %2345 = vmatpush1.bf16.msra.mxu0 %v2324
    %2346 = vmatprep.subr.bf16.mxu0 0
    %2347 = vmatpush1.bf16.msra.mxu0 %v2325
    %2348 = vmatprep.subr.bf16.mxu0 0
    %2349 = vmatpush1.bf16.msra.mxu0 %v2326
    %2350 = vmatprep.subr.bf16.mxu0 0
    %2351 = vmatpush1.bf16.msra.mxu0 %v2327
    %2352 = vmatprep.subr.bf16.mxu0 0
    %2353 = vmatpush1.bf16.msra.mxu0 0
    %2354 = vmatprep.subr.bf16.mxu0 0
    %2355 = vmatpush1.bf16.msra.mxu0 0
    %2356 = vmatprep.subr.bf16.mxu0 0
    %2357 = vmatpush1.bf16.msra.mxu0 0
    %2358 = vmatprep.subr.bf16.mxu0 0
    %2359 = vmatpush1.bf16.msra.mxu0 0
    %2360 = vmatprep.subr.bf16.mxu0 0
    %2361 = vmatpush1.bf16.msra.mxu0 0
    %2362 = vmatprep.subr.bf16.mxu0 0
    %2363 = vmatpush1.bf16.msra.mxu0 0
    %2364 = vmatprep.subr.bf16.mxu0 0
    %2365 = vmatpush1.bf16.msra.mxu0 0
    %2366 = vmatprep.subr.bf16.mxu0 0
    %2367 = vmatpush1.bf16.msra.mxu0 0
    %2368 = vmatprep.mubr.bf16.mxu0 0
    %2369 = vmatmul.mubr.bf16.gmra.mrb[0].mxu0 %v2248
    %v2370 = vpop.f32.mrb[0].mxu0
    %v2371 = vadd.f32 0.0, %v2370
    %v2372 = vpop.f32.mrb[0].mxu0
    %v2373 = vpop.f32.mrb[0].mxu0
    %v2374 = vadd.f32 0.0, %v2373
    %v2375 = vpop.f32.mrb[0].mxu0
    %2376 = vmatprep.mubr.bf16.mxu0 0
    %2377 = vmatmul.mubr.bf16.gmra.mrb[0].mxu0 %v2250
    %v2378 = vpop.f32.mrb[0].mxu0
    %v2379 = vadd.f32 0.0, %v2378
    %v2380 = vpop.f32.mrb[0].mxu0
    %v2381 = vpop.f32.mrb[0].mxu0
    %v2382 = vadd.f32 0.0, %v2381
    %v2383 = vpop.f32.mrb[0].mxu0
    %2384 = vmatprep.mubr.bf16.mxu0 0
    %2385 = vmatmul.mubr.bf16.gmra.mrb[0].mxu0 %v2252
    %v2386 = vpop.f32.mrb[0].mxu0
    %v2387 = vadd.f32 0.0, %v2386
    %v2388 = vpop.f32.mrb[0].mxu0
    %v2389 = vpop.f32.mrb[0].mxu0
    %v2390 = vadd.f32 0.0, %v2389
    %v2391 = vpop.f32.mrb[0].mxu0
    %2392 = vmatprep.mubr.bf16.mxu0 0
    %2393 = vmatmul.mubr.bf16.gmra.mrb[0].mxu0 %v2254
    %v2394 = vpop.f32.mrb[0].mxu0
    %v2395 = vadd.f32 0.0, %v2394
    %v2396 = vpop.f32.mrb[0].mxu0
    %v2397 = vpop.f32.mrb[0].mxu0
    %v2398 = vadd.f32 0.0, %v2397
    %v2399 = vpop.f32.mrb[0].mxu0
    %2400 = vmatprep.mubr.bf16.mxu0 0
    %2401 = vmatmul.mubr.bf16.gmra.mrb[0].mxu0 %v2256
    %v2402 = vpop.f32.mrb[0].mxu0
    %v2403 = vadd.f32 0.0, %v2402
    %v2404 = vpop.f32.mrb[0].mxu0
    %v2405 = vpop.f32.mrb[0].mxu0
    %v2406 = vadd.f32 0.0, %v2405
    %v2407 = vpop.f32.mrb[0].mxu0
    %2408 = vmatprep.mubr.bf16.mxu0 0
    %2409 = vmatmul.mubr.bf16.gmra.mrb[0].mxu0 %v2258
    %v2410 = vpop.f32.mrb[0].mxu0
    %v2411 = vadd.f32 0.0, %v2410
    %v2412 = vpop.f32.mrb[0].mxu0
    %v2413 = vpop.f32.mrb[0].mxu0
    %v2414 = vadd.f32 0.0, %v2413
    %v2415 = vpop.f32.mrb[0].mxu0
    %2416 = vmatprep.mubr.bf16.mxu0 0
    %2417 = vmatmul.mubr.bf16.gmra.mrb[0].mxu0 %v2260
    %v2418 = vpop.f32.mrb[0].mxu0
    %v2419 = vadd.f32 0.0, %v2418
    %v2420 = vpop.f32.mrb[0].mxu0
    %v2421 = vpop.f32.mrb[0].mxu0
    %v2422 = vadd.f32 0.0, %v2421
    %v2423 = vpop.f32.mrb[0].mxu0
    %2424 = vmatprep.mubr.bf16.mxu0 0
    %2425 = vmatmul.mubr.bf16.gmra.mrb[0].mxu0 %v2262
    %v2426 = vpop.f32.mrb[0].mxu0
    %v2427 = vadd.f32 0.0, %v2426
    %v2428 = vpop.f32.mrb[0].mxu0
    %v2429 = vpop.f32.mrb[0].mxu0
    %v2430 = vadd.f32 0.0, %v2429
    %v2431 = vpop.f32.mrb[0].mxu0
    %2432 = vdwg.mxu0
    %v2433 = vrot.slane %v2215, 4
    %v2434 = vsel %vm312, %v313, %v2433
    %v2435 = vrot.slane %v2216, 4
    %v2436 = vsel %vm312, %v2433, %v2435
    %v2437 = vrot.slane %v2217, 4
    %v2438 = vsel %vm312, %v2435, %v2437
    %v2439 = vrot.slane %v2218, 4
    %v2440 = vsel %vm312, %v2437, %v2439
    %v2441 = vrot.slane %v2219, 4
    %v2442 = vsel %vm312, %v313, %v2441
    %v2443 = vrot.slane %v2220, 4
    %v2444 = vsel %vm312, %v2441, %v2443
    %v2445 = vrot.slane %v2221, 4
    %v2446 = vsel %vm312, %v2443, %v2445
    %v2447 = vrot.slane %v2222, 4
    %v2448 = vsel %vm312, %v2445, %v2447
    %s2457 = scalar_lea.vmem [#allocation7], 128
    %v2458 = vld [vmem:[%s2457] sm:$0xf]
    %v2459 = vld [vmem:[%s2457 + $0x4] sm:$0xf]
    %v2460 = vld [vmem:[%s2457 + $0x8] sm:$0xf]
    %v2461 = vld [vmem:[%s2457 + $0xc] sm:$0xf]
    %v2462 = vld [vmem:[%s2457 + $0x10] sm:$0xf]
    %v2463 = vld [vmem:[%s2457 + $0x14] sm:$0xf]
    %v2464 = vld [vmem:[%s2457 + $0x18] sm:$0xf]
    %v2465 = vld [vmem:[%s2457 + $0x1c] sm:$0xf]
    %v2466 = vld [vmem:[%s2457 + $0x20] sm:$0xf]
    %v2467 = vld [vmem:[%s2457 + $0x24] sm:$0xf]
    %v2468 = vld [vmem:[%s2457 + $0x28] sm:$0xf]
    %v2469 = vld [vmem:[%s2457 + $0x2c] sm:$0xf]
    %v2470 = vld [vmem:[%s2457 + $0x30] sm:$0xf]
    %v2471 = vld [vmem:[%s2457 + $0x34] sm:$0xf]
    %v2472 = vld [vmem:[%s2457 + $0x38] sm:$0xf]
    %v2473 = vld [vmem:[%s2457 + $0x3c] sm:$0xf]
    %v2474 = vrot.slane %v2215, 6
    %v2475 = vsel %vm355, %v356, %v2474
    %v2476 = vrot.slane %v2216, 6
    %v2477 = vsel %vm355, %v2474, %v2476
    %v2478 = vrot.slane %v2217, 6
    %v2479 = vsel %vm355, %v2476, %v2478
    %v2480 = vrot.slane %v2218, 6
    %v2481 = vsel %vm355, %v2478, %v2480
    %v2482 = vrot.slane %v2219, 6
    %v2483 = vsel %vm355, %v356, %v2482
    %v2484 = vrot.slane %v2220, 6
    %v2485 = vsel %vm355, %v2482, %v2484
    %v2486 = vrot.slane %v2221, 6
    %v2487 = vsel %vm355, %v2484, %v2486
    %v2488 = vrot.slane %v2222, 6
    %v2489 = vsel %vm355, %v2486, %v2488
    %s2498 = scalar_lea.vmem [#allocation7], 192
    %v2499 = vld [vmem:[%s2498] sm:$0xf]
    %v2500 = vld [vmem:[%s2498 + $0x4] sm:$0xf]
    %v2501 = vld [vmem:[%s2498 + $0x8] sm:$0xf]
    %v2502 = vld [vmem:[%s2498 + $0xc] sm:$0xf]
    %v2503 = vld [vmem:[%s2498 + $0x10] sm:$0xf]
    %v2504 = vld [vmem:[%s2498 + $0x14] sm:$0xf]
    %v2505 = vld [vmem:[%s2498 + $0x18] sm:$0xf]
    %v2506 = vld [vmem:[%s2498 + $0x1c] sm:$0xf]
    %v2507 = vld [vmem:[%s2498 + $0x20] sm:$0xf]
    %v2508 = vld [vmem:[%s2498 + $0x24] sm:$0xf]
    %v2509 = vld [vmem:[%s2498 + $0x28] sm:$0xf]
    %v2510 = vld [vmem:[%s2498 + $0x2c] sm:$0xf]
    %v2511 = vld [vmem:[%s2498 + $0x30] sm:$0xf]
    %v2512 = vld [vmem:[%s2498 + $0x34] sm:$0xf]
    %v2513 = vld [vmem:[%s2498 + $0x38] sm:$0xf]
    %v2514 = vld [vmem:[%s2498 + $0x3c] sm:$0xf]
    %v2531 = vunpack.c.l.b16 %v2499
    %v2532 = vunpack.c.l.b16 %v2500
    %v2533 = vunpack.c.l.b16 %v2501
    %v2534 = vunpack.c.l.b16 %v2502
    %v2535 = vunpack.c.l.b16 %v2503
    %v2536 = vunpack.c.l.b16 %v2504
    %v2537 = vunpack.c.l.b16 %v2505
    %v2538 = vunpack.c.l.b16 %v2506
    %v2539 = vunpack.c.l.b16 %v2507
    %v2540 = vunpack.c.l.b16 %v2508
    %v2541 = vunpack.c.l.b16 %v2509
    %v2542 = vunpack.c.l.b16 %v2510
    %v2543 = vunpack.c.l.b16 %v2511
    %v2544 = vunpack.c.l.b16 %v2512
    %v2545 = vunpack.c.l.b16 %v2513
    %v2546 = vunpack.c.l.b16 %v2514
    %v2547 = vpack.c.b16 %v2532, %v2531
    %v2548 = vpack.c.b16 %v2534, %v2533
    %v2549 = vpack.c.b16 %v2536, %v2535
    %v2550 = vpack.c.b16 %v2538, %v2537
    %v2551 = vpack.c.b16 %v2540, %v2539
    %v2552 = vpack.c.b16 %v2542, %v2541
    %v2553 = vpack.c.b16 %v2544, %v2543
    %v2554 = vpack.c.b16 %v2546, %v2545
    %2563 = vmatprep.subr.bf16.mxu0 0
    %2564 = vmatpush1.bf16.msra.mxu0 %v2547
    %2565 = vmatprep.subr.bf16.mxu0 0
    %2566 = vmatpush1.bf16.msra.mxu0 %v2548
    %2567 = vmatprep.subr.bf16.mxu0 0
    %2568 = vmatpush1.bf16.msra.mxu0 %v2549
    %2569 = vmatprep.subr.bf16.mxu0 0
    %2570 = vmatpush1.bf16.msra.mxu0 %v2550
    %2571 = vmatprep.subr.bf16.mxu0 0
    %2572 = vmatpush1.bf16.msra.mxu0 %v2551
    %2573 = vmatprep.subr.bf16.mxu0 0
    %2574 = vmatpush1.bf16.msra.mxu0 %v2552
    %2575 = vmatprep.subr.bf16.mxu0 0
    %2576 = vmatpush1.bf16.msra.mxu0 %v2553
    %2577 = vmatprep.subr.bf16.mxu0 0
    %2578 = vmatpush1.bf16.msra.mxu0 %v2554
    %2579 = vmatprep.subr.bf16.mxu0 0
    %2580 = vmatpush1.bf16.msra.mxu0 0
    %2581 = vmatprep.subr.bf16.mxu0 0
    %2582 = vmatpush1.bf16.msra.mxu0 0
    %2583 = vmatprep.subr.bf16.mxu0 0
    %2584 = vmatpush1.bf16.msra.mxu0 0
    %2585 = vmatprep.subr.bf16.mxu0 0
    %2586 = vmatpush1.bf16.msra.mxu0 0
    %2587 = vmatprep.subr.bf16.mxu0 0
    %2588 = vmatpush1.bf16.msra.mxu0 0
    %2589 = vmatprep.subr.bf16.mxu0 0
    %2590 = vmatpush1.bf16.msra.mxu0 0
    %2591 = vmatprep.subr.bf16.mxu0 0
    %2592 = vmatpush1.bf16.msra.mxu0 0
    %2593 = vmatprep.subr.bf16.mxu0 0
    %2594 = vmatpush1.bf16.msra.mxu0 0
    %2595 = vmatprep.mubr.bf16.mxu0 0
    %2596 = vmatmul.mubr.bf16.gmra.mrb[0].mxu0 %v2475
    %v2597 = vpop.f32.mrb[0].mxu0
    %v2598 = vadd.f32 0.0, %v2597
    %v2599 = vpop.f32.mrb[0].mxu0
    %v2600 = vpop.f32.mrb[0].mxu0
    %v2601 = vadd.f32 0.0, %v2600
    %v2602 = vpop.f32.mrb[0].mxu0
    %2603 = vmatprep.mubr.bf16.mxu0 0
    %2604 = vmatmul.mubr.bf16.gmra.mrb[0].mxu0 %v2477
    %v2605 = vpop.f32.mrb[0].mxu0
    %v2606 = vadd.f32 0.0, %v2605
    %v2607 = vpop.f32.mrb[0].mxu0
    %v2608 = vpop.f32.mrb[0].mxu0
    %v2609 = vadd.f32 0.0, %v2608
    %v2610 = vpop.f32.mrb[0].mxu0
    %2611 = vmatprep.mubr.bf16.mxu0 0
    %2612 = vmatmul.mubr.bf16.gmra.mrb[0].mxu0 %v2479
    %v2613 = vpop.f32.mrb[0].mxu0
    %v2614 = vadd.f32 0.0, %v2613
    %v2615 = vpop.f32.mrb[0].mxu0
    %v2616 = vpop.f32.mrb[0].mxu0
    %v2617 = vadd.f32 0.0, %v2616
    %v2618 = vpop.f32.mrb[0].mxu0
    %2619 = vmatprep.mubr.bf16.mxu0 0
    %2620 = vmatmul.mubr.bf16.gmra.mrb[0].mxu0 %v2481
    %v2621 = vpop.f32.mrb[0].mxu0
    %v2622 = vadd.f32 0.0, %v2621
    %v2623 = vpop.f32.mrb[0].mxu0
    %v2624 = vpop.f32.mrb[0].mxu0
    %v2625 = vadd.f32 0.0, %v2624
    %v2626 = vpop.f32.mrb[0].mxu0
    %2627 = vmatprep.mubr.bf16.mxu0 0
    %2628 = vmatmul.mubr.bf16.gmra.mrb[0].mxu0 %v2483
    %v2629 = vpop.f32.mrb[0].mxu0
    %v2630 = vadd.f32 0.0, %v2629
    %v2631 = vpop.f32.mrb[0].mxu0
    %v2632 = vpop.f32.mrb[0].mxu0
    %v2633 = vadd.f32 0.0, %v2632
    %v2634 = vpop.f32.mrb[0].mxu0
    %2635 = vmatprep.mubr.bf16.mxu0 0
    %2636 = vmatmul.mubr.bf16.gmra.mrb[0].mxu0 %v2485
    %v2637 = vpop.f32.mrb[0].mxu0
    %v2638 = vadd.f32 0.0, %v2637
    %v2639 = vpop.f32.mrb[0].mxu0
    %v2640 = vpop.f32.mrb[0].mxu0
    %v2641 = vadd.f32 0.0, %v2640
    %v2642 = vpop.f32.mrb[0].mxu0
    %2643 = vmatprep.mubr.bf16.mxu0 0
    %2644 = vmatmul.mubr.bf16.gmra.mrb[0].mxu0 %v2487
    %v2645 = vpop.f32.mrb[0].mxu0
    %v2646 = vadd.f32 0.0, %v2645
    %v2647 = vpop.f32.mrb[0].mxu0
    %v2648 = vpop.f32.mrb[0].mxu0
    %v2649 = vadd.f32 0.0, %v2648
    %v2650 = vpop.f32.mrb[0].mxu0
    %2651 = vmatprep.mubr.bf16.mxu0 0
    %2652 = vmatmul.mubr.bf16.gmra.mrb[0].mxu0 %v2489
    %v2653 = vpop.f32.mrb[0].mxu0
    %v2654 = vadd.f32 0.0, %v2653
    %v2655 = vpop.f32.mrb[0].mxu0
    %v2656 = vpop.f32.mrb[0].mxu0
    %v2657 = vadd.f32 0.0, %v2656
    %v2658 = vpop.f32.mrb[0].mxu0
    %2659 = vdwg.mxu0
    %s2660 = scalar_lea.vmem [#allocation7], 256
    %v2661 = vld [vmem:[%s2660] sm:$0xf]
    %v2662 = vld [vmem:[%s2660 + $0x4] sm:$0xf]
    %v2663 = vld [vmem:[%s2660 + $0x8] sm:$0xf]
    %v2664 = vld [vmem:[%s2660 + $0xc] sm:$0xf]
    %v2665 = vld [vmem:[%s2660 + $0x10] sm:$0xf]
    %v2666 = vld [vmem:[%s2660 + $0x14] sm:$0xf]
    %v2667 = vld [vmem:[%s2660 + $0x18] sm:$0xf]
    %v2668 = vld [vmem:[%s2660 + $0x1c] sm:$0xf]
    %v2669 = vld [vmem:[%s2660 + $0x20] sm:$0xf]
    %v2670 = vld [vmem:[%s2660 + $0x24] sm:$0xf]
    %v2671 = vld [vmem:[%s2660 + $0x28] sm:$0xf]
    %v2672 = vld [vmem:[%s2660 + $0x2c] sm:$0xf]
    %v2673 = vld [vmem:[%s2660 + $0x30] sm:$0xf]
    %v2674 = vld [vmem:[%s2660 + $0x34] sm:$0xf]
    %v2675 = vld [vmem:[%s2660 + $0x38] sm:$0xf]
    %v2676 = vld [vmem:[%s2660 + $0x3c] sm:$0xf]
    %v2677 = vsel %vm124, %v2253, %v125
    %v2678 = vsel %vm124, %v2261, %v125
    %s2681 = scalar_lea.vmem [#allocation7], 320
    %v2682 = vld [vmem:[%s2681] sm:$0xf]
    %v2683 = vld [vmem:[%s2681 + $0x4] sm:$0xf]
    %v2684 = vld [vmem:[%s2681 + $0x8] sm:$0xf]
    %v2685 = vld [vmem:[%s2681 + $0xc] sm:$0xf]
    %v2686 = vld [vmem:[%s2681 + $0x10] sm:$0xf]
    %v2687 = vld [vmem:[%s2681 + $0x14] sm:$0xf]
    %v2688 = vld [vmem:[%s2681 + $0x18] sm:$0xf]
    %v2689 = vld [vmem:[%s2681 + $0x1c] sm:$0xf]
    %v2690 = vld [vmem:[%s2681 + $0x20] sm:$0xf]
    %v2691 = vld [vmem:[%s2681 + $0x24] sm:$0xf]
    %v2692 = vld [vmem:[%s2681 + $0x28] sm:$0xf]
    %v2693 = vld [vmem:[%s2681 + $0x2c] sm:$0xf]
    %v2694 = vld [vmem:[%s2681 + $0x30] sm:$0xf]
    %v2695 = vld [vmem:[%s2681 + $0x34] sm:$0xf]
    %v2696 = vld [vmem:[%s2681 + $0x38] sm:$0xf]
    %v2697 = vld [vmem:[%s2681 + $0x3c] sm:$0xf]
    %v2714 = vunpack.c.l.b16 %v2682
    %v2715 = vunpack.c.l.b16 %v2683
    %v2716 = vunpack.c.l.b16 %v2684
    %v2717 = vunpack.c.l.b16 %v2685
    %v2718 = vunpack.c.l.b16 %v2686
    %v2719 = vunpack.c.l.b16 %v2687
    %v2720 = vunpack.c.l.b16 %v2688
    %v2721 = vunpack.c.l.b16 %v2689
    %v2722 = vunpack.c.l.b16 %v2690
    %v2723 = vunpack.c.l.b16 %v2691
    %v2724 = vunpack.c.l.b16 %v2692
    %v2725 = vunpack.c.l.b16 %v2693
    %v2726 = vunpack.c.l.b16 %v2694
    %v2727 = vunpack.c.l.b16 %v2695
    %v2728 = vunpack.c.l.b16 %v2696
    %v2729 = vunpack.c.l.b16 %v2697
    %v2730 = vpack.c.b16 %v2715, %v2714
    %v2731 = vpack.c.b16 %v2717, %v2716
    %v2732 = vpack.c.b16 %v2719, %v2718
    %v2733 = vpack.c.b16 %v2721, %v2720
    %v2734 = vpack.c.b16 %v2723, %v2722
    %v2735 = vpack.c.b16 %v2725, %v2724
    %v2736 = vpack.c.b16 %v2727, %v2726
    %v2737 = vpack.c.b16 %v2729, %v2728
    %2746 = vmatprep.subr.bf16.mxu0 0
    %2747 = vmatpush1.bf16.msra.mxu0 %v2730
    %2748 = vmatprep.subr.bf16.mxu0 0
    %2749 = vmatpush1.bf16.msra.mxu0 %v2731
    %2750 = vmatprep.subr.bf16.mxu0 0
    %2751 = vmatpush1.bf16.msra.mxu0 %v2732
    %2752 = vmatprep.subr.bf16.mxu0 0
    %2753 = vmatpush1.bf16.msra.mxu0 %v2733
    %2754 = vmatprep.subr.bf16.mxu0 0
    %2755 = vmatpush1.bf16.msra.mxu0 %v2734
    %2756 = vmatprep.subr.bf16.mxu0 0
    %2757 = vmatpush1.bf16.msra.mxu0 %v2735
    %2758 = vmatprep.subr.bf16.mxu0 0
    %2759 = vmatpush1.bf16.msra.mxu0 %v2736
    %2760 = vmatprep.subr.bf16.mxu0 0
    %2761 = vmatpush1.bf16.msra.mxu0 %v2737
    %2762 = vmatprep.subr.bf16.mxu0 0
    %2763 = vmatpush1.bf16.msra.mxu0 0
    %2764 = vmatprep.subr.bf16.mxu0 0
    %2765 = vmatpush1.bf16.msra.mxu0 0
    %2766 = vmatprep.subr.bf16.mxu0 0
    %2767 = vmatpush1.bf16.msra.mxu0 0
    %2768 = vmatprep.subr.bf16.mxu0 0
    %2769 = vmatpush1.bf16.msra.mxu0 0
    %2770 = vmatprep.subr.bf16.mxu0 0
    %2771 = vmatpush1.bf16.msra.mxu0 0
    %2772 = vmatprep.subr.bf16.mxu0 0
    %2773 = vmatpush1.bf16.msra.mxu0 0
    %2774 = vmatprep.subr.bf16.mxu0 0
    %2775 = vmatpush1.bf16.msra.mxu0 0
    %2776 = vmatprep.subr.bf16.mxu0 0
    %2777 = vmatpush1.bf16.msra.mxu0 0
    %2778 = vmatprep.mubr.bf16.mxu0 0
    %2779 = vmatmul.mubr.bf16.gmra.mrb[0].mxu0 %v2250
    %v2780 = vpop.f32.mrb[0].mxu0
    %v2781 = vadd.f32 0.0, %v2780
    %v2782 = vpop.f32.mrb[0].mxu0
    %v2783 = vpop.f32.mrb[0].mxu0
    %v2784 = vadd.f32 0.0, %v2783
    %v2785 = vpop.f32.mrb[0].mxu0
    %2786 = vmatprep.mubr.bf16.mxu0 0
    %2787 = vmatmul.mubr.bf16.gmra.mrb[0].mxu0 %v2252
    %v2788 = vpop.f32.mrb[0].mxu0
    %v2789 = vadd.f32 0.0, %v2788
    %v2790 = vpop.f32.mrb[0].mxu0
    %v2791 = vpop.f32.mrb[0].mxu0
    %v2792 = vadd.f32 0.0, %v2791
    %v2793 = vpop.f32.mrb[0].mxu0
    %2794 = vmatprep.mubr.bf16.mxu0 0
    %2795 = vmatmul.mubr.bf16.gmra.mrb[0].mxu0 %v2254
    %v2796 = vpop.f32.mrb[0].mxu0
    %v2797 = vadd.f32 0.0, %v2796
    %v2798 = vpop.f32.mrb[0].mxu0
    %v2799 = vpop.f32.mrb[0].mxu0
    %v2800 = vadd.f32 0.0, %v2799
    %v2801 = vpop.f32.mrb[0].mxu0
    %2802 = vmatprep.mubr.bf16.mxu0 0
    %2803 = vmatmul.mubr.bf16.gmra.mrb[0].mxu0 %v2677
    %v2804 = vpop.f32.mrb[0].mxu0
    %v2805 = vadd.f32 0.0, %v2804
    %v2806 = vpop.f32.mrb[0].mxu0
    %v2807 = vpop.f32.mrb[0].mxu0
    %v2808 = vadd.f32 0.0, %v2807
    %v2809 = vpop.f32.mrb[0].mxu0
    %2810 = vmatprep.mubr.bf16.mxu0 0
    %2811 = vmatmul.mubr.bf16.gmra.mrb[0].mxu0 %v2258
    %v2812 = vpop.f32.mrb[0].mxu0
    %v2813 = vadd.f32 0.0, %v2812
    %v2814 = vpop.f32.mrb[0].mxu0
    %v2815 = vpop.f32.mrb[0].mxu0
    %v2816 = vadd.f32 0.0, %v2815
    %v2817 = vpop.f32.mrb[0].mxu0
    %2818 = vmatprep.mubr.bf16.mxu0 0
    %2819 = vmatmul.mubr.bf16.gmra.mrb[0].mxu0 %v2260
    %v2820 = vpop.f32.mrb[0].mxu0
    %v2821 = vadd.f32 0.0, %v2820
    %v2822 = vpop.f32.mrb[0].mxu0
    %v2823 = vpop.f32.mrb[0].mxu0
    %v2824 = vadd.f32 0.0, %v2823
    %v2825 = vpop.f32.mrb[0].mxu0
    %2826 = vmatprep.mubr.bf16.mxu0 0
    %2827 = vmatmul.mubr.bf16.gmra.mrb[0].mxu0 %v2262
    %v2828 = vpop.f32.mrb[0].mxu0
    %v2829 = vadd.f32 0.0, %v2828
    %v2830 = vpop.f32.mrb[0].mxu0
    %v2831 = vpop.f32.mrb[0].mxu0
    %v2832 = vadd.f32 0.0, %v2831
    %v2833 = vpop.f32.mrb[0].mxu0
    %2834 = vmatprep.mubr.bf16.mxu0 0
    %2835 = vmatmul.mubr.bf16.gmra.mrb[0].mxu0 %v2678
    %v2836 = vpop.f32.mrb[0].mxu0
    %v2837 = vadd.f32 0.0, %v2836
    %v2838 = vpop.f32.mrb[0].mxu0
    %v2839 = vpop.f32.mrb[0].mxu0
    %v2840 = vadd.f32 0.0, %v2839
    %v2841 = vpop.f32.mrb[0].mxu0
    %2842 = vdwg.mxu0
    %v2843 = vsel %vm312, %v2439, %v313
    %v2844 = vsel %vm312, %v2447, %v313
    %s2847 = scalar_lea.vmem [#allocation7], 384
    %v2848 = vld [vmem:[%s2847] sm:$0xf]
    %v2849 = vld [vmem:[%s2847 + $0x4] sm:$0xf]
    %v2850 = vld [vmem:[%s2847 + $0x8] sm:$0xf]
    %v2851 = vld [vmem:[%s2847 + $0xc] sm:$0xf]
    %v2852 = vld [vmem:[%s2847 + $0x10] sm:$0xf]
    %v2853 = vld [vmem:[%s2847 + $0x14] sm:$0xf]
    %v2854 = vld [vmem:[%s2847 + $0x18] sm:$0xf]
    %v2855 = vld [vmem:[%s2847 + $0x1c] sm:$0xf]
    %v2856 = vld [vmem:[%s2847 + $0x20] sm:$0xf]
    %v2857 = vld [vmem:[%s2847 + $0x24] sm:$0xf]
    %v2858 = vld [vmem:[%s2847 + $0x28] sm:$0xf]
    %v2859 = vld [vmem:[%s2847 + $0x2c] sm:$0xf]
    %v2860 = vld [vmem:[%s2847 + $0x30] sm:$0xf]
    %v2861 = vld [vmem:[%s2847 + $0x34] sm:$0xf]
    %v2862 = vld [vmem:[%s2847 + $0x38] sm:$0xf]
    %v2863 = vld [vmem:[%s2847 + $0x3c] sm:$0xf]
    %v2864 = vsel %vm355, %v2480, %v356
    %v2865 = vsel %vm355, %v2488, %v356
    %s2868 = scalar_lea.vmem [#allocation7], 448
    %v2869 = vld [vmem:[%s2868] sm:$0xf]
    %v2870 = vld [vmem:[%s2868 + $0x4] sm:$0xf]
    %v2871 = vld [vmem:[%s2868 + $0x8] sm:$0xf]
    %v2872 = vld [vmem:[%s2868 + $0xc] sm:$0xf]
    %v2873 = vld [vmem:[%s2868 + $0x10] sm:$0xf]
    %v2874 = vld [vmem:[%s2868 + $0x14] sm:$0xf]
    %v2875 = vld [vmem:[%s2868 + $0x18] sm:$0xf]
    %v2876 = vld [vmem:[%s2868 + $0x1c] sm:$0xf]
    %v2877 = vld [vmem:[%s2868 + $0x20] sm:$0xf]
    %v2878 = vld [vmem:[%s2868 + $0x24] sm:$0xf]
    %v2879 = vld [vmem:[%s2868 + $0x28] sm:$0xf]
    %v2880 = vld [vmem:[%s2868 + $0x2c] sm:$0xf]
    %v2881 = vld [vmem:[%s2868 + $0x30] sm:$0xf]
    %v2882 = vld [vmem:[%s2868 + $0x34] sm:$0xf]
    %v2883 = vld [vmem:[%s2868 + $0x38] sm:$0xf]
    %v2884 = vld [vmem:[%s2868 + $0x3c] sm:$0xf]
    %v2901 = vunpack.c.l.b16 %v2869
    %v2902 = vunpack.c.l.b16 %v2870
    %v2903 = vunpack.c.l.b16 %v2871
    %v2904 = vunpack.c.l.b16 %v2872
    %v2905 = vunpack.c.l.b16 %v2873
    %v2906 = vunpack.c.l.b16 %v2874
    %v2907 = vunpack.c.l.b16 %v2875
    %v2908 = vunpack.c.l.b16 %v2876
    %v2909 = vunpack.c.l.b16 %v2877
    %v2910 = vunpack.c.l.b16 %v2878
    %v2911 = vunpack.c.l.b16 %v2879
    %v2912 = vunpack.c.l.b16 %v2880
    %v2913 = vunpack.c.l.b16 %v2881
    %v2914 = vunpack.c.l.b16 %v2882
    %v2915 = vunpack.c.l.b16 %v2883
    %v2916 = vunpack.c.l.b16 %v2884
    %v2917 = vpack.c.b16 %v2902, %v2901
    %v2918 = vpack.c.b16 %v2904, %v2903
    %v2919 = vpack.c.b16 %v2906, %v2905
    %v2920 = vpack.c.b16 %v2908, %v2907
    %v2921 = vpack.c.b16 %v2910, %v2909
    %v2922 = vpack.c.b16 %v2912, %v2911
    %v2923 = vpack.c.b16 %v2914, %v2913
    %v2924 = vpack.c.b16 %v2916, %v2915
    %2933 = vmatprep.subr.bf16.mxu0 0
    %2934 = vmatpush1.bf16.msra.mxu0 %v2917
    %2935 = vmatprep.subr.bf16.mxu0 0
    %2936 = vmatpush1.bf16.msra.mxu0 %v2918
    %2937 = vmatprep.subr.bf16.mxu0 0
    %2938 = vmatpush1.bf16.msra.mxu0 %v2919
    %2939 = vmatprep.subr.bf16.mxu0 0
    %2940 = vmatpush1.bf16.msra.mxu0 %v2920
    %2941 = vmatprep.subr.bf16.mxu0 0
    %2942 = vmatpush1.bf16.msra.mxu0 %v2921
    %2943 = vmatprep.subr.bf16.mxu0 0
    %2944 = vmatpush1.bf16.msra.mxu0 %v2922
    %2945 = vmatprep.subr.bf16.mxu0 0
    %2946 = vmatpush1.bf16.msra.mxu0 %v2923
    %2947 = vmatprep.subr.bf16.mxu0 0
    %2948 = vmatpush1.bf16.msra.mxu0 %v2924
    %2949 = vmatprep.subr.bf16.mxu0 0
    %2950 = vmatpush1.bf16.msra.mxu0 0
    %2951 = vmatprep.subr.bf16.mxu0 0
    %2952 = vmatpush1.bf16.msra.mxu0 0
    %2953 = vmatprep.subr.bf16.mxu0 0
    %2954 = vmatpush1.bf16.msra.mxu0 0
    %2955 = vmatprep.subr.bf16.mxu0 0
    %2956 = vmatpush1.bf16.msra.mxu0 0
    %2957 = vmatprep.subr.bf16.mxu0 0
    %2958 = vmatpush1.bf16.msra.mxu0 0
    %2959 = vmatprep.subr.bf16.mxu0 0
    %2960 = vmatpush1.bf16.msra.mxu0 0
    %2961 = vmatprep.subr.bf16.mxu0 0
    %2962 = vmatpush1.bf16.msra.mxu0 0
    %2963 = vmatprep.subr.bf16.mxu0 0
    %2964 = vmatpush1.bf16.msra.mxu0 0
    %2965 = vmatprep.mubr.bf16.mxu0 0
    %2966 = vmatmul.mubr.bf16.gmra.mrb[0].mxu0 %v2477
    %v2967 = vpop.f32.mrb[0].mxu0
    %v2968 = vadd.f32 0.0, %v2967
    %v2969 = vpop.f32.mrb[0].mxu0
    %v2970 = vpop.f32.mrb[0].mxu0
    %v2971 = vadd.f32 0.0, %v2970
    %v2972 = vpop.f32.mrb[0].mxu0
    %2973 = vmatprep.mubr.bf16.mxu0 0
    %2974 = vmatmul.mubr.bf16.gmra.mrb[0].mxu0 %v2479
    %v2975 = vpop.f32.mrb[0].mxu0
    %v2976 = vadd.f32 0.0, %v2975
    %v2977 = vpop.f32.mrb[0].mxu0
    %v2978 = vpop.f32.mrb[0].mxu0
    %v2979 = vadd.f32 0.0, %v2978
    %v2980 = vpop.f32.mrb[0].mxu0
    %2981 = vmatprep.mubr.bf16.mxu0 0
    %2982 = vmatmul.mubr.bf16.gmra.mrb[0].mxu0 %v2481
    %v2983 = vpop.f32.mrb[0].mxu0
    %v2984 = vadd.f32 0.0, %v2983
    %v2985 = vpop.f32.mrb[0].mxu0
    %v2986 = vpop.f32.mrb[0].mxu0
    %v2987 = vadd.f32 0.0, %v2986
    %v2988 = vpop.f32.mrb[0].mxu0
    %2989 = vmatprep.mubr.bf16.mxu0 0
    %2990 = vmatmul.mubr.bf16.gmra.mrb[0].mxu0 %v2864
    %v2991 = vpop.f32.mrb[0].mxu0
    %v2992 = vadd.f32 0.0, %v2991
    %v2993 = vpop.f32.mrb[0].mxu0
    %v2994 = vpop.f32.mrb[0].mxu0
    %v2995 = vadd.f32 0.0, %v2994
    %v2996 = vpop.f32.mrb[0].mxu0
    %2997 = vmatprep.mubr.bf16.mxu0 0
    %2998 = vmatmul.mubr.bf16.gmra.mrb[0].mxu0 %v2485
    %v2999 = vpop.f32.mrb[0].mxu0
    %v3000 = vadd.f32 0.0, %v2999
    %v3001 = vpop.f32.mrb[0].mxu0
    %v3002 = vpop.f32.mrb[0].mxu0
    %v3003 = vadd.f32 0.0, %v3002
    %v3004 = vpop.f32.mrb[0].mxu0
    %3005 = vmatprep.mubr.bf16.mxu0 0
    %3006 = vmatmul.mubr.bf16.gmra.mrb[0].mxu0 %v2487
    %v3007 = vpop.f32.mrb[0].mxu0
    %v3008 = vadd.f32 0.0, %v3007
    %v3009 = vpop.f32.mrb[0].mxu0
    %v3010 = vpop.f32.mrb[0].mxu0
    %v3011 = vadd.f32 0.0, %v3010
    %v3012 = vpop.f32.mrb[0].mxu0
    %3013 = vmatprep.mubr.bf16.mxu0 0
    %3014 = vmatmul.mubr.bf16.gmra.mrb[0].mxu0 %v2489
    %v3015 = vpop.f32.mrb[0].mxu0
    %v3016 = vadd.f32 0.0, %v3015
    %v3017 = vpop.f32.mrb[0].mxu0
    %v3018 = vpop.f32.mrb[0].mxu0
    %v3019 = vadd.f32 0.0, %v3018
    %v3020 = vpop.f32.mrb[0].mxu0
    %3021 = vmatprep.mubr.bf16.mxu0 0
    %3022 = vmatmul.mubr.bf16.gmra.mrb[0].mxu0 %v2865
    %v3023 = vpop.f32.mrb[0].mxu0
    %v3024 = vadd.f32 0.0, %v3023
    %v3025 = vpop.f32.mrb[0].mxu0
    %v3026 = vpop.f32.mrb[0].mxu0
    %v3027 = vadd.f32 0.0, %v3026
    %v3028 = vpop.f32.mrb[0].mxu0
    %3029 = vdwg.mxu0
    %s3030 = scalar_lea.vmem [#allocation7], 512
    %v3031 = vld [vmem:[%s3030] sm:$0xf]
    %v3032 = vld [vmem:[%s3030 + $0x4] sm:$0xf]
    %v3033 = vld [vmem:[%s3030 + $0x8] sm:$0xf]
    %v3034 = vld [vmem:[%s3030 + $0xc] sm:$0xf]
    %v3035 = vld [vmem:[%s3030 + $0x10] sm:$0xf]
    %v3036 = vld [vmem:[%s3030 + $0x14] sm:$0xf]
    %v3037 = vld [vmem:[%s3030 + $0x18] sm:$0xf]
    %v3038 = vld [vmem:[%s3030 + $0x1c] sm:$0xf]
    %v3039 = vld [vmem:[%s3030 + $0x20] sm:$0xf]
    %v3040 = vld [vmem:[%s3030 + $0x24] sm:$0xf]
    %v3041 = vld [vmem:[%s3030 + $0x28] sm:$0xf]
    %v3042 = vld [vmem:[%s3030 + $0x2c] sm:$0xf]
    %v3043 = vld [vmem:[%s3030 + $0x30] sm:$0xf]
    %v3044 = vld [vmem:[%s3030 + $0x34] sm:$0xf]
    %v3045 = vld [vmem:[%s3030 + $0x38] sm:$0xf]
    %v3046 = vld [vmem:[%s3030 + $0x3c] sm:$0xf]
    %v3063 = vunpack.c.l.b16 %v3031
    %v3064 = vunpack.c.l.b16 %v3032
    %v3065 = vunpack.c.l.b16 %v3033
    %v3066 = vunpack.c.l.b16 %v3034
    %v3067 = vunpack.c.l.b16 %v3035
    %v3068 = vunpack.c.l.b16 %v3036
    %v3069 = vunpack.c.l.b16 %v3037
    %v3070 = vunpack.c.l.b16 %v3038
    %v3071 = vunpack.c.l.b16 %v3039
    %v3072 = vunpack.c.l.b16 %v3040
    %v3073 = vunpack.c.l.b16 %v3041
    %v3074 = vunpack.c.l.b16 %v3042
    %v3075 = vunpack.c.l.b16 %v3043
    %v3076 = vunpack.c.l.b16 %v3044
    %v3077 = vunpack.c.l.b16 %v3045
    %v3078 = vunpack.c.l.b16 %v3046
    %v3079 = vpack.c.b16 %v3064, %v3063
    %v3080 = vpack.c.b16 %v3066, %v3065
    %v3081 = vpack.c.b16 %v3068, %v3067
    %v3082 = vpack.c.b16 %v3070, %v3069
    %v3083 = vpack.c.b16 %v3072, %v3071
    %v3084 = vpack.c.b16 %v3074, %v3073
    %v3085 = vpack.c.b16 %v3076, %v3075
    %v3086 = vpack.c.b16 %v3078, %v3077
    %3095 = vmatprep.subr.bf16.mxu0 0
    %3096 = vmatpush1.bf16.msra.mxu0 %v3079
    %3097 = vmatprep.subr.bf16.mxu0 0
    %3098 = vmatpush1.bf16.msra.mxu0 %v3080
    %3099 = vmatprep.subr.bf16.mxu0 0
    %3100 = vmatpush1.bf16.msra.mxu0 %v3081
    %3101 = vmatprep.subr.bf16.mxu0 0
    %3102 = vmatpush1.bf16.msra.mxu0 %v3082
    %3103 = vmatprep.subr.bf16.mxu0 0
    %3104 = vmatpush1.bf16.msra.mxu0 %v3083
    %3105 = vmatprep.subr.bf16.mxu0 0
    %3106 = vmatpush1.bf16.msra.mxu0 %v3084
    %3107 = vmatprep.subr.bf16.mxu0 0
    %3108 = vmatpush1.bf16.msra.mxu0 %v3085
    %3109 = vmatprep.subr.bf16.mxu0 0
    %3110 = vmatpush1.bf16.msra.mxu0 %v3086
    %3111 = vmatprep.subr.bf16.mxu0 0
    %3112 = vmatpush1.bf16.msra.mxu0 0
    %3113 = vmatprep.subr.bf16.mxu0 0
    %3114 = vmatpush1.bf16.msra.mxu0 0
    %3115 = vmatprep.subr.bf16.mxu0 0
    %3116 = vmatpush1.bf16.msra.mxu0 0
    %3117 = vmatprep.subr.bf16.mxu0 0
    %3118 = vmatpush1.bf16.msra.mxu0 0
    %3119 = vmatprep.subr.bf16.mxu0 0
    %3120 = vmatpush1.bf16.msra.mxu0 0
    %3121 = vmatprep.subr.bf16.mxu0 0
    %3122 = vmatpush1.bf16.msra.mxu0 0
    %3123 = vmatprep.subr.bf16.mxu0 0
    %3124 = vmatpush1.bf16.msra.mxu0 0
    %3125 = vmatprep.subr.bf16.mxu0 0
    %3126 = vmatpush1.bf16.msra.mxu0 0
    %3127 = vmatprep.mubr.bf16.mxu0 0
    %3128 = vmatmul.mubr.bf16.gmra.mrb[0].mxu0 %v2216
    %v3129 = vpop.f32.mrb[0].mxu0
    %v3130 = vadd.f32 0.0, %v3129
    %v3131 = vpop.f32.mrb[0].mxu0
    %v3132 = vpop.f32.mrb[0].mxu0
    %v3133 = vadd.f32 0.0, %v3132
    %v3134 = vpop.f32.mrb[0].mxu0
    %3135 = vmatprep.mubr.bf16.mxu0 0
    %3136 = vmatmul.mubr.bf16.gmra.mrb[0].mxu0 %v2217
    %v3137 = vpop.f32.mrb[0].mxu0
    %v3138 = vadd.f32 0.0, %v3137
    %v3139 = vpop.f32.mrb[0].mxu0
    %v3140 = vpop.f32.mrb[0].mxu0
    %v3141 = vadd.f32 0.0, %v3140
    %v3142 = vpop.f32.mrb[0].mxu0
    %3143 = vmatprep.mubr.bf16.mxu0 0
    %3144 = vmatmul.mubr.bf16.gmra.mrb[0].mxu0 %v2218
    %v3145 = vpop.f32.mrb[0].mxu0
    %v3146 = vadd.f32 0.0, %v3145
    %v3147 = vpop.f32.mrb[0].mxu0
    %v3148 = vpop.f32.mrb[0].mxu0
    %v3149 = vadd.f32 0.0, %v3148
    %v3150 = vpop.f32.mrb[0].mxu0
    %3151 = vmatprep.mubr.bf16.mxu0 0
    %3152 = vmatmul.mubr.bf16.gmra.mrb[0].mxu0 0
    %v3153 = vpop.f32.mrb[0].mxu0
    %v3154 = vadd.f32 0.0, %v3153
    %v3155 = vpop.f32.mrb[0].mxu0
    %v3156 = vpop.f32.mrb[0].mxu0
    %v3157 = vadd.f32 0.0, %v3156
    %v3158 = vpop.f32.mrb[0].mxu0
    %3159 = vmatprep.mubr.bf16.mxu0 0
    %3160 = vmatmul.mubr.bf16.gmra.mrb[0].mxu0 %v2220
    %v3161 = vpop.f32.mrb[0].mxu0
    %v3162 = vadd.f32 0.0, %v3161
    %v3163 = vpop.f32.mrb[0].mxu0
    %v3164 = vpop.f32.mrb[0].mxu0
    %v3165 = vadd.f32 0.0, %v3164
    %v3166 = vpop.f32.mrb[0].mxu0
    %3167 = vmatprep.mubr.bf16.mxu0 0
    %3168 = vmatmul.mubr.bf16.gmra.mrb[0].mxu0 %v2221
    %v3169 = vpop.f32.mrb[0].mxu0
    %v3170 = vadd.f32 0.0, %v3169
    %v3171 = vpop.f32.mrb[0].mxu0
    %v3172 = vpop.f32.mrb[0].mxu0
    %v3173 = vadd.f32 0.0, %v3172
    %v3174 = vpop.f32.mrb[0].mxu0
    %3175 = vmatprep.mubr.bf16.mxu0 0
    %3176 = vmatmul.mubr.bf16.gmra.mrb[0].mxu0 %v2222
    %v3177 = vpop.f32.mrb[0].mxu0
    %v3178 = vadd.f32 0.0, %v3177
    %v3179 = vpop.f32.mrb[0].mxu0
    %v3180 = vpop.f32.mrb[0].mxu0
    %v3181 = vadd.f32 0.0, %v3180
    %v3182 = vpop.f32.mrb[0].mxu0
    %3183 = vmatprep.mubr.bf16.mxu0 0
    %3184 = vmatmul.mubr.bf16.gmra.mrb[0].mxu0 0
    %v3185 = vpop.f32.mrb[0].mxu0
    %v3186 = vadd.f32 0.0, %v3185
    %v3187 = vpop.f32.mrb[0].mxu0
    %v3188 = vpop.f32.mrb[0].mxu0
    %v3189 = vadd.f32 0.0, %v3188
    %v3190 = vpop.f32.mrb[0].mxu0
    %3191 = vdwg.mxu0
    %v3208 = vunpack.c.l.b16 %v2223
    %v3209 = vunpack.c.l.b16 %v2224
    %v3210 = vunpack.c.l.b16 %v2225
    %v3211 = vunpack.c.l.b16 %v2226
    %v3212 = vunpack.c.l.b16 %v2227
    %v3213 = vunpack.c.l.b16 %v2228
    %v3214 = vunpack.c.l.b16 %v2229
    %v3215 = vunpack.c.l.b16 %v2230
    %v3216 = vunpack.c.l.b16 %v2231
    %v3217 = vunpack.c.l.b16 %v2232
    %v3218 = vunpack.c.l.b16 %v2233
    %v3219 = vunpack.c.l.b16 %v2234
    %v3220 = vunpack.c.l.b16 %v2235
    %v3221 = vunpack.c.l.b16 %v2236
    %v3222 = vunpack.c.l.b16 %v2237
    %v3223 = vunpack.c.l.b16 %v2238
    %v3224 = vpack.c.b16 %v3209, %v3208
    %v3225 = vpack.c.b16 %v3211, %v3210
    %v3226 = vpack.c.b16 %v3213, %v3212
    %v3227 = vpack.c.b16 %v3215, %v3214
    %v3228 = vpack.c.b16 %v3217, %v3216
    %v3229 = vpack.c.b16 %v3219, %v3218
    %v3230 = vpack.c.b16 %v3221, %v3220
    %v3231 = vpack.c.b16 %v3223, %v3222
    %3240 = vmatprep.subr.bf16.mxu0 0
    %3241 = vmatpush1.bf16.msra.mxu0 %v3224
    %3242 = vmatprep.subr.bf16.mxu0 0
    %3243 = vmatpush1.bf16.msra.mxu0 %v3225
    %3244 = vmatprep.subr.bf16.mxu0 0
    %3245 = vmatpush1.bf16.msra.mxu0 %v3226
    %3246 = vmatprep.subr.bf16.mxu0 0
    %3247 = vmatpush1.bf16.msra.mxu0 %v3227
    %3248 = vmatprep.subr.bf16.mxu0 0
    %3249 = vmatpush1.bf16.msra.mxu0 %v3228
    %3250 = vmatprep.subr.bf16.mxu0 0
    %3251 = vmatpush1.bf16.msra.mxu0 %v3229
    %3252 = vmatprep.subr.bf16.mxu0 0
    %3253 = vmatpush1.bf16.msra.mxu0 %v3230
    %3254 = vmatprep.subr.bf16.mxu0 0
    %3255 = vmatpush1.bf16.msra.mxu0 %v3231
    %3256 = vmatprep.subr.bf16.mxu0 0
    %3257 = vmatpush1.bf16.msra.mxu0 0
    %3258 = vmatprep.subr.bf16.mxu0 0
    %3259 = vmatpush1.bf16.msra.mxu0 0
    %3260 = vmatprep.subr.bf16.mxu0 0
    %3261 = vmatpush1.bf16.msra.mxu0 0
    %3262 = vmatprep.subr.bf16.mxu0 0
    %3263 = vmatpush1.bf16.msra.mxu0 0
    %3264 = vmatprep.subr.bf16.mxu0 0
    %3265 = vmatpush1.bf16.msra.mxu0 0
    %3266 = vmatprep.subr.bf16.mxu0 0
    %3267 = vmatpush1.bf16.msra.mxu0 0
    %3268 = vmatprep.subr.bf16.mxu0 0
    %3269 = vmatpush1.bf16.msra.mxu0 0
    %3270 = vmatprep.subr.bf16.mxu0 0
    %3271 = vmatpush1.bf16.msra.mxu0 0
    %3272 = vmatprep.mubr.bf16.mxu0 0
    %3273 = vmatmul.mubr.bf16.gmra.mrb[0].mxu0 0
    %v3274 = vpop.f32.mrb[0].mxu0
    %v3275 = vadd.f32 %v2371, %v3274
    %v3276 = vpop.f32.mrb[0].mxu0
    %v3277 = vpop.f32.mrb[0].mxu0
    %v3278 = vadd.f32 %v2374, %v3277
    %v3279 = vpop.f32.mrb[0].mxu0
    %3280 = vmatprep.mubr.bf16.mxu0 0
    %3281 = vmatmul.mubr.bf16.gmra.mrb[0].mxu0 %v2215
    %v3282 = vpop.f32.mrb[0].mxu0
    %v3283 = vadd.f32 %v2379, %v3282
    %v3284 = vpop.f32.mrb[0].mxu0
    %v3285 = vpop.f32.mrb[0].mxu0
    %v3286 = vadd.f32 %v2382, %v3285
    %v3287 = vpop.f32.mrb[0].mxu0
    %3288 = vmatprep.mubr.bf16.mxu0 0
    %3289 = vmatmul.mubr.bf16.gmra.mrb[0].mxu0 %v2216
    %v3290 = vpop.f32.mrb[0].mxu0
    %v3291 = vadd.f32 %v2387, %v3290
    %v3292 = vpop.f32.mrb[0].mxu0
    %v3293 = vpop.f32.mrb[0].mxu0
    %v3294 = vadd.f32 %v2390, %v3293
    %v3295 = vpop.f32.mrb[0].mxu0
    %3296 = vmatprep.mubr.bf16.mxu0 0
    %3297 = vmatmul.mubr.bf16.gmra.mrb[0].mxu0 %v2217
    %v3298 = vpop.f32.mrb[0].mxu0
    %v3299 = vadd.f32 %v2395, %v3298
    %v3300 = vpop.f32.mrb[0].mxu0
    %v3301 = vpop.f32.mrb[0].mxu0
    %v3302 = vadd.f32 %v2398, %v3301
    %v3303 = vpop.f32.mrb[0].mxu0
    %3304 = vmatprep.mubr.bf16.mxu0 0
    %3305 = vmatmul.mubr.bf16.gmra.mrb[0].mxu0 0
    %v3306 = vpop.f32.mrb[0].mxu0
    %v3307 = vadd.f32 %v2403, %v3306
    %v3308 = vpop.f32.mrb[0].mxu0
    %v3309 = vpop.f32.mrb[0].mxu0
    %v3310 = vadd.f32 %v2406, %v3309
    %v3311 = vpop.f32.mrb[0].mxu0
    %3312 = vmatprep.mubr.bf16.mxu0 0
    %3313 = vmatmul.mubr.bf16.gmra.mrb[0].mxu0 %v2219
    %v3314 = vpop.f32.mrb[0].mxu0
    %v3315 = vadd.f32 %v2411, %v3314
    %v3316 = vpop.f32.mrb[0].mxu0
    %v3317 = vpop.f32.mrb[0].mxu0
    %v3318 = vadd.f32 %v2414, %v3317
    %v3319 = vpop.f32.mrb[0].mxu0
    %3320 = vmatprep.mubr.bf16.mxu0 0
    %3321 = vmatmul.mubr.bf16.gmra.mrb[0].mxu0 %v2220
    %v3322 = vpop.f32.mrb[0].mxu0
    %v3323 = vadd.f32 %v2419, %v3322
    %v3324 = vpop.f32.mrb[0].mxu0
    %v3325 = vpop.f32.mrb[0].mxu0
    %v3326 = vadd.f32 %v2422, %v3325
    %v3327 = vpop.f32.mrb[0].mxu0
    %3328 = vmatprep.mubr.bf16.mxu0 0
    %3329 = vmatmul.mubr.bf16.gmra.mrb[0].mxu0 %v2221
    %v3330 = vpop.f32.mrb[0].mxu0
    %v3331 = vadd.f32 %v2427, %v3330
    %v3332 = vpop.f32.mrb[0].mxu0
    %v3333 = vpop.f32.mrb[0].mxu0
    %v3334 = vadd.f32 %v2430, %v3333
    %v3335 = vpop.f32.mrb[0].mxu0
    %3336 = vdwg.mxu0
    %v3353 = vunpack.c.l.b16 %v2458
    %v3354 = vunpack.c.l.b16 %v2459
    %v3355 = vunpack.c.l.b16 %v2460
    %v3356 = vunpack.c.l.b16 %v2461
    %v3357 = vunpack.c.l.b16 %v2462
    %v3358 = vunpack.c.l.b16 %v2463
    %v3359 = vunpack.c.l.b16 %v2464
    %v3360 = vunpack.c.l.b16 %v2465
    %v3361 = vunpack.c.l.b16 %v2466
    %v3362 = vunpack.c.l.b16 %v2467
    %v3363 = vunpack.c.l.b16 %v2468
    %v3364 = vunpack.c.l.b16 %v2469
    %v3365 = vunpack.c.l.b16 %v2470
    %v3366 = vunpack.c.l.b16 %v2471
    %v3367 = vunpack.c.l.b16 %v2472
    %v3368 = vunpack.c.l.b16 %v2473
    %v3369 = vpack.c.b16 %v3354, %v3353
    %v3370 = vpack.c.b16 %v3356, %v3355
    %v3371 = vpack.c.b16 %v3358, %v3357
    %v3372 = vpack.c.b16 %v3360, %v3359
    %v3373 = vpack.c.b16 %v3362, %v3361
    %v3374 = vpack.c.b16 %v3364, %v3363
    %v3375 = vpack.c.b16 %v3366, %v3365
    %v3376 = vpack.c.b16 %v3368, %v3367
    %3385 = vmatprep.subr.bf16.mxu0 0
    %3386 = vmatpush1.bf16.msra.mxu0 %v3369
    %3387 = vmatprep.subr.bf16.mxu0 0
    %3388 = vmatpush1.bf16.msra.mxu0 %v3370
    %3389 = vmatprep.subr.bf16.mxu0 0
    %3390 = vmatpush1.bf16.msra.mxu0 %v3371
    %3391 = vmatprep.subr.bf16.mxu0 0
    %3392 = vmatpush1.bf16.msra.mxu0 %v3372
    %3393 = vmatprep.subr.bf16.mxu0 0
    %3394 = vmatpush1.bf16.msra.mxu0 %v3373
    %3395 = vmatprep.subr.bf16.mxu0 0
    %3396 = vmatpush1.bf16.msra.mxu0 %v3374
    %3397 = vmatprep.subr.bf16.mxu0 0
    %3398 = vmatpush1.bf16.msra.mxu0 %v3375
    %3399 = vmatprep.subr.bf16.mxu0 0
    %3400 = vmatpush1.bf16.msra.mxu0 %v3376
    %3401 = vmatprep.subr.bf16.mxu0 0
    %3402 = vmatpush1.bf16.msra.mxu0 0
    %3403 = vmatprep.subr.bf16.mxu0 0
    %3404 = vmatpush1.bf16.msra.mxu0 0
    %3405 = vmatprep.subr.bf16.mxu0 0
    %3406 = vmatpush1.bf16.msra.mxu0 0
    %3407 = vmatprep.subr.bf16.mxu0 0
    %3408 = vmatpush1.bf16.msra.mxu0 0
    %3409 = vmatprep.subr.bf16.mxu0 0
    %3410 = vmatpush1.bf16.msra.mxu0 0
    %3411 = vmatprep.subr.bf16.mxu0 0
    %3412 = vmatpush1.bf16.msra.mxu0 0
    %3413 = vmatprep.subr.bf16.mxu0 0
    %3414 = vmatpush1.bf16.msra.mxu0 0
    %3415 = vmatprep.subr.bf16.mxu0 0
    %3416 = vmatpush1.bf16.msra.mxu0 0
    %3417 = vmatprep.mubr.bf16.mxu0 0
    %3418 = vmatmul.mubr.bf16.gmra.mrb[0].mxu0 %v2434
    %v3419 = vpop.f32.mrb[0].mxu0
    %v3420 = vadd.f32 %v2598, %v3419
    %v3421 = vpop.f32.mrb[0].mxu0
    %v3422 = vpop.f32.mrb[0].mxu0
    %v3423 = vadd.f32 %v2601, %v3422
    %v3424 = vpop.f32.mrb[0].mxu0
    %3425 = vmatprep.mubr.bf16.mxu0 0
    %3426 = vmatmul.mubr.bf16.gmra.mrb[0].mxu0 %v2436
    %v3427 = vpop.f32.mrb[0].mxu0
    %v3428 = vadd.f32 %v2606, %v3427
    %v3429 = vpop.f32.mrb[0].mxu0
    %v3430 = vpop.f32.mrb[0].mxu0
    %v3431 = vadd.f32 %v2609, %v3430
    %v3432 = vpop.f32.mrb[0].mxu0
    %3433 = vmatprep.mubr.bf16.mxu0 0
    %3434 = vmatmul.mubr.bf16.gmra.mrb[0].mxu0 %v2438
    %v3435 = vpop.f32.mrb[0].mxu0
    %v3436 = vadd.f32 %v2614, %v3435
    %v3437 = vpop.f32.mrb[0].mxu0
    %v3438 = vpop.f32.mrb[0].mxu0
    %v3439 = vadd.f32 %v2617, %v3438
    %v3440 = vpop.f32.mrb[0].mxu0
    %3441 = vmatprep.mubr.bf16.mxu0 0
    %3442 = vmatmul.mubr.bf16.gmra.mrb[0].mxu0 %v2440
    %v3443 = vpop.f32.mrb[0].mxu0
    %v3444 = vadd.f32 %v2622, %v3443
    %v3445 = vpop.f32.mrb[0].mxu0
    %v3446 = vpop.f32.mrb[0].mxu0
    %v3447 = vadd.f32 %v2625, %v3446
    %v3448 = vpop.f32.mrb[0].mxu0
    %3449 = vmatprep.mubr.bf16.mxu0 0
    %3450 = vmatmul.mubr.bf16.gmra.mrb[0].mxu0 %v2442
    %v3451 = vpop.f32.mrb[0].mxu0
    %v3452 = vadd.f32 %v2630, %v3451
    %v3453 = vpop.f32.mrb[0].mxu0
    %v3454 = vpop.f32.mrb[0].mxu0
    %v3455 = vadd.f32 %v2633, %v3454
    %v3456 = vpop.f32.mrb[0].mxu0
    %3457 = vmatprep.mubr.bf16.mxu0 0
    %3458 = vmatmul.mubr.bf16.gmra.mrb[0].mxu0 %v2444
    %v3459 = vpop.f32.mrb[0].mxu0
    %v3460 = vadd.f32 %v2638, %v3459
    %v3461 = vpop.f32.mrb[0].mxu0
    %v3462 = vpop.f32.mrb[0].mxu0
    %v3463 = vadd.f32 %v2641, %v3462
    %v3464 = vpop.f32.mrb[0].mxu0
    %3465 = vmatprep.mubr.bf16.mxu0 0
    %3466 = vmatmul.mubr.bf16.gmra.mrb[0].mxu0 %v2446
    %v3467 = vpop.f32.mrb[0].mxu0
    %v3468 = vadd.f32 %v2646, %v3467
    %v3469 = vpop.f32.mrb[0].mxu0
    %v3470 = vpop.f32.mrb[0].mxu0
    %v3471 = vadd.f32 %v2649, %v3470
    %v3472 = vpop.f32.mrb[0].mxu0
    %3473 = vmatprep.mubr.bf16.mxu0 0
    %3474 = vmatmul.mubr.bf16.gmra.mrb[0].mxu0 %v2448
    %v3475 = vpop.f32.mrb[0].mxu0
    %v3476 = vadd.f32 %v2654, %v3475
    %v3477 = vpop.f32.mrb[0].mxu0
    %v3478 = vpop.f32.mrb[0].mxu0
    %v3479 = vadd.f32 %v2657, %v3478
    %v3480 = vpop.f32.mrb[0].mxu0
    %3481 = vdwg.mxu0
    %v3498 = vunpack.c.l.b16 %v2661
    %v3499 = vunpack.c.l.b16 %v2662
    %v3500 = vunpack.c.l.b16 %v2663
    %v3501 = vunpack.c.l.b16 %v2664
    %v3502 = vunpack.c.l.b16 %v2665
    %v3503 = vunpack.c.l.b16 %v2666
    %v3504 = vunpack.c.l.b16 %v2667
    %v3505 = vunpack.c.l.b16 %v2668
    %v3506 = vunpack.c.l.b16 %v2669
    %v3507 = vunpack.c.l.b16 %v2670
    %v3508 = vunpack.c.l.b16 %v2671
    %v3509 = vunpack.c.l.b16 %v2672
    %v3510 = vunpack.c.l.b16 %v2673
    %v3511 = vunpack.c.l.b16 %v2674
    %v3512 = vunpack.c.l.b16 %v2675
    %v3513 = vunpack.c.l.b16 %v2676
    %v3514 = vpack.c.b16 %v3499, %v3498
    %v3515 = vpack.c.b16 %v3501, %v3500
    %v3516 = vpack.c.b16 %v3503, %v3502
    %v3517 = vpack.c.b16 %v3505, %v3504
    %v3518 = vpack.c.b16 %v3507, %v3506
    %v3519 = vpack.c.b16 %v3509, %v3508
    %v3520 = vpack.c.b16 %v3511, %v3510
    %v3521 = vpack.c.b16 %v3513, %v3512
    %3530 = vmatprep.subr.bf16.mxu0 0
    %3531 = vmatpush1.bf16.msra.mxu0 %v3514
    %3532 = vmatprep.subr.bf16.mxu0 0
    %3533 = vmatpush1.bf16.msra.mxu0 %v3515
    %3534 = vmatprep.subr.bf16.mxu0 0
    %3535 = vmatpush1.bf16.msra.mxu0 %v3516
    %3536 = vmatprep.subr.bf16.mxu0 0
    %3537 = vmatpush1.bf16.msra.mxu0 %v3517
    %3538 = vmatprep.subr.bf16.mxu0 0
    %3539 = vmatpush1.bf16.msra.mxu0 %v3518
    %3540 = vmatprep.subr.bf16.mxu0 0
    %3541 = vmatpush1.bf16.msra.mxu0 %v3519
    %3542 = vmatprep.subr.bf16.mxu0 0
    %3543 = vmatpush1.bf16.msra.mxu0 %v3520
    %3544 = vmatprep.subr.bf16.mxu0 0
    %3545 = vmatpush1.bf16.msra.mxu0 %v3521
    %3546 = vmatprep.subr.bf16.mxu0 0
    %3547 = vmatpush1.bf16.msra.mxu0 0
    %3548 = vmatprep.subr.bf16.mxu0 0
    %3549 = vmatpush1.bf16.msra.mxu0 0
    %3550 = vmatprep.subr.bf16.mxu0 0
    %3551 = vmatpush1.bf16.msra.mxu0 0
    %3552 = vmatprep.subr.bf16.mxu0 0
    %3553 = vmatpush1.bf16.msra.mxu0 0
    %3554 = vmatprep.subr.bf16.mxu0 0
    %3555 = vmatpush1.bf16.msra.mxu0 0
    %3556 = vmatprep.subr.bf16.mxu0 0
    %3557 = vmatpush1.bf16.msra.mxu0 0
    %3558 = vmatprep.subr.bf16.mxu0 0
    %3559 = vmatpush1.bf16.msra.mxu0 0
    %3560 = vmatprep.subr.bf16.mxu0 0
    %3561 = vmatpush1.bf16.msra.mxu0 0
    %3562 = vmatprep.mubr.bf16.mxu0 0
    %3563 = vmatmul.mubr.bf16.gmra.mrb[0].mxu0 %v2215
    %v3564 = vpop.f32.mrb[0].mxu0
    %v3565 = vadd.f32 %v2781, %v3564
    %v3566 = vpop.f32.mrb[0].mxu0
    %v3567 = vpop.f32.mrb[0].mxu0
    %v3568 = vadd.f32 %v2784, %v3567
    %v3569 = vpop.f32.mrb[0].mxu0
    %3570 = vmatprep.mubr.bf16.mxu0 0
    %3571 = vmatmul.mubr.bf16.gmra.mrb[0].mxu0 %v2216
    %v3572 = vpop.f32.mrb[0].mxu0
    %v3573 = vadd.f32 %v2789, %v3572
    %v3574 = vpop.f32.mrb[0].mxu0
    %v3575 = vpop.f32.mrb[0].mxu0
    %v3576 = vadd.f32 %v2792, %v3575
    %v3577 = vpop.f32.mrb[0].mxu0
    %3578 = vmatprep.mubr.bf16.mxu0 0
    %3579 = vmatmul.mubr.bf16.gmra.mrb[0].mxu0 %v2217
    %v3580 = vpop.f32.mrb[0].mxu0
    %v3581 = vadd.f32 %v2797, %v3580
    %v3582 = vpop.f32.mrb[0].mxu0
    %v3583 = vpop.f32.mrb[0].mxu0
    %v3584 = vadd.f32 %v2800, %v3583
    %v3585 = vpop.f32.mrb[0].mxu0
    %3586 = vmatprep.mubr.bf16.mxu0 0
    %3587 = vmatmul.mubr.bf16.gmra.mrb[0].mxu0 %v2218
    %v3588 = vpop.f32.mrb[0].mxu0
    %v3589 = vadd.f32 %v2805, %v3588
    %v3590 = vpop.f32.mrb[0].mxu0
    %v3591 = vpop.f32.mrb[0].mxu0
    %v3592 = vadd.f32 %v2808, %v3591
    %v3593 = vpop.f32.mrb[0].mxu0
    %3594 = vmatprep.mubr.bf16.mxu0 0
    %3595 = vmatmul.mubr.bf16.gmra.mrb[0].mxu0 %v2219
    %v3596 = vpop.f32.mrb[0].mxu0
    %v3597 = vadd.f32 %v2813, %v3596
    %v3598 = vpop.f32.mrb[0].mxu0
    %v3599 = vpop.f32.mrb[0].mxu0
    %v3600 = vadd.f32 %v2816, %v3599
    %v3601 = vpop.f32.mrb[0].mxu0
    %3602 = vmatprep.mubr.bf16.mxu0 0
    %3603 = vmatmul.mubr.bf16.gmra.mrb[0].mxu0 %v2220
    %v3604 = vpop.f32.mrb[0].mxu0
    %v3605 = vadd.f32 %v2821, %v3604
    %v3606 = vpop.f32.mrb[0].mxu0
    %v3607 = vpop.f32.mrb[0].mxu0
    %v3608 = vadd.f32 %v2824, %v3607
    %v3609 = vpop.f32.mrb[0].mxu0
    %3610 = vmatprep.mubr.bf16.mxu0 0
    %3611 = vmatmul.mubr.bf16.gmra.mrb[0].mxu0 %v2221
    %v3612 = vpop.f32.mrb[0].mxu0
    %v3613 = vadd.f32 %v2829, %v3612
    %v3614 = vpop.f32.mrb[0].mxu0
    %v3615 = vpop.f32.mrb[0].mxu0
    %v3616 = vadd.f32 %v2832, %v3615
    %v3617 = vpop.f32.mrb[0].mxu0
    %3618 = vmatprep.mubr.bf16.mxu0 0
    %3619 = vmatmul.mubr.bf16.gmra.mrb[0].mxu0 %v2222
    %v3620 = vpop.f32.mrb[0].mxu0
    %v3621 = vadd.f32 %v2837, %v3620
    %v3622 = vpop.f32.mrb[0].mxu0
    %v3623 = vpop.f32.mrb[0].mxu0
    %v3624 = vadd.f32 %v2840, %v3623
    %v3625 = vpop.f32.mrb[0].mxu0
    %3626 = vdwg.mxu0
    %v3643 = vunpack.c.l.b16 %v2848
    %v3644 = vunpack.c.l.b16 %v2849
    %v3645 = vunpack.c.l.b16 %v2850
    %v3646 = vunpack.c.l.b16 %v2851
    %v3647 = vunpack.c.l.b16 %v2852
    %v3648 = vunpack.c.l.b16 %v2853
    %v3649 = vunpack.c.l.b16 %v2854
    %v3650 = vunpack.c.l.b16 %v2855
    %v3651 = vunpack.c.l.b16 %v2856
    %v3652 = vunpack.c.l.b16 %v2857
    %v3653 = vunpack.c.l.b16 %v2858
    %v3654 = vunpack.c.l.b16 %v2859
    %v3655 = vunpack.c.l.b16 %v2860
    %v3656 = vunpack.c.l.b16 %v2861
    %v3657 = vunpack.c.l.b16 %v2862
    %v3658 = vunpack.c.l.b16 %v2863
    %v3659 = vpack.c.b16 %v3644, %v3643
    %v3660 = vpack.c.b16 %v3646, %v3645
    %v3661 = vpack.c.b16 %v3648, %v3647
    %v3662 = vpack.c.b16 %v3650, %v3649
    %v3663 = vpack.c.b16 %v3652, %v3651
    %v3664 = vpack.c.b16 %v3654, %v3653
    %v3665 = vpack.c.b16 %v3656, %v3655
    %v3666 = vpack.c.b16 %v3658, %v3657
    %3675 = vmatprep.subr.bf16.mxu0 0
    %3676 = vmatpush1.bf16.msra.mxu0 %v3659
    %3677 = vmatprep.subr.bf16.mxu0 0
    %3678 = vmatpush1.bf16.msra.mxu0 %v3660
    %3679 = vmatprep.subr.bf16.mxu0 0
    %3680 = vmatpush1.bf16.msra.mxu0 %v3661
    %3681 = vmatprep.subr.bf16.mxu0 0
    %3682 = vmatpush1.bf16.msra.mxu0 %v3662
    %3683 = vmatprep.subr.bf16.mxu0 0
    %3684 = vmatpush1.bf16.msra.mxu0 %v3663
    %3685 = vmatprep.subr.bf16.mxu0 0
    %3686 = vmatpush1.bf16.msra.mxu0 %v3664
    %3687 = vmatprep.subr.bf16.mxu0 0
    %3688 = vmatpush1.bf16.msra.mxu0 %v3665
    %3689 = vmatprep.subr.bf16.mxu0 0
    %3690 = vmatpush1.bf16.msra.mxu0 %v3666
    %3691 = vmatprep.subr.bf16.mxu0 0
    %3692 = vmatpush1.bf16.msra.mxu0 0
    %3693 = vmatprep.subr.bf16.mxu0 0
    %3694 = vmatpush1.bf16.msra.mxu0 0
    %3695 = vmatprep.subr.bf16.mxu0 0
    %3696 = vmatpush1.bf16.msra.mxu0 0
    %3697 = vmatprep.subr.bf16.mxu0 0
    %3698 = vmatpush1.bf16.msra.mxu0 0
    %3699 = vmatprep.subr.bf16.mxu0 0
    %3700 = vmatpush1.bf16.msra.mxu0 0
    %3701 = vmatprep.subr.bf16.mxu0 0
    %3702 = vmatpush1.bf16.msra.mxu0 0
    %3703 = vmatprep.subr.bf16.mxu0 0
    %3704 = vmatpush1.bf16.msra.mxu0 0
    %3705 = vmatprep.subr.bf16.mxu0 0
    %3706 = vmatpush1.bf16.msra.mxu0 0
    %3707 = vmatprep.mubr.bf16.mxu0 0
    %3708 = vmatmul.mubr.bf16.gmra.mrb[0].mxu0 %v2436
    %v3709 = vpop.f32.mrb[0].mxu0
    %v3710 = vadd.f32 %v2968, %v3709
    %v3711 = vpop.f32.mrb[0].mxu0
    %v3712 = vpop.f32.mrb[0].mxu0
    %v3713 = vadd.f32 %v2971, %v3712
    %v3714 = vpop.f32.mrb[0].mxu0
    %3715 = vmatprep.mubr.bf16.mxu0 0
    %3716 = vmatmul.mubr.bf16.gmra.mrb[0].mxu0 %v2438
    %v3717 = vpop.f32.mrb[0].mxu0
    %v3718 = vadd.f32 %v2976, %v3717
    %v3719 = vpop.f32.mrb[0].mxu0
    %v3720 = vpop.f32.mrb[0].mxu0
    %v3721 = vadd.f32 %v2979, %v3720
    %v3722 = vpop.f32.mrb[0].mxu0
    %3723 = vmatprep.mubr.bf16.mxu0 0
    %3724 = vmatmul.mubr.bf16.gmra.mrb[0].mxu0 %v2440
    %v3725 = vpop.f32.mrb[0].mxu0
    %v3726 = vadd.f32 %v2984, %v3725
    %v3727 = vpop.f32.mrb[0].mxu0
    %v3728 = vpop.f32.mrb[0].mxu0
    %v3729 = vadd.f32 %v2987, %v3728
    %v3730 = vpop.f32.mrb[0].mxu0
    %3731 = vmatprep.mubr.bf16.mxu0 0
    %3732 = vmatmul.mubr.bf16.gmra.mrb[0].mxu0 %v2843
    %v3733 = vpop.f32.mrb[0].mxu0
    %v3734 = vadd.f32 %v2992, %v3733
    %v3735 = vpop.f32.mrb[0].mxu0
    %v3736 = vpop.f32.mrb[0].mxu0
    %v3737 = vadd.f32 %v2995, %v3736
    %v3738 = vpop.f32.mrb[0].mxu0
    %3739 = vmatprep.mubr.bf16.mxu0 0
    %3740 = vmatmul.mubr.bf16.gmra.mrb[0].mxu0 %v2444
    %v3741 = vpop.f32.mrb[0].mxu0
    %v3742 = vadd.f32 %v3000, %v3741
    %v3743 = vpop.f32.mrb[0].mxu0
    %v3744 = vpop.f32.mrb[0].mxu0
    %v3745 = vadd.f32 %v3003, %v3744
    %v3746 = vpop.f32.mrb[0].mxu0
    %3747 = vmatprep.mubr.bf16.mxu0 0
    %3748 = vmatmul.mubr.bf16.gmra.mrb[0].mxu0 %v2446
    %v3749 = vpop.f32.mrb[0].mxu0
    %v3750 = vadd.f32 %v3008, %v3749
    %v3751 = vpop.f32.mrb[0].mxu0
    %v3752 = vpop.f32.mrb[0].mxu0
    %v3753 = vadd.f32 %v3011, %v3752
    %v3754 = vpop.f32.mrb[0].mxu0
    %3755 = vmatprep.mubr.bf16.mxu0 0
    %3756 = vmatmul.mubr.bf16.gmra.mrb[0].mxu0 %v2448
    %v3757 = vpop.f32.mrb[0].mxu0
    %v3758 = vadd.f32 %v3016, %v3757
    %v3759 = vpop.f32.mrb[0].mxu0
    %v3760 = vpop.f32.mrb[0].mxu0
    %v3761 = vadd.f32 %v3019, %v3760
    %v3762 = vpop.f32.mrb[0].mxu0
    %3763 = vmatprep.mubr.bf16.mxu0 0
    %3764 = vmatmul.mubr.bf16.gmra.mrb[0].mxu0 %v2844
    %v3765 = vpop.f32.mrb[0].mxu0
    %v3766 = vadd.f32 %v3024, %v3765
    %v3767 = vpop.f32.mrb[0].mxu0
    %v3768 = vpop.f32.mrb[0].mxu0
    %v3769 = vadd.f32 %v3027, %v3768
    %v3770 = vpop.f32.mrb[0].mxu0
    %3771 = vdwg.mxu0
    %v3772 = vadd.f32 %v3275, %v3420
    %v3773 = vadd.f32 %v3278, %v3423
    %v3774 = vadd.f32 %v3283, %v3428
    %v3775 = vadd.f32 %v3286, %v3431
    %v3776 = vadd.f32 %v3291, %v3436
    %v3777 = vadd.f32 %v3294, %v3439
    %v3778 = vadd.f32 %v3299, %v3444
    %v3779 = vadd.f32 %v3302, %v3447
    %v3780 = vadd.f32 %v3307, %v3452
    %v3781 = vadd.f32 %v3310, %v3455
    %v3782 = vadd.f32 %v3315, %v3460
    %v3783 = vadd.f32 %v3318, %v3463
    %v3784 = vadd.f32 %v3323, %v3468
    %v3785 = vadd.f32 %v3326, %v3471
    %v3786 = vadd.f32 %v3331, %v3476
    %v3787 = vadd.f32 %v3334, %v3479
    %v3788 = vadd.f32 %v3565, %v3710
    %v3789 = vadd.f32 %v3568, %v3713
    %v3790 = vadd.f32 %v3573, %v3718
    %v3791 = vadd.f32 %v3576, %v3721
    %v3792 = vadd.f32 %v3581, %v3726
    %v3793 = vadd.f32 %v3584, %v3729
    %v3794 = vadd.f32 %v3589, %v3734
    %v3795 = vadd.f32 %v3592, %v3737
    %v3796 = vadd.f32 %v3597, %v3742
    %v3797 = vadd.f32 %v3600, %v3745
    %v3798 = vadd.f32 %v3605, %v3750
    %v3799 = vadd.f32 %v3608, %v3753
    %v3800 = vadd.f32 %v3613, %v3758
    %v3801 = vadd.f32 %v3616, %v3761
    %v3802 = vadd.f32 %v3621, %v3766
    %v3803 = vadd.f32 %v3624, %v3769
    %v3804 = vadd.f32 %v3772, %v3788
    %v3805 = vadd.f32 %v3773, %v3789
    %v3806 = vadd.f32 %v3774, %v3790
    %v3807 = vadd.f32 %v3775, %v3791
    %v3808 = vadd.f32 %v3776, %v3792
    %v3809 = vadd.f32 %v3777, %v3793
    %v3810 = vadd.f32 %v3778, %v3794
    %v3811 = vadd.f32 %v3779, %v3795
    %v3812 = vadd.f32 %v3780, %v3796
    %v3813 = vadd.f32 %v3781, %v3797
    %v3814 = vadd.f32 %v3782, %v3798
    %v3815 = vadd.f32 %v3783, %v3799
    %v3816 = vadd.f32 %v3784, %v3800
    %v3817 = vadd.f32 %v3785, %v3801
    %v3818 = vadd.f32 %v3786, %v3802
    %v3819 = vadd.f32 %v3787, %v3803
    %v3820 = vadd.f32 %v3804, %v3130
    %v3821 = vadd.f32 %v3805, %v3133
    %v3822 = vadd.f32 %v3806, %v3138
    %v3823 = vadd.f32 %v3807, %v3141
    %v3824 = vadd.f32 %v3808, %v3146
    %v3825 = vadd.f32 %v3809, %v3149
    %v3826 = vadd.f32 %v3810, %v3154
    %v3827 = vadd.f32 %v3811, %v3157
    %v3828 = vadd.f32 %v3812, %v3162
    %v3829 = vadd.f32 %v3813, %v3165
    %v3830 = vadd.f32 %v3814, %v3170
    %v3831 = vadd.f32 %v3815, %v3173
    %v3832 = vadd.f32 %v3816, %v3178
    %v3833 = vadd.f32 %v3817, %v3181
    %v3834 = vadd.f32 %v3818, %v3186
    %v3835 = vadd.f32 %v3819, %v3189
    %v3836 = vld [vmem:[%s8] sm:$0x1]
    %v3838 = vlaneseq
    %v3839 = vshrl.u32 %v3838, 7
    %v3840 = vsub.s32 0, %v3839
    %v3841 = vrot.slane %v3836, %v3840
    %v3843 = vadd.f32 %v3820, %v3841
    %v3844 = vadd.f32 %v3821, %v3841
    %v3845 = vadd.f32 %v3822, %v3841
    %v3846 = vadd.f32 %v3823, %v3841
    %v3847 = vadd.f32 %v3824, %v3841
    %v3848 = vadd.f32 %v3825, %v3841
    %v3849 = vadd.f32 %v3826, %v3841
    %v3850 = vadd.f32 %v3827, %v3841
    %v3851 = vadd.f32 %v3828, %v3841
    %v3852 = vadd.f32 %v3829, %v3841
    %v3853 = vadd.f32 %v3830, %v3841
    %v3854 = vadd.f32 %v3831, %v3841
    %v3855 = vadd.f32 %v3832, %v3841
    %v3856 = vadd.f32 %v3833, %v3841
    %v3857 = vadd.f32 %v3834, %v3841
    %v3858 = vadd.f32 %v3835, %v3841
    %v3859 = vadd.f32 %v3843, %v75
    %v3860 = vadd.f32 %v3844, %v76
    %v3861 = vadd.f32 %v3845, %v77
    %v3862 = vadd.f32 %v3846, %v78
    %v3863 = vadd.f32 %v3847, %v79
    %v3864 = vadd.f32 %v3848, %v80
    %v3865 = vadd.f32 %v3849, %v81
    %v3866 = vadd.f32 %v3850, %v82
    %v3867 = vadd.f32 %v3851, %v83
    %v3868 = vadd.f32 %v3852, %v84
    %v3869 = vadd.f32 %v3853, %v85
    %v3870 = vadd.f32 %v3854, %v86
    %v3871 = vadd.f32 %v3855, %v87
    %v3872 = vadd.f32 %v3856, %v88
    %v3873 = vadd.f32 %v3857, %v89
    %v3874 = vadd.f32 %v3858, %v90
    %3875 = vst [vmem:[#allocation8] sm:$0xff] %v3859
    %3876 = vst [vmem:[#allocation8 + $0x8] sm:$0xff] %v3860
    %3877 = vst [vmem:[#allocation8 + $0x10] sm:$0xff] %v3861
    %3878 = vst [vmem:[#allocation8 + $0x18] sm:$0xff] %v3862
    %3879 = vst [vmem:[#allocation8 + $0x20] sm:$0xff] %v3863
    %3880 = vst [vmem:[#allocation8 + $0x28] sm:$0xff] %v3864
    %3881 = vst [vmem:[#allocation8 + $0x30] sm:$0xff] %v3865
    %3882 = vst [vmem:[#allocation8 + $0x38] sm:$0xff] %v3866
    %3883 = vst [vmem:[#allocation8 + $0x40] sm:$0xff] %v3867
    %3884 = vst [vmem:[#allocation8 + $0x48] sm:$0xff] %v3868
    %3885 = vst [vmem:[#allocation8 + $0x50] sm:$0xff] %v3869
    %3886 = vst [vmem:[#allocation8 + $0x58] sm:$0xff] %v3870
    %3887 = vst [vmem:[#allocation8 + $0x60] sm:$0xff] %v3871
    %3888 = vst [vmem:[#allocation8 + $0x68] sm:$0xff] %v3872
    %3889 = vst [vmem:[#allocation8 + $0x70] sm:$0xff] %v3873
    %3890 = vst [vmem:[#allocation8 + $0x78] sm:$0xff] %v3874
    // Predicated region
    $region50: #{tpu_custom_call.1} parent=1 // pred_check
      _
    $region51: #{tpu_custom_call.1} parent=1 // pred_check_branch
      %3892 = sbr.rel (0) target = $region53
    $region52: #{tpu_custom_call.1} parent=1 // pred_region
      %s3894 = ssub.s32 2048, 2048
      %3895 = vsyncadd [#allocation4], %s3894
      %s3896 = sshll.u32 [#allocation8], 4
      %s3897 = int_to_ptr.vmem [resolvable:$true] %s3896
      %3902 = dma.vmem_to_hbm [thread:$0]  %s3897, 2048, %s9, [#allocation4], 128, 128, 8
    $region53: #{tpu_custom_call.1} parent=1 // pred_fallthru
      _
    // Predicated region
    $region54: #{tpu_custom_call.1} parent=1 // pred_check
      _
    $region55: #{tpu_custom_call.1} parent=1 // pred_check_branch
      %3904 = sbr.rel (0) target = $region57
    $region56: #{tpu_custom_call.1} parent=1 // pred_region
      %3905 = dma.done [#allocation4], 2048
    $region57: #{tpu_custom_call.1} parent=1 // pred_fallthru
      _
    %3906 = vsyncpa [#allocation3], 1
    %3907 = vsyncpa [#allocation6], 1
    %3908 = vsyncpa [#allocation4], 1

</llo_original>
